<compile_context>
chip_gen: v6e
topology: v6e:2x2x1
jax: 0.10.0
libtpu: 0.0.40
codegen_flags: <defaults>
</compile_context>

<pallas_src>
import functools

import jax
import jax.numpy as jnp
import numpy as np
from jax.experimental import pallas as pl
from jax.experimental.pallas import tpu as pltpu

EPS = 1e-5
LANE = 128
SUBL = 8          # fp32 sublane tile; rows per per-group Welford accumulator


# ------------------------------ small helpers ------------------------------ #
def _round_up(x, m):
    return (x + m - 1) // m * m


def _cdiv(a, b):
    return -(-a // b)


def _pad2(a, rows, cols):
    r, c = a.shape
    if r == rows and c == cols:
        return a
    return jnp.pad(a, ((0, rows - r), (0, cols - c)))


def _pad_rows(a, rows):
    if a.shape[0] == rows:
        return a
    return jnp.pad(a, ((0, rows - a.shape[0]), (0, 0)))


def _pad_vec(v, n):
    return jnp.pad(v.astype(jnp.float32), (0, n - v.shape[0]))


@functools.lru_cache(maxsize=None)
def _vmem_limit_bytes():
    """~75% of this generation's VMEM (≈48 MiB on v7x, ≈96 MiB on v5e/v6e)."""
    try:
        cap = getattr(pltpu.get_tpu_info(), "vmem_capacity_bytes", None)
    except Exception:
        cap = None
    if not cap:
        cap = 64 * 1024 * 1024          # conservative default (v7x-sized VMEM)
    return int(min(max(cap * 3 // 4, 32 * 1024 * 1024), 100 * 1024 * 1024))


def _pick_tile(m, stream_row_bytes, fixed_bytes, budget):
    """Largest M tile whose double-buffered streams + weights fit the budget.

    Multiples of 256 are preferred (v6e/v7x MXU is 2x256x256); the tile is
    always a multiple of 16 (bf16 sublane pack).  The stats grid is (2, inner),
    so the tile never needs to exceed ceil(m/2)."""
    cap_rows = max(16, _round_up(_cdiv(m, 2), 16))
    tm = 16
    for cand in (1024, 768, 512, 384, 256, 128, 64, 32, 16):
        if cand > cap_rows:
            continue
        if fixed_bytes + 2 * cand * stream_row_bytes <= budget:
            tm = cand
            break
    inner = _cdiv(m, 2 * tm)
    return tm, inner, 2 * inner * tm


# ------------------------- in-kernel Welford helpers ------------------------ #
def _row_mask(tm, inner, m_true):
    row0 = (pl.program_id(0) * inner + pl.program_id(1)) * tm
    rid = jax.lax.broadcasted_iota(jnp.int32, (tm, 1), 0) + row0
    return rid < m_true


def _welford_prologue(cnt_ref, tm, inner, m_true, masked):
    if masked:
        valid = _row_mask(tm, inner, m_true)
        nb = jnp.sum(valid.astype(jnp.float32), axis=0, keepdims=True)   # (1,1)
        nb_safe = jnp.maximum(nb, 1.0)
    else:
        valid = None
        nb = float(tm)
        nb_safe = float(tm)
    na = cnt_ref[...]
    inv_n = 1.0 / jnp.maximum(na + nb, 1.0)
    return valid, nb, nb_safe, na, inv_n


def _tile_moments(y, valid, nb_safe):
    """Per-channel (mean, M2) of this tile's valid rows (fp32)."""
    yv = y if valid is None else jnp.where(valid, y, 0.0)
    bmean = jnp.sum(yv, axis=0, keepdims=True) / nb_safe
    cen = y - bmean
    if valid is not None:
        cen = jnp.where(valid, cen, 0.0)
    bm2 = jnp.sum(cen * cen, axis=0, keepdims=True)
    return bmean, bm2


def _chan_merge(mean_ref, m2_ref, na, nb, inv_n, bmean, bm2):
    """Chan's parallel-variance merge of a tile's (mean, M2) into running refs."""
    delta = bmean - mean_ref[...]
    mean_ref[...] = mean_ref[...] + delta * (nb * inv_n)
    m2_ref[...] = m2_ref[...] + bm2 + (delta * delta) * (na * nb * inv_n)


# ------------------------------ Pallas kernels ------------------------------ #
def _conv_stats_kernel(p_ref, w_ref, y_ref, cnt_ref, mean_ref, m2_ref,
                       *, m_true, tm, inner, masked):
    """y = patches @ W (single MXU pass), stream y (bf16), accumulate BN Welford."""
    @pl.when(pl.program_id(1) == 0)
    def _init():
        cnt_ref[...] = jnp.zeros_like(cnt_ref)
        mean_ref[...] = jnp.zeros_like(mean_ref)
        m2_ref[...] = jnp.zeros_like(m2_ref)

    y = jnp.dot(p_ref[...], w_ref[...], preferred_element_type=jnp.float32)
    y_ref[...] = y.astype(y_ref.dtype)

    valid, nb, nb_safe, na, inv_n = _welford_prologue(cnt_ref, tm, inner,
                                                      m_true, masked)
    bmean, bm2 = _tile_moments(y, valid, nb_safe)
    _chan_merge(mean_ref, m2_ref, na, nb, inv_n, bmean, bm2)
    cnt_ref[...] = na + nb


def _conv_stats_down_kernel(p_ref, w_ref, xs_ref, wd_ref,
                            y_ref, r_ref, cnt_ref, mean_ref, m2_ref,
                            dmean_ref, dm2_ref, *, m_true, tm, inner, masked):
    """conv2 3x3 matmul + fused downsample 1x1 matmul; Welford partials for both."""
    @pl.when(pl.program_id(1) == 0)
    def _init():
        for ref in (cnt_ref, mean_ref, m2_ref, dmean_ref, dm2_ref):
            ref[...] = jnp.zeros_like(ref)

    y = jnp.dot(p_ref[...], w_ref[...], preferred_element_type=jnp.float32)
    r = jnp.dot(xs_ref[...], wd_ref[...], preferred_element_type=jnp.float32)
    y_ref[...] = y.astype(y_ref.dtype)
    r_ref[...] = r.astype(r_ref.dtype)

    valid, nb, nb_safe, na, inv_n = _welford_prologue(cnt_ref, tm, inner,
                                                      m_true, masked)
    bmean, bm2 = _tile_moments(y, valid, nb_safe)
    _chan_merge(mean_ref, m2_ref, na, nb, inv_n, bmean, bm2)
    dbmean, dbm2 = _tile_moments(r, valid, nb_safe)
    _chan_merge(dmean_ref, dm2_ref, na, nb, inv_n, dbmean, dbm2)
    cnt_ref[...] = na + nb


def _apply_kernel(y_ref, scale_ref, shift_ref, o_ref, *, relu):
    y = y_ref[...].astype(jnp.float32) * scale_ref[...] + shift_ref[...]
    if relu:
        y = jnp.maximum(y, 0.0)
    o_ref[...] = y.astype(o_ref.dtype)


def _apply_res_kernel(y_ref, scale_ref, shift_ref, res_ref, o_ref, *, relu):
    y = y_ref[...].astype(jnp.float32) * scale_ref[...] + shift_ref[...]
    y = y + res_ref[...].astype(jnp.float32)
    if relu:
        y = jnp.maximum(y, 0.0)
    o_ref[...] = y.astype(o_ref.dtype)


def _apply_down_kernel(y_ref, scale_ref, shift_ref, r_ref, dscale_ref,
                       dshift_ref, o_ref, *, relu):
    y = y_ref[...].astype(jnp.float32) * scale_ref[...] + shift_ref[...]
    y = y + (r_ref[...].astype(jnp.float32) * dscale_ref[...] + dshift_ref[...])
    if relu:
        y = jnp.maximum(y, 0.0)
    o_ref[...] = y.astype(o_ref.dtype)


# ------------------------------ pallas wrappers ----------------------------- #
def _conv_stats_call(patches_p, w_p, tm, inner, m_true, *, down=None):
    mp, kp = patches_p.shape
    cp = w_p.shape[1]
    masked = (mp != m_true)

    def row_spec(cols):
        return pl.BlockSpec((tm, cols), lambda g, i: (g * inner + i, 0))

    def const_spec(rows):
        # Grid-invariant weight block: constant index map -> fetched once.
        return pl.BlockSpec((rows, cp), lambda g, i: (0, 0))

    acc_spec = pl.BlockSpec((SUBL, cp), lambda g, i: (g, 0))
    acc_shape = jax.ShapeDtypeStruct((2 * SUBL, cp), jnp.float32)
    y_shape = jax.ShapeDtypeStruct((mp, cp), jnp.bfloat16)
    cparams = pltpu.CompilerParams(
        dimension_semantics=("parallel", "arbitrary"),
        vmem_limit_bytes=_vmem_limit_bytes())

    if down is None:
        kernel = functools.partial(_conv_stats_kernel, m_true=m_true, tm=tm,
                                   inner=inner, masked=masked)
        return pl.pallas_call(
            kernel,
            out_shape=(y_shape, acc_shape, acc_shape, acc_shape),
            grid=(2, inner),
            in_specs=[row_spec(kp), const_spec(kp)],
            out_specs=(row_spec(cp), acc_spec, acc_spec, acc_spec),
            compiler_params=cparams,
        )(patches_p, w_p)

    xs_p, wd_p = down
    kd = xs_p.shape[1]
    kernel = functools.partial(_conv_stats_down_kernel, m_true=m_true, tm=tm,
                               inner=inner, masked=masked)
    return pl.pallas_call(
        kernel,
        out_shape=(y_shape, y_shape, acc_shape, acc_shape, acc_shape,
                   acc_shape, acc_shape),
        grid=(2, inner),
        in_specs=[row_spec(kp), const_spec(kp), row_spec(kd), const_spec(kd)],
        out_specs=(row_spec(cp), row_spec(cp), acc_spec, acc_spec, acc_spec,
                   acc_spec, acc_spec),
        compiler_params=cparams,
    )(patches_p, w_p, xs_p, wd_p)


def _apply_call(y_p, scale, shift, tm, *, relu, out_dtype,
                residual=None, down=None):
    mp, cp = y_p.shape
    mspec = pl.BlockSpec((tm, cp), lambda i: (i, 0))
    vspec = pl.BlockSpec((1, cp), lambda i: (0, 0))
    if down is not None:
        r_p, dscale, dshift = down
        kernel = functools.partial(_apply_down_kernel, relu=relu)
        in_specs = [mspec, vspec, vspec, mspec, vspec, vspec]
        args = (y_p, scale, shift, r_p, dscale, dshift)
    elif residual is not None:
        kernel = functools.partial(_apply_res_kernel, relu=relu)
        in_specs = [mspec, vspec, vspec, mspec]
        args = (y_p, scale, shift, residual)
    else:
        kernel = functools.partial(_apply_kernel, relu=relu)
        in_specs = [mspec, vspec, vspec]
        args = (y_p, scale, shift)
    return pl.pallas_call(
        kernel,
        out_shape=jax.ShapeDtypeStruct((mp, cp), out_dtype),
        grid=(mp // tm,),
        in_specs=in_specs,
        out_specs=mspec,
        compiler_params=pltpu.CompilerParams(
            dimension_semantics=("parallel",),
            vmem_limit_bytes=_vmem_limit_bytes()),
    )(*args)


def _finalize_bn(cnt, mean, m2, gamma_p, beta_p):
    """Combine the two per-group Welford partials and build the BN affine (fp32)."""
    n0, n1 = cnt[0:1], cnt[SUBL:SUBL + 1]
    mu0, mu1 = mean[0:1], mean[SUBL:SUBL + 1]
    a0, a1 = m2[0:1], m2[SUBL:SUBL + 1]
    n = jnp.maximum(n0 + n1, 1.0)
    delta = mu1 - mu0
    mu = mu0 + delta * (n1 / n)
    m2t = a0 + a1 + delta * delta * (n0 * n1 / n)
    var = jnp.maximum(m2t / n, 0.0)
    scale = gamma_p.reshape(1, -1) * jax.lax.rsqrt(var + EPS)
    shift = beta_p.reshape(1, -1) - mu * scale
    return scale, shift


# --------------------------------- JAX glue --------------------------------- #
def _im2col_3x3(x_nhwc, stride, k_pad):
    """pad=1, 3x3.  Returns (N*Ho*Wo, k_pad) patches; lane padding folded into
    the concatenate (no separate full-tensor jnp.pad of the patch matrix)."""
    # TODO(synk): replace with an in-kernel halo'd NHWC conv to keep the patch
    # stream out of HBM entirely.
    n, h, w, c = x_nhwc.shape
    ho = (h - 1) // stride + 1
    wo = (w - 1) // stride + 1
    xp = jnp.pad(x_nhwc, ((0, 0), (1, 1), (1, 1), (0, 0)))
    cols = []
    for kh in range(3):
        for kw in range(3):
            cols.append(xp[:, kh:kh + stride * (ho - 1) + 1:stride,
                            kw:kw + stride * (wo - 1) + 1:stride, :])
    if k_pad > 9 * c:
        cols.append(jnp.zeros((n, ho, wo, k_pad - 9 * c), x_nhwc.dtype))
    patches = jnp.concatenate(cols, axis=-1)
    return patches.reshape(n * ho * wo, k_pad), (n, ho, wo)


def basic_block_forward(x_nchw, params, stride):
    """Pallas BasicBlock.forward (PyTorch NCHW fp32 in/out, training-mode BN)."""
    x = jnp.transpose(x_nchw, (0, 2, 3, 1)).astype(jnp.bfloat16)   # NHWC bf16
    n, h, w, cin = x.shape
    planes = params["conv1_w"].shape[0]
    has_down = params.get("down_w") is not None
    if not has_down:
        assert stride == 1 and cin == planes, (
            "identity residual requires stride==1 and inplanes==planes")

    cp = _round_up(planes, LANE)
    k1p = _round_up(9 * cin, LANE)
    k2p = _round_up(9 * planes, LANE)
    kdp = _round_up(cin, LANE) if has_down else 0

    ho = (h - 1) // stride + 1
    wo = (w - 1) // stride + 1
    m = n * ho * wo

    # ---- tile selection: full working-set model vs the per-generation budget
    stream = 2 * (max(k1p, k2p) + cp)                   # patches + y, bf16
    if has_down:
        stream = max(stream, 2 * (k2p + cp + kdp + cp))
    stream = max(stream, 8 * cp)                        # final apply: y+res+f32 out
    fixed = 4 * max(k1p, k2p) * cp + (4 * kdp * cp if has_down else 0)
    tm, inner, mp = _pick_tile(m, stream, fixed, int(_vmem_limit_bytes() * 0.8))

    # ---- conv1 (3x3, stride): matmul + BN stats, then affine + relu
    p1, _ = _im2col_3x3(x, stride, k1p)
    p1 = _pad_rows(p1, mp)
    w1 = jnp.transpose(params["conv1_w"], (2, 3, 1, 0)).reshape(9 * cin, planes)
    w1p = _pad2(w1.astype(jnp.bfloat16), k1p, cp)
    y1, cnt1, mu1, m21 = _conv_stats_call(p1, w1p, tm, inner, m)
    scale1, shift1 = _finalize_bn(cnt1, mu1, m21,
                                  _pad_vec(params["bn1_g"], cp),
                                  _pad_vec(params["bn1_b"], cp))
    out1p = _apply_call(y1, scale1, shift1, tm, relu=True, out_dtype=jnp.bfloat16)
    out1 = out1p[:m, :planes].reshape(n, ho, wo, planes)            # bf16 NHWC

    # ---- conv2 (3x3, stride 1) [+ fused downsample 1x1]: matmul + BN stats
    p2, _ = _im2col_3x3(out1, 1, k2p)
    p2 = _pad_rows(p2, mp)
    w2 = jnp.transpose(params["conv2_w"], (2, 3, 1, 0)).reshape(9 * planes, planes)
    w2p = _pad2(w2.astype(jnp.bfloat16), k2p, cp)
    g2 = _pad_vec(params["bn2_g"], cp)
    b2 = _pad_vec(params["bn2_b"], cp)

    if has_down:
        xs = x[:, ::stride, ::stride, :].reshape(m, cin)
        xsp = _pad2(xs, mp, kdp)
        wd = params["down_w"].reshape(planes, cin).T
        wdp = _pad2(wd.astype(jnp.bfloat16), kdp, cp)
        y2, r, cnt2, mu2, m22, dmu, dm2 = _conv_stats_call(
            p2, w2p, tm, inner, m, down=(xsp, wdp))
        scale2, shift2 = _finalize_bn(cnt2, mu2, m22, g2, b2)
        dscale, dshift = _finalize_bn(cnt2, dmu, dm2,
                                      _pad_vec(params["down_bn_g"], cp),
                                      _pad_vec(params["down_bn_b"], cp))
        outp = _apply_call(y2, scale2, shift2, tm, relu=True,
                           out_dtype=jnp.float32, down=(r, dscale, dshift))
    else:
        y2, cnt2, mu2, m22 = _conv_stats_call(p2, w2p, tm, inner, m)
        scale2, shift2 = _finalize_bn(cnt2, mu2, m22, g2, b2)
        resp = _pad2(x.reshape(m, cin), mp, cp)
        outp = _apply_call(y2, scale2, shift2, tm, relu=True,
                           out_dtype=jnp.float32, residual=resp)

    out = outp[:m, :planes].reshape(n, ho, wo, planes)
    return jnp.transpose(out, (0, 3, 1, 2))                          # -> NCHW fp32


# ----------------------------- pure-JAX reference ---------------------------- #
def _ref_conv(x, w, stride, pad):
    return jax.lax.conv_general_dilated(
        x, w, (stride, stride), [(pad, pad), (pad, pad)],
        dimension_numbers=("NCHW", "OIHW", "NCHW"))


def _ref_bn(y, g, b):
    mu = jnp.mean(y, axis=(0, 2, 3), keepdims=True)
    var = jnp.mean(jnp.square(y - mu), axis=(0, 2, 3), keepdims=True)
    return ((y - mu) * jax.lax.rsqrt(var + EPS) * g.reshape(1, -1, 1, 1)
            + b.reshape(1, -1, 1, 1))


def _bf16(t):
    return t.astype(jnp.bfloat16).astype(jnp.float32)


def _ref_block(x, params, stride):
    xq = _bf16(x)   # emulate the intentional bf16 cast of activations/weights
    out = jnp.maximum(_ref_bn(_ref_conv(xq, _bf16(params["conv1_w"]), stride, 1),
                              params["bn1_g"], params["bn1_b"]), 0.0)
    out = _ref_bn(_ref_conv(out, _bf16(params["conv2_w"]), 1, 1),
                  params["bn2_g"], params["bn2_b"])
    if params.get("down_w") is not None:
        residual = _ref_bn(_ref_conv(xq, _bf16(params["down_w"]), stride, 0),
                           params["down_bn_g"], params["down_bn_b"])
    else:
        residual = xq
    return jnp.maximum(out + residual, 0.0)


def _make_params(key, cin, planes, with_down):
    ks = jax.random.split(key, 9)
    p = {
        "conv1_w": 0.2 * jax.random.normal(ks[0], (planes, cin, 3, 3), jnp.float32),
        "bn1_g":   1.0 + 0.1 * jax.random.normal(ks[1], (planes,), jnp.float32),
        "bn1_b":   0.1 * jax.random.normal(ks[2], (planes,), jnp.float32),
        "conv2_w": 0.2 * jax.random.normal(ks[3], (planes, planes, 3, 3), jnp.float32),
        "bn2_g":   1.0 + 0.1 * jax.random.normal(ks[4], (planes,), jnp.float32),
        "bn2_b":   0.1 * jax.random.normal(ks[5], (planes,), jnp.float32),
    }
    if with_down:
        p["down_w"] = 0.2 * jax.random.normal(ks[6], (planes, cin, 1, 1), jnp.float32)
        p["down_bn_g"] = 1.0 + 0.1 * jax.random.normal(ks[7], (planes,), jnp.float32)
        p["down_bn_b"] = 0.1 * jax.random.normal(ks[8], (planes,), jnp.float32)
    return p


# ----------------------------------- main ------------------------------------ #
if __name__ == "__main__":
    fwd = jax.jit(basic_block_forward, static_argnums=(2,))
    root = jax.random.PRNGKey(0)
    TOL = dict(atol=3e-2, rtol=3e-2)   # covers the bf16 activation streams

    # Case 1: stride-2 block with downsample (1x1 conv + BN) residual branch.
    kx, kp = jax.random.split(jax.random.fold_in(root, 1))
    x1 = jax.random.normal(kx, (2, 4, 16, 16), jnp.float32)
    p1 = _make_params(kp, 4, 8, with_down=True)
    o1 = jax.block_until_ready(fwd(x1, p1, 2))
    assert o1.shape == (2, 8, 8, 8)
    np.testing.assert_allclose(np.asarray(o1), np.asarray(_ref_block(x1, p1, 2)), **TOL)

    # Case 2: stride-1 identity-residual block (no downsample).
    kx, kp = jax.random.split(jax.random.fold_in(root, 2))
    x2 = jax.random.normal(kx, (2, 8, 16, 16), jnp.float32)
    p2 = _make_params(kp, 8, 8, with_down=False)
    o2 = jax.block_until_ready(fwd(x2, p2, 1))
    assert o2.shape == (2, 8, 16, 16)
    np.testing.assert_allclose(np.asarray(o2), np.asarray(_ref_block(x2, p2, 1)), **TOL)

    # Case 3: ragged row count (M=100 not a tile multiple) exercises the masked
    # Welford statistics path.
    kx, kp = jax.random.split(jax.random.fold_in(root, 3))
    x3 = jax.random.normal(kx, (1, 8, 10, 10), jnp.float32)
    p3 = _make_params(kp, 8, 8, with_down=False)
    o3 = jax.block_until_ready(fwd(x3, p3, 1))
    assert o3.shape == (1, 8, 10, 10)
    np.testing.assert_allclose(np.asarray(o3), np.asarray(_ref_block(x3, p3, 1)), **TOL)

    print("KERNEL_OK")
</pallas_src>

<mosaic_0001>
module attributes {stable_mosaic.version = 11 : i64} {
  func.func @_apply_kernel(%arg0: i32, %arg1: memref<64x128xbf16, #tpu.memory_space<vmem>>, %arg2: memref<1x128xf32, #tpu.memory_space<vmem>>, %arg3: memref<1x128xf32, #tpu.memory_space<vmem>>, %arg4: memref<64x128xbf16, #tpu.memory_space<vmem>>) attributes {dimension_semantics = [#tpu.dimension_semantics<parallel>], iteration_bounds = array<i64: 2>, scalar_prefetch = 0 : i64, scratch_operands = 0 : i64, tpu.core_type = #tpu.core_type<tc>, window_params = [{transform_indices = @transform_0, window_bounds = array<i64: 64, 128>}, {pipeline_mode = #tpu.pipeline_mode<synchronous>, transform_indices = @transform_1, window_bounds = array<i64: 1, 128>}, {pipeline_mode = #tpu.pipeline_mode<synchronous>, transform_indices = @transform_2, window_bounds = array<i64: 1, 128>}, {transform_indices = @transform_3, window_bounds = array<i64: 64, 128>}]} {
    %c0 = arith.constant 0 : index
    %c0_0 = arith.constant 0 : index
    %0 = vector.load %arg1[%c0, %c0_0] : memref<64x128xbf16, #tpu.memory_space<vmem>>, vector<64x128xbf16>
    %1 = arith.extf %0 : vector<64x128xbf16> to vector<64x128xf32>
    %c0_1 = arith.constant 0 : index
    %c0_2 = arith.constant 0 : index
    %2 = vector.load %arg2[%c0_1, %c0_2] : memref<1x128xf32, #tpu.memory_space<vmem>>, vector<1x128xf32>
    %3 = vector.broadcast %2 : vector<1x128xf32> to vector<64x128xf32>
    %4 = arith.mulf %1, %3 : vector<64x128xf32>
    %c0_3 = arith.constant 0 : index
    %c0_4 = arith.constant 0 : index
    %5 = vector.load %arg3[%c0_3, %c0_4] : memref<1x128xf32, #tpu.memory_space<vmem>>, vector<1x128xf32>
    %6 = vector.broadcast %5 : vector<1x128xf32> to vector<64x128xf32>
    %7 = arith.addf %4, %6 : vector<64x128xf32>
    %cst = arith.constant 0.000000e+00 : f32
    %8 = vector.broadcast %cst : f32 to vector<64x128xf32>
    %9 = arith.maximumf %7, %8 : vector<64x128xf32>
    %10 = arith.truncf %9 : vector<64x128xf32> to vector<64x128xbf16>
    %c0_5 = arith.constant 0 : index
    %c0_6 = arith.constant 0 : index
    %11 = vector.load %arg4[%c0_5, %c0_6] : memref<64x128xbf16, #tpu.memory_space<vmem>>, vector<64x128xbf16>
    tpu.vector_store %arg4[%c0_5, %c0_6], %10 {strides = array<i32>} : memref<64x128xbf16, #tpu.memory_space<vmem>>, vector<64x128xbf16>,
    return
  }
  func.func @transform_0(%arg0: i32) -> (i32, i32) {
    %c0_i32 = arith.constant 0 : i32
    %c0_i32_0 = arith.constant 0 : i32
    return %arg0, %c0_i32 : i32, i32
  }
  func.func @transform_1(%arg0: i32) -> (i32, i32) {
    %c0_i32 = arith.constant 0 : i32
    %c0_i32_0 = arith.constant 0 : i32
    %c0_i32_1 = arith.constant 0 : i32
    return %c0_i32, %c0_i32_0 : i32, i32
  }
  func.func @transform_2(%arg0: i32) -> (i32, i32) {
    %c0_i32 = arith.constant 0 : i32
    %c0_i32_0 = arith.constant 0 : i32
    %c0_i32_1 = arith.constant 0 : i32
    return %c0_i32, %c0_i32_0 : i32, i32
  }
  func.func @transform_3(%arg0: i32) -> (i32, i32) {
    %c0_i32 = arith.constant 0 : i32
    %c0_i32_0 = arith.constant 0 : i32
    return %arg0, %c0_i32 : i32, i32
  }
}

module attributes {stable_mosaic.version = 11 : i64} {
  func.func @_conv_stats_kernel(%arg0: i32, %arg1: i32, %arg2: memref<64x128xbf16, #tpu.memory_space<vmem>>, %arg3: memref<128x128xbf16, #tpu.memory_space<vmem>>, %arg4: memref<64x128xbf16, #tpu.memory_space<vmem>>, %arg5: memref<8x128xf32, #tpu.memory_space<vmem>>, %arg6: memref<8x128xf32, #tpu.memory_space<vmem>>, %arg7: memref<8x128xf32, #tpu.memory_space<vmem>>) attributes {dimension_semantics = [#tpu.dimension_semantics<parallel>, #tpu.dimension_semantics<arbitrary>], iteration_bounds = array<i64: 2, 1>, scalar_prefetch = 0 : i64, scratch_operands = 0 : i64, tpu.core_type = #tpu.core_type<tc>, window_params = [{transform_indices = @transform_0, window_bounds = array<i64: 64, 128>}, {pipeline_mode = #tpu.pipeline_mode<synchronous>, transform_indices = @transform_1, window_bounds = array<i64: 128, 128>}, {transform_indices = @transform_2, window_bounds = array<i64: 64, 128>}, {transform_indices = @transform_3, window_bounds = array<i64: 8, 128>}, {transform_indices = @transform_4, window_bounds = array<i64: 8, 128>}, {transform_indices = @transform_5, window_bounds = array<i64: 8, 128>}]} {
    %c0_i32 = arith.constant 0 : i32
    %0 = arith.cmpi eq, %arg1, %c0_i32 : i32
    %1 = arith.extui %0 : i1 to i32
    %c0_i32_0 = arith.constant 0 : i32
    %2 = arith.cmpi ne, %1, %c0_i32_0 : i32
    scf.if %2 {
      %cst_29 = arith.constant 0.000000e+00 : f32
      %46 = vector.broadcast %cst_29 : f32 to vector<8x128xf32>
      %c0_30 = arith.constant 0 : index
      %c0_31 = arith.constant 0 : index
      %47 = vector.load %arg5[%c0_30, %c0_31] : memref<8x128xf32, #tpu.memory_space<vmem>>, vector<8x128xf32>
      tpu.vector_store %arg5[%c0_30, %c0_31], %46 {strides = array<i32>} : memref<8x128xf32, #tpu.memory_space<vmem>>, vector<8x128xf32>,
      %cst_32 = arith.constant 0.000000e+00 : f32
      %48 = vector.broadcast %cst_32 : f32 to vector<8x128xf32>
      %c0_33 = arith.constant 0 : index
      %c0_34 = arith.constant 0 : index
      %49 = vector.load %arg6[%c0_33, %c0_34] : memref<8x128xf32, #tpu.memory_space<vmem>>, vector<8x128xf32>
      tpu.vector_store %arg6[%c0_33, %c0_34], %48 {strides = array<i32>} : memref<8x128xf32, #tpu.memory_space<vmem>>, vector<8x128xf32>,
      %cst_35 = arith.constant 0.000000e+00 : f32
      %50 = vector.broadcast %cst_35 : f32 to vector<8x128xf32>
      %c0_36 = arith.constant 0 : index
      %c0_37 = arith.constant 0 : index
      %51 = vector.load %arg7[%c0_36, %c0_37] : memref<8x128xf32, #tpu.memory_space<vmem>>, vector<8x128xf32>
      tpu.vector_store %arg7[%c0_36, %c0_37], %50 {strides = array<i32>} : memref<8x128xf32, #tpu.memory_space<vmem>>, vector<8x128xf32>,
    } else {
    }
    %c0 = arith.constant 0 : index
    %c0_1 = arith.constant 0 : index
    %3 = vector.load %arg2[%c0, %c0_1] : memref<64x128xbf16, #tpu.memory_space<vmem>>, vector<64x128xbf16>
    %c0_2 = arith.constant 0 : index
    %c0_3 = arith.constant 0 : index
    %4 = vector.load %arg3[%c0_2, %c0_3] : memref<128x128xbf16, #tpu.memory_space<vmem>>, vector<128x128xbf16>
    %cst = arith.constant dense<0.000000e+00> : vector<64x128xf32>
    %5 = tpu.matmul %3, %4, %cst {dimension_numbers = #tpu.dot_dimension_numbers<[1], [0], [0], [1], [0, 0, 1, 1], [], []>} : vector<64x128xbf16>, vector<128x128xbf16>, vector<64x128xf32> -> vector<64x128xf32>
    %6 = arith.truncf %5 : vector<64x128xf32> to vector<64x128xbf16>
    %c0_4 = arith.constant 0 : index
    %c0_5 = arith.constant 0 : index
    %7 = vector.load %arg4[%c0_4, %c0_5] : memref<64x128xbf16, #tpu.memory_space<vmem>>, vector<64x128xbf16>
    tpu.vector_store %arg4[%c0_4, %c0_5], %6 {strides = array<i32>} : memref<64x128xbf16, #tpu.memory_space<vmem>>, vector<64x128xbf16>,
    %c0_6 = arith.constant 0 : index
    %c0_7 = arith.constant 0 : index
    %8 = vector.load %arg5[%c0_6, %c0_7] : memref<8x128xf32, #tpu.memory_space<vmem>>, vector<8x128xf32>
    %cst_8 = arith.constant 6.400000e+01 : f32
    %9 = vector.broadcast %cst_8 : f32 to vector<8x128xf32>
    %10 = arith.addf %8, %9 : vector<8x128xf32>
    %cst_9 = arith.constant 1.000000e+00 : f32
    %11 = vector.broadcast %cst_9 : f32 to vector<8x128xf32>
    %12 = arith.maximumf %10, %11 : vector<8x128xf32>
    %cst_10 = arith.constant 1.000000e+00 : f32
    %13 = vector.broadcast %cst_10 : f32 to vector<8x128xf32>
    %14 = arith.divf %13, %12 : vector<8x128xf32>
    %cst_11 = arith.constant dense<0.000000e+00> : vector<128xf32>
    %15 = vector.multi_reduction <add>, %5, %cst_11 [0] : vector<64x128xf32> to vector<128xf32>
    %16 = vector.shape_cast %15 : vector<128xf32> to vector<1x128xf32>
    %cst_12 = arith.constant 6.400000e+01 : f32
    %17 = vector.broadcast %cst_12 : f32 to vector<1x128xf32>
    %18 = arith.divf %16, %17 : vector<1x128xf32>
    %19 = vector.broadcast %18 : vector<1x128xf32> to vector<64x128xf32>
    %20 = arith.subf %5, %19 : vector<64x128xf32>
    %21 = arith.mulf %20, %20 : vector<64x128xf32>
    %cst_13 = arith.constant dense<0.000000e+00> : vector<128xf32>
    %22 = vector.multi_reduction <add>, %21, %cst_13 [0] : vector<64x128xf32> to vector<128xf32>
    %23 = vector.shape_cast %22 : vector<128xf32> to vector<1x128xf32>
    %c0_14 = arith.constant 0 : index
    %c0_15 = arith.constant 0 : index
    %24 = vector.load %arg6[%c0_14, %c0_15] : memref<8x128xf32, #tpu.memory_space<vmem>>, vector<8x128xf32>
    %25 = vector.broadcast %18 : vector<1x128xf32> to vector<8x128xf32>
    %26 = arith.subf %25, %24 : vector<8x128xf32>
    %c0_16 = arith.constant 0 : index
    %c0_17 = arith.constant 0 : index
    %27 = vector.load %arg6[%c0_16, %c0_17] : memref<8x128xf32, #tpu.memory_space<vmem>>, vector<8x128xf32>
    %cst_18 = arith.constant 6.400000e+01 : f32
    %28 = vector.broadcast %cst_18 : f32 to vector<8x128xf32>
    %29 = arith.mulf %28, %14 : vector<8x128xf32>
    %30 = arith.mulf %26, %29 : vector<8x128xf32>
    %31 = arith.addf %27, %30 : vector<8x128xf32>
    %c0_19 = arith.constant 0 : index
    %c0_20 = arith.constant 0 : index
    %32 = vector.load %arg6[%c0_19, %c0_20] : memref<8x128xf32, #tpu.memory_space<vmem>>, vector<8x128xf32>
    tpu.vector_store %arg6[%c0_19, %c0_20], %31 {strides = array<i32>} : memref<8x128xf32, #tpu.memory_space<vmem>>, vector<8x128xf32>,
    %c0_21 = arith.constant 0 : index
    %c0_22 = arith.constant 0 : index
    %33 = vector.load %arg7[%c0_21, %c0_22] : memref<8x128xf32, #tpu.memory_space<vmem>>, vector<8x128xf32>
    %34 = vector.broadcast %23 : vector<1x128xf32> to vector<8x128xf32>
    %35 = arith.addf %33, %34 : vector<8x128xf32>
    %36 = arith.mulf %26, %26 : vector<8x128xf32>
    %cst_23 = arith.constant 6.400000e+01 : f32
    %37 = vector.broadcast %cst_23 : f32 to vector<8x128xf32>
    %38 = arith.mulf %8, %37 : vector<8x128xf32>
    %39 = arith.mulf %38, %14 : vector<8x128xf32>
    %40 = arith.mulf %36, %39 : vector<8x128xf32>
    %41 = arith.addf %35, %40 : vector<8x128xf32>
    %c0_24 = arith.constant 0 : index
    %c0_25 = arith.constant 0 : index
    %42 = vector.load %arg7[%c0_24, %c0_25] : memref<8x128xf32, #tpu.memory_space<vmem>>, vector<8x128xf32>
    tpu.vector_store %arg7[%c0_24, %c0_25], %41 {strides = array<i32>} : memref<8x128xf32, #tpu.memory_space<vmem>>, vector<8x128xf32>,
    %cst_26 = arith.constant 6.400000e+01 : f32
    %43 = vector.broadcast %cst_26 : f32 to vector<8x128xf32>
    %44 = arith.addf %8, %43 : vector<8x128xf32>
    %c0_27 = arith.constant 0 : index
    %c0_28 = arith.constant 0 : index
    %45 = vector.load %arg5[%c0_27, %c0_28] : memref<8x128xf32, #tpu.memory_space<vmem>>, vector<8x128xf32>
    tpu.vector_store %arg5[%c0_27, %c0_28], %44 {strides = array<i32>} : memref<8x128xf32, #tpu.memory_space<vmem>>, vector<8x128xf32>,
    return
  }
  func.func @transform_0(%arg0: i32, %arg1: i32) -> (i32, i32) {
    %c1_i32 = arith.constant 1 : i32
    %0 = arith.muli %arg0, %c1_i32 : i32
    %1 = arith.addi %0, %arg1 : i32
    %c0_i32 = arith.constant 0 : i32
    %c0_i32_0 = arith.constant 0 : i32
    return %1, %c0_i32 : i32, i32
  }
  func.func @transform_1(%arg0: i32, %arg1: i32) -> (i32, i32) {
    %c0_i32 = arith.constant 0 : i32
    %c0_i32_0 = arith.constant 0 : i32
    %c0_i32_1 = arith.constant 0 : i32
    return %c0_i32, %c0_i32_0 : i32, i32
  }
  func.func @transform_2(%arg0: i32, %arg1: i32) -> (i32, i32) {
    %c1_i32 = arith.constant 1 : i32
    %0 = arith.muli %arg0, %c1_i32 : i32
    %1 = arith.addi %0, %arg1 : i32
    %c0_i32 = arith.constant 0 : i32
    %c0_i32_0 = arith.constant 0 : i32
    return %1, %c0_i32 : i32, i32
  }
  func.func @transform_3(%arg0: i32, %arg1: i32) -> (i32, i32) {
    %c0_i32 = arith.constant 0 : i32
    %c0_i32_0 = arith.constant 0 : i32
    return %arg0, %c0_i32 : i32, i32
  }
  func.func @transform_4(%arg0: i32, %arg1: i32) -> (i32, i32) {
    %c0_i32 = arith.constant 0 : i32
    %c0_i32_0 = arith.constant 0 : i32
    return %arg0, %c0_i32 : i32, i32
  }
  func.func @transform_5(%arg0: i32, %arg1: i32) -> (i32, i32) {
    %c0_i32 = arith.constant 0 : i32
    %c0_i32_0 = arith.constant 0 : i32
    return %arg0, %c0_i32 : i32, i32
  }
}

module attributes {stable_mosaic.version = 11 : i64} {
  func.func @_conv_stats_down_kernel(%arg0: i32, %arg1: i32, %arg2: memref<64x128xbf16, #tpu.memory_space<vmem>>, %arg3: memref<128x128xbf16, #tpu.memory_space<vmem>>, %arg4: memref<64x128xbf16, #tpu.memory_space<vmem>>, %arg5: memref<128x128xbf16, #tpu.memory_space<vmem>>, %arg6: memref<64x128xbf16, #tpu.memory_space<vmem>>, %arg7: memref<64x128xbf16, #tpu.memory_space<vmem>>, %arg8: memref<8x128xf32, #tpu.memory_space<vmem>>, %arg9: memref<8x128xf32, #tpu.memory_space<vmem>>, %arg10: memref<8x128xf32, #tpu.memory_space<vmem>>, %arg11: memref<8x128xf32, #tpu.memory_space<vmem>>, %arg12: memref<8x128xf32, #tpu.memory_space<vmem>>) attributes {dimension_semantics = [#tpu.dimension_semantics<parallel>, #tpu.dimension_semantics<arbitrary>], iteration_bounds = array<i64: 2, 1>, scalar_prefetch = 0 : i64, scratch_operands = 0 : i64, tpu.core_type = #tpu.core_type<tc>, window_params = [{transform_indices = @transform_0, window_bounds = array<i64: 64, 128>}, {pipeline_mode = #tpu.pipeline_mode<synchronous>, transform_indices = @transform_1, window_bounds = array<i64: 128, 128>}, {transform_indices = @transform_2, window_bounds = array<i64: 64, 128>}, {pipeline_mode = #tpu.pipeline_mode<synchronous>, transform_indices = @transform_3, window_bounds = array<i64: 128, 128>}, {transform_indices = @transform_4, window_bounds = array<i64: 64, 128>}, {transform_indices = @transform_5, window_bounds = array<i64: 64, 128>}, {transform_indices = @transform_6, window_bounds = array<i64: 8, 128>}, {transform_indices = @transform_7, window_bounds = array<i64: 8, 128>}, {transform_indices = @transform_8, window_bounds = array<i64: 8, 128>}, {transform_indices = @transform_9, window_bounds = array<i64: 8, 128>}, {transform_indices = @transform_10, window_bounds = array<i64: 8, 128>}]} {
    %c0_i32 = arith.constant 0 : i32
    %0 = arith.cmpi eq, %arg1, %c0_i32 : i32
    %1 = arith.extui %0 : i1 to i32
    %c0_i32_0 = arith.constant 0 : i32
    %2 = arith.cmpi ne, %1, %c0_i32_0 : i32
    scf.if %2 {
      %cst_51 = arith.constant 0.000000e+00 : f32
      %79 = vector.broadcast %cst_51 : f32 to vector<8x128xf32>
      %c0_52 = arith.constant 0 : index
      %c0_53 = arith.constant 0 : index
      %80 = vector.load %arg8[%c0_52, %c0_53] : memref<8x128xf32, #tpu.memory_space<vmem>>, vector<8x128xf32>
      tpu.vector_store %arg8[%c0_52, %c0_53], %79 {strides = array<i32>} : memref<8x128xf32, #tpu.memory_space<vmem>>, vector<8x128xf32>,
      %cst_54 = arith.constant 0.000000e+00 : f32
      %81 = vector.broadcast %cst_54 : f32 to vector<8x128xf32>
      %c0_55 = arith.constant 0 : index
      %c0_56 = arith.constant 0 : index
      %82 = vector.load %arg9[%c0_55, %c0_56] : memref<8x128xf32, #tpu.memory_space<vmem>>, vector<8x128xf32>
      tpu.vector_store %arg9[%c0_55, %c0_56], %81 {strides = array<i32>} : memref<8x128xf32, #tpu.memory_space<vmem>>, vector<8x128xf32>,
      %cst_57 = arith.constant 0.000000e+00 : f32
      %83 = vector.broadcast %cst_57 : f32 to vector<8x128xf32>
      %c0_58 = arith.constant 0 : index
      %c0_59 = arith.constant 0 : index
      %84 = vector.load %arg10[%c0_58, %c0_59] : memref<8x128xf32, #tpu.memory_space<vmem>>, vector<8x128xf32>
      tpu.vector_store %arg10[%c0_58, %c0_59], %83 {strides = array<i32>} : memref<8x128xf32, #tpu.memory_space<vmem>>, vector<8x128xf32>,
      %cst_60 = arith.constant 0.000000e+00 : f32
      %85 = vector.broadcast %cst_60 : f32 to vector<8x128xf32>
      %c0_61 = arith.constant 0 : index
      %c0_62 = arith.constant 0 : index
      %86 = vector.load %arg11[%c0_61, %c0_62] : memref<8x128xf32, #tpu.memory_space<vmem>>, vector<8x128xf32>
      tpu.vector_store %arg11[%c0_61, %c0_62], %85 {strides = array<i32>} : memref<8x128xf32, #tpu.memory_space<vmem>>, vector<8x128xf32>,
      %cst_63 = arith.constant 0.000000e+00 : f32
      %87 = vector.broadcast %cst_63 : f32 to vector<8x128xf32>
      %c0_64 = arith.constant 0 : index
      %c0_65 = arith.constant 0 : index
      %88 = vector.load %arg12[%c0_64, %c0_65] : memref<8x128xf32, #tpu.memory_space<vmem>>, vector<8x128xf32>
      tpu.vector_store %arg12[%c0_64, %c0_65], %87 {strides = array<i32>} : memref<8x128xf32, #tpu.memory_space<vmem>>, vector<8x128xf32>,
    } else {
    }
    %c0 = arith.constant 0 : index
    %c0_1 = arith.constant 0 : index
    %3 = vector.load %arg2[%c0, %c0_1] : memref<64x128xbf16, #tpu.memory_space<vmem>>, vector<64x128xbf16>
    %c0_2 = arith.constant 0 : index
    %c0_3 = arith.constant 0 : index
    %4 = vector.load %arg3[%c0_2, %c0_3] : memref<128x128xbf16, #tpu.memory_space<vmem>>, vector<128x128xbf16>
    %cst = arith.constant dense<0.000000e+00> : vector<64x128xf32>
    %5 = tpu.matmul %3, %4, %cst {dimension_numbers = #tpu.dot_dimension_numbers<[1], [0], [0], [1], [0, 0, 1, 1], [], []>} : vector<64x128xbf16>, vector<128x128xbf16>, vector<64x128xf32> -> vector<64x128xf32>
    %c0_4 = arith.constant 0 : index
    %c0_5 = arith.constant 0 : index
    %6 = vector.load %arg4[%c0_4, %c0_5] : memref<64x128xbf16, #tpu.memory_space<vmem>>, vector<64x128xbf16>
    %c0_6 = arith.constant 0 : index
    %c0_7 = arith.constant 0 : index
    %7 = vector.load %arg5[%c0_6, %c0_7] : memref<128x128xbf16, #tpu.memory_space<vmem>>, vector<128x128xbf16>
    %cst_8 = arith.constant dense<0.000000e+00> : vector<64x128xf32>
    %8 = tpu.matmul %6, %7, %cst_8 {dimension_numbers = #tpu.dot_dimension_numbers<[1], [0], [0], [1], [0, 0, 1, 1], [], []>} : vector<64x128xbf16>, vector<128x128xbf16>, vector<64x128xf32> -> vector<64x128xf32>
    %9 = arith.truncf %5 : vector<64x128xf32> to vector<64x128xbf16>
    %c0_9 = arith.constant 0 : index
    %c0_10 = arith.constant 0 : index
    %10 = vector.load %arg6[%c0_9, %c0_10] : memref<64x128xbf16, #tpu.memory_space<vmem>>, vector<64x128xbf16>
    tpu.vector_store %arg6[%c0_9, %c0_10], %9 {strides = array<i32>} : memref<64x128xbf16, #tpu.memory_space<vmem>>, vector<64x128xbf16>,
    %11 = arith.truncf %8 : vector<64x128xf32> to vector<64x128xbf16>
    %c0_11 = arith.constant 0 : index
    %c0_12 = arith.constant 0 : index
    %12 = vector.load %arg7[%c0_11, %c0_12] : memref<64x128xbf16, #tpu.memory_space<vmem>>, vector<64x128xbf16>
    tpu.vector_store %arg7[%c0_11, %c0_12], %11 {strides = array<i32>} : memref<64x128xbf16, #tpu.memory_space<vmem>>, vector<64x128xbf16>,
    %c0_13 = arith.constant 0 : index
    %c0_14 = arith.constant 0 : index
    %13 = vector.load %arg8[%c0_13, %c0_14] : memref<8x128xf32, #tpu.memory_space<vmem>>, vector<8x128xf32>
    %cst_15 = arith.constant 6.400000e+01 : f32
    %14 = vector.broadcast %cst_15 : f32 to vector<8x128xf32>
    %15 = arith.addf %13, %14 : vector<8x128xf32>
    %cst_16 = arith.constant 1.000000e+00 : f32
    %16 = vector.broadcast %cst_16 : f32 to vector<8x128xf32>
    %17 = arith.maximumf %15, %16 : vector<8x128xf32>
    %cst_17 = arith.constant 1.000000e+00 : f32
    %18 = vector.broadcast %cst_17 : f32 to vector<8x128xf32>
    %19 = arith.divf %18, %17 : vector<8x128xf32>
    %cst_18 = arith.constant dense<0.000000e+00> : vector<128xf32>
    %20 = vector.multi_reduction <add>, %5, %cst_18 [0] : vector<64x128xf32> to vector<128xf32>
    %21 = vector.shape_cast %20 : vector<128xf32> to vector<1x128xf32>
    %cst_19 = arith.constant 6.400000e+01 : f32
    %22 = vector.broadcast %cst_19 : f32 to vector<1x128xf32>
    %23 = arith.divf %21, %22 : vector<1x128xf32>
    %24 = vector.broadcast %23 : vector<1x128xf32> to vector<64x128xf32>
    %25 = arith.subf %5, %24 : vector<64x128xf32>
    %26 = arith.mulf %25, %25 : vector<64x128xf32>
    %cst_20 = arith.constant dense<0.000000e+00> : vector<128xf32>
    %27 = vector.multi_reduction <add>, %26, %cst_20 [0] : vector<64x128xf32> to vector<128xf32>
    %28 = vector.shape_cast %27 : vector<128xf32> to vector<1x128xf32>
    %c0_21 = arith.constant 0 : index
    %c0_22 = arith.constant 0 : index
    %29 = vector.load %arg9[%c0_21, %c0_22] : memref<8x128xf32, #tpu.memory_space<vmem>>, vector<8x128xf32>
    %30 = vector.broadcast %23 : vector<1x128xf32> to vector<8x128xf32>
    %31 = arith.subf %30, %29 : vector<8x128xf32>
    %c0_23 = arith.constant 0 : index
    %c0_24 = arith.constant 0 : index
    %32 = vector.load %arg9[%c0_23, %c0_24] : memref<8x128xf32, #tpu.memory_space<vmem>>, vector<8x128xf32>
    %cst_25 = arith.constant 6.400000e+01 : f32
    %33 = vector.broadcast %cst_25 : f32 to vector<8x128xf32>
    %34 = arith.mulf %33, %19 : vector<8x128xf32>
    %35 = arith.mulf %31, %34 : vector<8x128xf32>
    %36 = arith.addf %32, %35 : vector<8x128xf32>
    %c0_26 = arith.constant 0 : index
    %c0_27 = arith.constant 0 : index
    %37 = vector.load %arg9[%c0_26, %c0_27] : memref<8x128xf32, #tpu.memory_space<vmem>>, vector<8x128xf32>
    tpu.vector_store %arg9[%c0_26, %c0_27], %36 {strides = array<i32>} : memref<8x128xf32, #tpu.memory_space<vmem>>, vector<8x128xf32>,
    %c0_28 = arith.constant 0 : index
    %c0_29 = arith.constant 0 : index
    %38 = vector.load %arg10[%c0_28, %c0_29] : memref<8x128xf32, #tpu.memory_space<vmem>>, vector<8x128xf32>
    %39 = vector.broadcast %28 : vector<1x128xf32> to vector<8x128xf32>
    %40 = arith.addf %38, %39 : vector<8x128xf32>
    %41 = arith.mulf %31, %31 : vector<8x128xf32>
    %cst_30 = arith.constant 6.400000e+01 : f32
    %42 = vector.broadcast %cst_30 : f32 to vector<8x128xf32>
    %43 = arith.mulf %13, %42 : vector<8x128xf32>
    %44 = arith.mulf %43, %19 : vector<8x128xf32>
    %45 = arith.mulf %41, %44 : vector<8x128xf32>
    %46 = arith.addf %40, %45 : vector<8x128xf32>
    %c0_31 = arith.constant 0 : index
    %c0_32 = arith.constant 0 : index
    %47 = vector.load %arg10[%c0_31, %c0_32] : memref<8x128xf32, #tpu.memory_space<vmem>>, vector<8x128xf32>
    tpu.vector_store %arg10[%c0_31, %c0_32], %46 {strides = array<i32>} : memref<8x128xf32, #tpu.memory_space<vmem>>, vector<8x128xf32>,
    %cst_33 = arith.constant dense<0.000000e+00> : vector<128xf32>
    %48 = vector.multi_reduction <add>, %8, %cst_33 [0] : vector<64x128xf32> to vector<128xf32>
    %49 = vector.shape_cast %48 : vector<128xf32> to vector<1x128xf32>
    %cst_34 = arith.constant 6.400000e+01 : f32
    %50 = vector.broadcast %cst_34 : f32 to vector<1x128xf32>
    %51 = arith.divf %49, %50 : vector<1x128xf32>
    %52 = vector.broadcast %51 : vector<1x128xf32> to vector<64x128xf32>
    %53 = arith.subf %8, %52 : vector<64x128xf32>
    %54 = arith.mulf %53, %53 : vector<64x128xf32>
    %cst_35 = arith.constant dense<0.000000e+00> : vector<128xf32>
    %55 = vector.multi_reduction <add>, %54, %cst_35 [0] : vector<64x128xf32> to vector<128xf32>
    %56 = vector.shape_cast %55 : vector<128xf32> to vector<1x128xf32>
    %c0_36 = arith.constant 0 : index
    %c0_37 = arith.constant 0 : index
    %57 = vector.load %arg11[%c0_36, %c0_37] : memref<8x128xf32, #tpu.memory_space<vmem>>, vector<8x128xf32>
    %58 = vector.broadcast %51 : vector<1x128xf32> to vector<8x128xf32>
    %59 = arith.subf %58, %57 : vector<8x128xf32>
    %c0_38 = arith.constant 0 : index
    %c0_39 = arith.constant 0 : index
    %60 = vector.load %arg11[%c0_38, %c0_39] : memref<8x128xf32, #tpu.memory_space<vmem>>, vector<8x128xf32>
    %cst_40 = arith.constant 6.400000e+01 : f32
    %61 = vector.broadcast %cst_40 : f32 to vector<8x128xf32>
    %62 = arith.mulf %61, %19 : vector<8x128xf32>
    %63 = arith.mulf %59, %62 : vector<8x128xf32>
    %64 = arith.addf %60, %63 : vector<8x128xf32>
    %c0_41 = arith.constant 0 : index
    %c0_42 = arith.constant 0 : index
    %65 = vector.load %arg11[%c0_41, %c0_42] : memref<8x128xf32, #tpu.memory_space<vmem>>, vector<8x128xf32>
    tpu.vector_store %arg11[%c0_41, %c0_42], %64 {strides = array<i32>} : memref<8x128xf32, #tpu.memory_space<vmem>>, vector<8x128xf32>,
    %c0_43 = arith.constant 0 : index
    %c0_44 = arith.constant 0 : index
    %66 = vector.load %arg12[%c0_43, %c0_44] : memref<8x128xf32, #tpu.memory_space<vmem>>, vector<8x128xf32>
    %67 = vector.broadcast %56 : vector<1x128xf32> to vector<8x128xf32>
    %68 = arith.addf %66, %67 : vector<8x128xf32>
    %69 = arith.mulf %59, %59 : vector<8x128xf32>
    %cst_45 = arith.constant 6.400000e+01 : f32
    %70 = vector.broadcast %cst_45 : f32 to vector<8x128xf32>
    %71 = arith.mulf %13, %70 : vector<8x128xf32>
    %72 = arith.mulf %71, %19 : vector<8x128xf32>
    %73 = arith.mulf %69, %72 : vector<8x128xf32>
    %74 = arith.addf %68, %73 : vector<8x128xf32>
    %c0_46 = arith.constant 0 : index
    %c0_47 = arith.constant 0 : index
    %75 = vector.load %arg12[%c0_46, %c0_47] : memref<8x128xf32, #tpu.memory_space<vmem>>, vector<8x128xf32>
    tpu.vector_store %arg12[%c0_46, %c0_47], %74 {strides = array<i32>} : memref<8x128xf32, #tpu.memory_space<vmem>>, vector<8x128xf32>,
    %cst_48 = arith.constant 6.400000e+01 : f32
    %76 = vector.broadcast %cst_48 : f32 to vector<8x128xf32>
    %77 = arith.addf %13, %76 : vector<8x128xf32>
    %c0_49 = arith.constant 0 : index
    %c0_50 = arith.constant 0 : index
    %78 = vector.load %arg8[%c0_49, %c0_50] : memref<8x128xf32, #tpu.memory_space<vmem>>, vector<8x128xf32>
    tpu.vector_store %arg8[%c0_49, %c0_50], %77 {strides = array<i32>} : memref<8x128xf32, #tpu.memory_space<vmem>>, vector<8x128xf32>,
    return
  }
  func.func @transform_0(%arg0: i32, %arg1: i32) -> (i32, i32) {
    %c1_i32 = arith.constant 1 : i32
    %0 = arith.muli %arg0, %c1_i32 : i32
    %1 = arith.addi %0, %arg1 : i32
    %c0_i32 = arith.constant 0 : i32
    %c0_i32_0 = arith.constant 0 : i32
    return %1, %c0_i32 : i32, i32
  }
  func.func @transform_1(%arg0: i32, %arg1: i32) -> (i32, i32) {
    %c0_i32 = arith.constant 0 : i32
    %c0_i32_0 = arith.constant 0 : i32
    %c0_i32_1 = arith.constant 0 : i32
    return %c0_i32, %c0_i32_0 : i32, i32
  }
  func.func @transform_2(%arg0: i32, %arg1: i32) -> (i32, i32) {
    %c1_i32 = arith.constant 1 : i32
    %0 = arith.muli %arg0, %c1_i32 : i32
    %1 = arith.addi %0, %arg1 : i32
    %c0_i32 = arith.constant 0 : i32
    %c0_i32_0 = arith.constant 0 : i32
    return %1, %c0_i32 : i32, i32
  }
  func.func @transform_3(%arg0: i32, %arg1: i32) -> (i32, i32) {
    %c0_i32 = arith.constant 0 : i32
    %c0_i32_0 = arith.constant 0 : i32
    %c0_i32_1 = arith.constant 0 : i32
    return %c0_i32, %c0_i32_0 : i32, i32
  }
  func.func @transform_4(%arg0: i32, %arg1: i32) -> (i32, i32) {
    %c1_i32 = arith.constant 1 : i32
    %0 = arith.muli %arg0, %c1_i32 : i32
    %1 = arith.addi %0, %arg1 : i32
    %c0_i32 = arith.constant 0 : i32
    %c0_i32_0 = arith.constant 0 : i32
    return %1, %c0_i32 : i32, i32
  }
  func.func @transform_5(%arg0: i32, %arg1: i32) -> (i32, i32) {
    %c1_i32 = arith.constant 1 : i32
    %0 = arith.muli %arg0, %c1_i32 : i32
    %1 = arith.addi %0, %arg1 : i32
    %c0_i32 = arith.constant 0 : i32
    %c0_i32_0 = arith.constant 0 : i32
    return %1, %c0_i32 : i32, i32
  }
  func.func @transform_6(%arg0: i32, %arg1: i32) -> (i32, i32) {
    %c0_i32 = arith.constant 0 : i32
    %c0_i32_0 = arith.constant 0 : i32
    return %arg0, %c0_i32 : i32, i32
  }
  func.func @transform_7(%arg0: i32, %arg1: i32) -> (i32, i32) {
    %c0_i32 = arith.constant 0 : i32
    %c0_i32_0 = arith.constant 0 : i32
    return %arg0, %c0_i32 : i32, i32
  }
  func.func @transform_8(%arg0: i32, %arg1: i32) -> (i32, i32) {
    %c0_i32 = arith.constant 0 : i32
    %c0_i32_0 = arith.constant 0 : i32
    return %arg0, %c0_i32 : i32, i32
  }
  func.func @transform_9(%arg0: i32, %arg1: i32) -> (i32, i32) {
    %c0_i32 = arith.constant 0 : i32
    %c0_i32_0 = arith.constant 0 : i32
    return %arg0, %c0_i32 : i32, i32
  }
  func.func @transform_10(%arg0: i32, %arg1: i32) -> (i32, i32) {
    %c0_i32 = arith.constant 0 : i32
    %c0_i32_0 = arith.constant 0 : i32
    return %arg0, %c0_i32 : i32, i32
  }
}

module attributes {stable_mosaic.version = 11 : i64} {
  func.func @_apply_down_kernel(%arg0: i32, %arg1: memref<64x128xbf16, #tpu.memory_space<vmem>>, %arg2: memref<1x128xf32, #tpu.memory_space<vmem>>, %arg3: memref<1x128xf32, #tpu.memory_space<vmem>>, %arg4: memref<64x128xbf16, #tpu.memory_space<vmem>>, %arg5: memref<1x128xf32, #tpu.memory_space<vmem>>, %arg6: memref<1x128xf32, #tpu.memory_space<vmem>>, %arg7: memref<64x128xf32, #tpu.memory_space<vmem>>) attributes {dimension_semantics = [#tpu.dimension_semantics<parallel>], iteration_bounds = array<i64: 2>, scalar_prefetch = 0 : i64, scratch_operands = 0 : i64, tpu.core_type = #tpu.core_type<tc>, window_params = [{transform_indices = @transform_0, window_bounds = array<i64: 64, 128>}, {pipeline_mode = #tpu.pipeline_mode<synchronous>, transform_indices = @transform_1, window_bounds = array<i64: 1, 128>}, {pipeline_mode = #tpu.pipeline_mode<synchronous>, transform_indices = @transform_2, window_bounds = array<i64: 1, 128>}, {transform_indices = @transform_3, window_bounds = array<i64: 64, 128>}, {pipeline_mode = #tpu.pipeline_mode<synchronous>, transform_indices = @transform_4, window_bounds = array<i64: 1, 128>}, {pipeline_mode = #tpu.pipeline_mode<synchronous>, transform_indices = @transform_5, window_bounds = array<i64: 1, 128>}, {transform_indices = @transform_6, window_bounds = array<i64: 64, 128>}]} {
    %c0 = arith.constant 0 : index
    %c0_0 = arith.constant 0 : index
    %0 = vector.load %arg1[%c0, %c0_0] : memref<64x128xbf16, #tpu.memory_space<vmem>>, vector<64x128xbf16>
    %1 = arith.extf %0 : vector<64x128xbf16> to vector<64x128xf32>
    %c0_1 = arith.constant 0 : index
    %c0_2 = arith.constant 0 : index
    %2 = vector.load %arg2[%c0_1, %c0_2] : memref<1x128xf32, #tpu.memory_space<vmem>>, vector<1x128xf32>
    %3 = vector.broadcast %2 : vector<1x128xf32> to vector<64x128xf32>
    %4 = arith.mulf %1, %3 : vector<64x128xf32>
    %c0_3 = arith.constant 0 : index
    %c0_4 = arith.constant 0 : index
    %5 = vector.load %arg3[%c0_3, %c0_4] : memref<1x128xf32, #tpu.memory_space<vmem>>, vector<1x128xf32>
    %6 = vector.broadcast %5 : vector<1x128xf32> to vector<64x128xf32>
    %7 = arith.addf %4, %6 : vector<64x128xf32>
    %c0_5 = arith.constant 0 : index
    %c0_6 = arith.constant 0 : index
    %8 = vector.load %arg4[%c0_5, %c0_6] : memref<64x128xbf16, #tpu.memory_space<vmem>>, vector<64x128xbf16>
    %9 = arith.extf %8 : vector<64x128xbf16> to vector<64x128xf32>
    %c0_7 = arith.constant 0 : index
    %c0_8 = arith.constant 0 : index
    %10 = vector.load %arg5[%c0_7, %c0_8] : memref<1x128xf32, #tpu.memory_space<vmem>>, vector<1x128xf32>
    %11 = vector.broadcast %10 : vector<1x128xf32> to vector<64x128xf32>
    %12 = arith.mulf %9, %11 : vector<64x128xf32>
    %c0_9 = arith.constant 0 : index
    %c0_10 = arith.constant 0 : index
    %13 = vector.load %arg6[%c0_9, %c0_10] : memref<1x128xf32, #tpu.memory_space<vmem>>, vector<1x128xf32>
    %14 = vector.broadcast %13 : vector<1x128xf32> to vector<64x128xf32>
    %15 = arith.addf %12, %14 : vector<64x128xf32>
    %16 = arith.addf %7, %15 : vector<64x128xf32>
    %cst = arith.constant 0.000000e+00 : f32
    %17 = vector.broadcast %cst : f32 to vector<64x128xf32>
    %18 = arith.maximumf %16, %17 : vector<64x128xf32>
    %c0_11 = arith.constant 0 : index
    %c0_12 = arith.constant 0 : index
    %19 = vector.load %arg7[%c0_11, %c0_12] : memref<64x128xf32, #tpu.memory_space<vmem>>, vector<64x128xf32>
    tpu.vector_store %arg7[%c0_11, %c0_12], %18 {strides = array<i32>} : memref<64x128xf32, #tpu.memory_space<vmem>>, vector<64x128xf32>,
    return
  }
  func.func @transform_0(%arg0: i32) -> (i32, i32) {
    %c0_i32 = arith.constant 0 : i32
    %c0_i32_0 = arith.constant 0 : i32
    return %arg0, %c0_i32 : i32, i32
  }
  func.func @transform_1(%arg0: i32) -> (i32, i32) {
    %c0_i32 = arith.constant 0 : i32
    %c0_i32_0 = arith.constant 0 : i32
    %c0_i32_1 = arith.constant 0 : i32
    return %c0_i32, %c0_i32_0 : i32, i32
  }
  func.func @transform_2(%arg0: i32) -> (i32, i32) {
    %c0_i32 = arith.constant 0 : i32
    %c0_i32_0 = arith.constant 0 : i32
    %c0_i32_1 = arith.constant 0 : i32
    return %c0_i32, %c0_i32_0 : i32, i32
  }
  func.func @transform_3(%arg0: i32) -> (i32, i32) {
    %c0_i32 = arith.constant 0 : i32
    %c0_i32_0 = arith.constant 0 : i32
    return %arg0, %c0_i32 : i32, i32
  }
  func.func @transform_4(%arg0: i32) -> (i32, i32) {
    %c0_i32 = arith.constant 0 : i32
    %c0_i32_0 = arith.constant 0 : i32
    %c0_i32_1 = arith.constant 0 : i32
    return %c0_i32, %c0_i32_0 : i32, i32
  }
  func.func @transform_5(%arg0: i32) -> (i32, i32) {
    %c0_i32 = arith.constant 0 : i32
    %c0_i32_0 = arith.constant 0 : i32
    %c0_i32_1 = arith.constant 0 : i32
    return %c0_i32, %c0_i32_0 : i32, i32
  }
  func.func @transform_6(%arg0: i32) -> (i32, i32) {
    %c0_i32 = arith.constant 0 : i32
    %c0_i32_0 = arith.constant 0 : i32
    return %arg0, %c0_i32 : i32, i32
  }
}

</mosaic_0001>

<llo_original>
// kernel: basic_block_forward.5
$region0: #{basic_block_forward.5}
  #allocation0 [shape = 'u32[]', space=smem, size = 0x4, offset = 0x4, fixed_abs, tag = 'smem constant byte address 0x4 - core index']
  #allocation1 [shape = 'u32[144,128]{1,0:T(1,128)}', space=vmem, size = 0x12000, scoped, tag = 'internal scratch']
  %s0 = inlined_call_operand.vmem [shape: bf16[128,128], index: 0, kind: input, shape index: {}]
  %s1 = inlined_call_operand.vmem [shape: f32[1,128], index: 1, kind: input, shape index: {}]
  %s2 = inlined_call_operand.vmem [shape: f32[1,128], index: 2, kind: input, shape index: {}]
  %s3 = inlined_call_operand.vmem [shape: bf16[128,128], index: 3, kind: output, shape index: {}]
  %s4 = sld [smem:[#allocation0]]
  $region45: #{basic_block_forward.5} parent=0
    _
  %s6 = ssub.s32 1, %s4
  %s7 = scalar_select 0, %s6, %s4
  loop: start=0, step=1, limit=4
  $region2: #{basic_block_forward.5} parent=0 // loop_pre_header
    _
  $region3: #{basic_block_forward.5} parent=0 // loop_header
    %s9 = sphi 0, %s13
    %p10 = scmp.ge.s32.totalorder %s9, 4
    %s19 = sphi 0, %s21
    %s22 = sphi 0, %s19
    %s23 = sphi 0, %s22
    %s39 = sphi 0, %s23
    %s43 = sphi 0, %s43
    %s45 = sphi 0, %s43
    %s46 = sphi 0, %s45
    %s60 = sphi 0, %s46
    %s64 = sphi 0, %s64
    %s66 = sphi 0, %s64
    %s67 = sphi 0, %s66
    %s81 = sphi 0, %s67
    %s87 = sphi 0, %s89
    %s90 = sphi 0, %s87
    %s91 = sphi 0, %s90
    %s107 = sphi 0, %s91
  $region4: #{basic_block_forward.5} parent=0 // loop_header_branch
    %12 = sbr.rel (%p10) target = $region8
  $region5: #{basic_block_forward.5} parent=0 // loop_body
    %s14 = ssub.s32 %s9, 1
    %s15 = ssub.s32 %s9, 2
    %s16 = sadd.s32 %s9, 1
    %s17 = ssub.s32 %s9, %s16
    %p18 = scmp.eq.s32.totalorder %s17, 0
    %s20 = sadd.s32 %s19, 1
    %s21 = scalar_select %p18, %s19, %s20
    %p24 = pneg %p18
    %p25 = scmp.eq.s32.totalorder %s9, 1
    %p26 = por %p24, %p25
    %p27 = scmp.ne.s32.totalorder %s19, %s22
    %p28 = scmp.eq.s32.totalorder %s9, 0
    %p29 = por %p27, %p28
    %p30 = scmp.ne.s32.totalorder %s19, %s22
    %p31 = scmp.eq.s32.totalorder %s14, 1
    %p32 = por %p30, %p31
    %p33 = scmp.ne.s32.totalorder %s22, %s23
    %p34 = scmp.eq.s32.totalorder %s14, 0
    %p35 = por %p33, %p34
    %p36 = scmp.ne.s32.totalorder %s22, %s23
    %p37 = scmp.eq.s32.totalorder %s15, 1
    %p38 = por %p36, %p37
    %p40 = scmp.ne.s32.totalorder %s23, %s39
    %p41 = scmp.eq.s32.totalorder %s15, 0
    %p42 = por %p40, %p41
    %s44 = sadd.s32 %s43, 1
    %p47 = scmp.eq.s32.totalorder %s9, 1
    %p48 = scmp.ne.s32.totalorder %s43, %s45
    %p49 = scmp.eq.s32.totalorder %s9, 0
    %p50 = por %p48, %p49
    %p51 = scmp.ne.s32.totalorder %s43, %s45
    %p52 = scmp.eq.s32.totalorder %s14, 1
    %p53 = por %p51, %p52
    %p54 = scmp.ne.s32.totalorder %s45, %s46
    %p55 = scmp.eq.s32.totalorder %s14, 0
    %p56 = por %p54, %p55
    %p57 = scmp.ne.s32.totalorder %s45, %s46
    %p58 = scmp.eq.s32.totalorder %s15, 1
    %p59 = por %p57, %p58
    %p61 = scmp.ne.s32.totalorder %s46, %s60
    %p62 = scmp.eq.s32.totalorder %s15, 0
    %p63 = por %p61, %p62
    %s65 = sadd.s32 %s64, 1
    %p68 = scmp.eq.s32.totalorder %s9, 1
    %p69 = scmp.ne.s32.totalorder %s64, %s66
    %p70 = scmp.eq.s32.totalorder %s9, 0
    %p71 = por %p69, %p70
    %p72 = scmp.ne.s32.totalorder %s64, %s66
    %p73 = scmp.eq.s32.totalorder %s14, 1
    %p74 = por %p72, %p73
    %p75 = scmp.ne.s32.totalorder %s66, %s67
    %p76 = scmp.eq.s32.totalorder %s14, 0
    %p77 = por %p75, %p76
    %p78 = scmp.ne.s32.totalorder %s66, %s67
    %p79 = scmp.eq.s32.totalorder %s15, 1
    %p80 = por %p78, %p79
    %p82 = scmp.ne.s32.totalorder %s67, %s81
    %p83 = scmp.eq.s32.totalorder %s15, 0
    %p84 = por %p82, %p83
    %s85 = ssub.s32 %s9, %s16
    %p86 = scmp.eq.s32.totalorder %s85, 0
    %s88 = sadd.s32 %s87, 1
    %s89 = scalar_select %p86, %s87, %s88
    %p92 = pneg %p86
    %p93 = scmp.eq.s32.totalorder %s9, 1
    %p94 = por %p92, %p93
    %p95 = scmp.ne.s32.totalorder %s87, %s90
    %p96 = scmp.eq.s32.totalorder %s9, 0
    %p97 = por %p95, %p96
    %p98 = scmp.ne.s32.totalorder %s87, %s90
    %p99 = scmp.eq.s32.totalorder %s14, 1
    %p100 = por %p98, %p99
    %p101 = scmp.ne.s32.totalorder %s90, %s91
    %p102 = scmp.eq.s32.totalorder %s14, 0
    %p103 = por %p101, %p102
    %p104 = scmp.ne.s32.totalorder %s90, %s91
    %p105 = scmp.eq.s32.totalorder %s15, 1
    %p106 = por %p104, %p105
    %p108 = scmp.ne.s32.totalorder %s91, %s107
    %p109 = scmp.eq.s32.totalorder %s15, 0
    %p110 = por %p108, %p109
    %p111 = scmp.le.s32.totalorder 1, %s9
    %p112 = scmp.lt.s32.totalorder %s9, 3
    %p113 = pnand %p111, %p112
    %p114 = pneg %p113
    // Predicated region
    $region9: #{basic_block_forward.5} parent=5 // pred_check
      _
    $region10: #{basic_block_forward.5} parent=5 // pred_check_branch
      %116 = sbr.rel (%p113) target = $region12
    $region11: #{basic_block_forward.5} parent=5 // pred_region
      %s117 = ssub.s32 %s9, 1
      // Predicated region
      $region13: #{basic_block_forward.5} parent=11 // pred_check
        %p118 = pneg %p56
      $region14: #{basic_block_forward.5} parent=11 // pred_check_branch
        %120 = sbr.rel (%p118) target = $region16
      $region15: #{basic_block_forward.5} parent=11 // pred_region
        _
      $region16: #{basic_block_forward.5} parent=11 // pred_fallthru
        _
      // Predicated region
      $region17: #{basic_block_forward.5} parent=11 // pred_check
        %p121 = pneg %p77
      $region18: #{basic_block_forward.5} parent=11 // pred_check_branch
        %123 = sbr.rel (%p121) target = $region20
      $region19: #{basic_block_forward.5} parent=11 // pred_region
        _
      $region20: #{basic_block_forward.5} parent=11 // pred_fallthru
        _
    $region12: #{basic_block_forward.5} parent=5 // pred_fallthru
      _
    %p124 = scmp.lt.s32.totalorder %s9, 2
    // Predicated region
    $region21: #{basic_block_forward.5} parent=5 // pred_check
      %p125 = pneg %p124
    $region22: #{basic_block_forward.5} parent=5 // pred_check_branch
      %127 = sbr.rel (%p125) target = $region24
    $region23: #{basic_block_forward.5} parent=5 // pred_region
      // Predicated region
      $region25: #{basic_block_forward.5} parent=23 // pred_check
        %p128 = pneg %p29
      $region26: #{basic_block_forward.5} parent=23 // pred_check_branch
        %130 = sbr.rel (%p128) target = $region28
      $region27: #{basic_block_forward.5} parent=23 // pred_region
        %s131 = smul.u32 8, %s9
        %p132 = scmp.lt.s32.totalorder %s131, 15
        %s133 = scalar_select %p132, %s131, 15
        %s134 = smul.addr %s133, 4
        %s135 = scalar_lea.vmem %s0, %s134
        %s136 = smul.u32 8, %s9
      $region28: #{basic_block_forward.5} parent=23 // pred_fallthru
        _
    $region24: #{basic_block_forward.5} parent=5 // pred_fallthru
      _
    %p137 = scmp.le.s32.totalorder 1, %s9
    %p138 = scmp.lt.s32.totalorder %s9, 3
    %p139 = pnand %p137, %p138
    %p140 = pneg %p139
    // Predicated region
    $region29: #{basic_block_forward.5} parent=5 // pred_check
      _
    $region30: #{basic_block_forward.5} parent=5 // pred_check_branch
      %142 = sbr.rel (%p139) target = $region32
    $region31: #{basic_block_forward.5} parent=5 // pred_region
      %s143 = ssub.s32 %s9, 1
      %s144 = smul.u32 8, %s14
      %p145 = scmp.lt.s32.totalorder %s144, 15
      %s146 = scalar_select %p145, %s144, 15
      %s147 = smul.addr %s146, 4
      %s148 = scalar_lea.vmem %s0, %s147
      %p149 = pneg %p35
      %p150 = pneg %p32
      %p151 = pneg %p56
      %p152 = pneg %p53
      %p153 = pneg %p77
      %p154 = pneg %p74
      %p155 = pneg %p103
      %p156 = pneg %p100
      %s157 = smul.u32 8, %s14
      %p158 = scmp.lt.s32.totalorder %s157, 15
      %s159 = scalar_select %p158, %s157, 15
      %s160 = smul.addr %s159, 4
      %s161 = scalar_lea.vmem %s3, %s160
      %s162 = smul.u32 8, %s14
      %p163 = scmp.lt.s32.totalorder %s162, 15
      %s164 = scalar_select %p163, %s162, 15
      %s165 = smul.addr %s164, 4
      %s166 = scalar_lea.vmem %s0, %s165
      %s167 = smul.u32 8, %s14
      %s168 = smul.u32 8, %s14
      %p169 = scmp.lt.s32.totalorder %s168, 15
      %s170 = scalar_select %p169, %s168, 15
      %s171 = smul.addr %s170, 4
      %s172 = scalar_lea.vmem %s3, %s171
      %s173 = smul.u32 8, %s14
      %v174 = vld [vmem:[%s166] sm:$0xf]
      %v175 = vld [vmem:[%s166 + $0x4] sm:$0xf]
      %v176 = vld [vmem:[%s166 + $0x8] sm:$0xf]
      %v177 = vld [vmem:[%s166 + $0xc] sm:$0xf]
      %v178 = vld [vmem:[%s166 + $0x10] sm:$0xf]
      %v179 = vld [vmem:[%s166 + $0x14] sm:$0xf]
      %v180 = vld [vmem:[%s166 + $0x18] sm:$0xf]
      %v181 = vld [vmem:[%s166 + $0x1c] sm:$0xf]
      %v182 = vunpack.c.l.bf16 %v174
      %v183 = vunpack.c.l.bf16 %v175
      %v184 = vunpack.c.l.bf16 %v176
      %v185 = vunpack.c.l.bf16 %v177
      %v186 = vunpack.c.l.bf16 %v178
      %v187 = vunpack.c.l.bf16 %v179
      %v188 = vunpack.c.l.bf16 %v180
      %v189 = vunpack.c.l.bf16 %v181
      %v190 = vld [vmem:[%s1] sm:$0x1]
      %v192 = vlaneseq
      %v193 = vshrl.u32 %v192, 7
      %v194 = vsub.s32 0, %v193
      %v195 = vrot.slane %v190, %v194
      %v197 = vmul.f32 %v182, %v195
      %v198 = vmul.f32 %v183, %v195
      %v199 = vmul.f32 %v184, %v195
      %v200 = vmul.f32 %v185, %v195
      %v201 = vmul.f32 %v186, %v195
      %v202 = vmul.f32 %v187, %v195
      %v203 = vmul.f32 %v188, %v195
      %v204 = vmul.f32 %v189, %v195
      %v205 = vld [vmem:[%s2] sm:$0x1]
      %v207 = vlaneseq
      %v208 = vshrl.u32 %v207, 7
      %v209 = vsub.s32 0, %v208
      %v210 = vrot.slane %v205, %v209
      %v212 = vadd.f32 %v197, %v210
      %v213 = vadd.f32 %v198, %v210
      %v214 = vadd.f32 %v199, %v210
      %v215 = vadd.f32 %v200, %v210
      %v216 = vadd.f32 %v201, %v210
      %v217 = vadd.f32 %v202, %v210
      %v218 = vadd.f32 %v203, %v210
      %v219 = vadd.f32 %v204, %v210
      %v220 = vmax.f32 %v212, 0.0
      %v221 = vmax.f32 %v213, 0.0
      %v222 = vmax.f32 %v214, 0.0
      %v223 = vmax.f32 %v215, 0.0
      %v224 = vmax.f32 %v216, 0.0
      %v225 = vmax.f32 %v217, 0.0
      %v226 = vmax.f32 %v218, 0.0
      %v227 = vmax.f32 %v219, 0.0
      %v228 = vpack.c.bf16 %v221, %v220
      %v229 = vpack.c.bf16 %v223, %v222
      %v230 = vpack.c.bf16 %v225, %v224
      %v231 = vpack.c.bf16 %v227, %v226
      %v236 = vunpack.c.l.b16 %v228
      %v237 = vunpack.c.h.b16 %v228
      %v238 = vunpack.c.l.b16 %v229
      %v239 = vunpack.c.h.b16 %v229
      %v240 = vunpack.c.l.b16 %v230
      %v241 = vunpack.c.h.b16 %v230
      %v242 = vunpack.c.l.b16 %v231
      %v243 = vunpack.c.h.b16 %v231
      %v244 = vpack.c.b16 %v236, %v236
      %v245 = vpack.c.b16 %v237, %v237
      %v246 = vpack.c.b16 %v238, %v238
      %v247 = vpack.c.b16 %v239, %v239
      %v248 = vpack.c.b16 %v240, %v240
      %v249 = vpack.c.b16 %v241, %v241
      %v250 = vpack.c.b16 %v242, %v242
      %v251 = vpack.c.b16 %v243, %v243
      %260 = vst [vmem:[%s172] sm:$0xf] %v244
      %261 = vst [vmem:[%s172 + $0x4] sm:$0xf] %v245
      %262 = vst [vmem:[%s172 + $0x8] sm:$0xf] %v246
      %263 = vst [vmem:[%s172 + $0xc] sm:$0xf] %v247
      %264 = vst [vmem:[%s172 + $0x10] sm:$0xf] %v248
      %265 = vst [vmem:[%s172 + $0x14] sm:$0xf] %v249
      %266 = vst [vmem:[%s172 + $0x18] sm:$0xf] %v250
      %267 = vst [vmem:[%s172 + $0x1c] sm:$0xf] %v251
      %s268 = smul.u32 8, %s14
      %p269 = scmp.lt.s32.totalorder %s268, 15
      %s270 = scalar_select %p269, %s268, 15
      %s271 = smul.addr %s270, 4
      %s272 = scalar_lea.vmem %s3, %s271
      // Predicated region
      $region33: #{basic_block_forward.5} parent=31 // pred_check
        %p273 = pneg %p100
      $region34: #{basic_block_forward.5} parent=31 // pred_check_branch
        %275 = sbr.rel (%p273) target = $region36
      $region35: #{basic_block_forward.5} parent=31 // pred_region
        %s276 = smul.u32 8, %s14
      $region36: #{basic_block_forward.5} parent=31 // pred_fallthru
        _
    $region32: #{basic_block_forward.5} parent=5 // pred_fallthru
      _
    %p277 = scmp.le.s32.totalorder 2, %s9
    // Predicated region
    $region37: #{basic_block_forward.5} parent=5 // pred_check
      %p278 = pneg %p277
    $region38: #{basic_block_forward.5} parent=5 // pred_check_branch
      %280 = sbr.rel (%p278) target = $region40
    $region39: #{basic_block_forward.5} parent=5 // pred_region
      %s281 = ssub.s32 %s9, 2
      // Predicated region
      $region41: #{basic_block_forward.5} parent=39 // pred_check
        %p282 = pneg %p106
      $region42: #{basic_block_forward.5} parent=39 // pred_check_branch
        %284 = sbr.rel (%p282) target = $region44
      $region43: #{basic_block_forward.5} parent=39 // pred_region
        %s285 = smul.u32 8, %s15
        %p286 = scmp.lt.s32.totalorder %s285, 15
        %s287 = scalar_select %p286, %s285, 15
        %s288 = smul.addr %s287, 4
        %s289 = scalar_lea.vmem %s3, %s288
      $region44: #{basic_block_forward.5} parent=39 // pred_fallthru
        _
    $region40: #{basic_block_forward.5} parent=5 // pred_fallthru
      _
  $region6: #{basic_block_forward.5} parent=0 // loop_footer
    %s13 = sadd.s32 1, %s9
  $region7: #{basic_block_forward.5} parent=0 // loop_footer_branch
    %8 = sbr.rel target = $region3
  $region8: #{basic_block_forward.5} parent=0 // loop_exit
    _

// kernel: basic_block_forward.4
$region0: #{basic_block_forward.4}
  #allocation0 [shape = 'u32[]', space=smem, size = 0x4, offset = 0x4, fixed_abs, tag = 'smem constant byte address 0x4 - core index']
  #allocation1 [shape = 'u32[144,128]{1,0:T(1,128)}', space=vmem, size = 0x12000, scoped, tag = 'internal scratch']
  %s0 = inlined_call_operand.vmem [shape: bf16[128,128], index: 0, kind: input, shape index: {}]
  %s1 = inlined_call_operand.vmem [shape: bf16[128,128], index: 1, kind: input, shape index: {}]
  %s2 = inlined_call_operand.vmem [shape: bf16[128,128], index: 2, kind: output, shape index: {0}]
  %s3 = inlined_call_operand.vmem [shape: f32[16,128], index: 3, kind: output, shape index: {1}]
  %s4 = inlined_call_operand.vmem [shape: f32[16,128], index: 4, kind: output, shape index: {2}]
  %s5 = inlined_call_operand.vmem [shape: f32[16,128], index: 5, kind: output, shape index: {3}]
  %6 = xla_tuple %s2, %s3, %s4, %s5
  %s7 = sld [smem:[#allocation0]]
  $region69: #{basic_block_forward.4} parent=0
    _
  %s9 = ssub.s32 1, %s7
  %s10 = scalar_select 0, %s9, %s7
  loop: start=0, step=1, limit=4
  $region2: #{basic_block_forward.4} parent=0 // loop_pre_header
    _
  $region3: #{basic_block_forward.4} parent=0 // loop_header
    %s12 = sphi 0, %s16
    %p13 = scmp.ge.s32.totalorder %s12, 4
    %s19 = sphi 0, %s31
    %s20 = sphi 0, %s27
    %s21 = sphi 0, %s19
    %s22 = sphi 0, %s20
    %s23 = sphi 0, %s21
    %s24 = sphi 0, %s22
    %s36 = sphi 0, %s38
    %s39 = sphi 0, %s36
    %s40 = sphi 0, %s39
    %s56 = sphi 0, %s40
    %s60 = sphi 0, %s60
    %s62 = sphi 0, %s60
    %s63 = sphi 0, %s62
    %s77 = sphi 0, %s63
    %s85 = sphi 0, %s87
    %s88 = sphi 0, %s85
    %s89 = sphi 0, %s88
    %s105 = sphi 0, %s89
    %s111 = sphi 0, %s113
    %s114 = sphi 0, %s111
    %s115 = sphi 0, %s114
    %s131 = sphi 0, %s115
    %s137 = sphi 0, %s139
    %s140 = sphi 0, %s137
    %s141 = sphi 0, %s140
    %s157 = sphi 0, %s141
    %s163 = sphi 0, %s165
    %s166 = sphi 0, %s163
    %s167 = sphi 0, %s166
    %s183 = sphi 0, %s167
  $region4: #{basic_block_forward.4} parent=0 // loop_header_branch
    %15 = sbr.rel (%p13) target = $region8
  $region5: #{basic_block_forward.4} parent=0 // loop_body
    %s17 = ssub.s32 %s12, 1
    %s18 = ssub.s32 %s12, 2
    %s25 = sadd.s32 1, %s20
    %p26 = scmp.ge.s32.totalorder %s25, 1
    %s27 = scalar_select %p26, 0, %s25
    %s28 = sadd.s32 1, %s19
    %s29 = scalar_select %p26, %s28, %s19
    %p30 = scmp.ge.s32.totalorder %s29, 2
    %s31 = scalar_select %p30, 0, %s29
    %s32 = sadd.s32 %s19, %s20
    %s33 = sadd.s32 %s31, %s27
    %s34 = ssub.s32 %s32, %s33
    %p35 = scmp.eq.s32.totalorder %s34, 0
    %s37 = sadd.s32 %s36, 1
    %s38 = scalar_select %p35, %s36, %s37
    %p41 = pneg %p35
    %p42 = scmp.eq.s32.totalorder %s12, 1
    %p43 = por %p41, %p42
    %p44 = scmp.ne.s32.totalorder %s36, %s39
    %p45 = scmp.eq.s32.totalorder %s12, 0
    %p46 = por %p44, %p45
    %p47 = scmp.ne.s32.totalorder %s36, %s39
    %p48 = scmp.eq.s32.totalorder %s17, 1
    %p49 = por %p47, %p48
    %p50 = scmp.ne.s32.totalorder %s39, %s40
    %p51 = scmp.eq.s32.totalorder %s17, 0
    %p52 = por %p50, %p51
    %p53 = scmp.ne.s32.totalorder %s39, %s40
    %p54 = scmp.eq.s32.totalorder %s18, 1
    %p55 = por %p53, %p54
    %p57 = scmp.ne.s32.totalorder %s40, %s56
    %p58 = scmp.eq.s32.totalorder %s18, 0
    %p59 = por %p57, %p58
    %s61 = sadd.s32 %s60, 1
    %p64 = scmp.eq.s32.totalorder %s12, 1
    %p65 = scmp.ne.s32.totalorder %s60, %s62
    %p66 = scmp.eq.s32.totalorder %s12, 0
    %p67 = por %p65, %p66
    %p68 = scmp.ne.s32.totalorder %s60, %s62
    %p69 = scmp.eq.s32.totalorder %s17, 1
    %p70 = por %p68, %p69
    %p71 = scmp.ne.s32.totalorder %s62, %s63
    %p72 = scmp.eq.s32.totalorder %s17, 0
    %p73 = por %p71, %p72
    %p74 = scmp.ne.s32.totalorder %s62, %s63
    %p75 = scmp.eq.s32.totalorder %s18, 1
    %p76 = por %p74, %p75
    %p78 = scmp.ne.s32.totalorder %s63, %s77
    %p79 = scmp.eq.s32.totalorder %s18, 0
    %p80 = por %p78, %p79
    %s81 = sadd.s32 %s19, %s20
    %s82 = sadd.s32 %s31, %s27
    %s83 = ssub.s32 %s81, %s82
    %p84 = scmp.eq.s32.totalorder %s83, 0
    %s86 = sadd.s32 %s85, 1
    %s87 = scalar_select %p84, %s85, %s86
    %p90 = pneg %p84
    %p91 = scmp.eq.s32.totalorder %s12, 1
    %p92 = por %p90, %p91
    %p93 = scmp.ne.s32.totalorder %s85, %s88
    %p94 = scmp.eq.s32.totalorder %s12, 0
    %p95 = por %p93, %p94
    %p96 = scmp.ne.s32.totalorder %s85, %s88
    %p97 = scmp.eq.s32.totalorder %s17, 1
    %p98 = por %p96, %p97
    %p99 = scmp.ne.s32.totalorder %s88, %s89
    %p100 = scmp.eq.s32.totalorder %s17, 0
    %p101 = por %p99, %p100
    %p102 = scmp.ne.s32.totalorder %s88, %s89
    %p103 = scmp.eq.s32.totalorder %s18, 1
    %p104 = por %p102, %p103
    %p106 = scmp.ne.s32.totalorder %s89, %s105
    %p107 = scmp.eq.s32.totalorder %s18, 0
    %p108 = por %p106, %p107
    %s109 = ssub.s32 %s19, %s31
    %p110 = scmp.eq.s32.totalorder %s109, 0
    %s112 = sadd.s32 %s111, 1
    %s113 = scalar_select %p110, %s111, %s112
    %p116 = pneg %p110
    %p117 = scmp.eq.s32.totalorder %s12, 1
    %p118 = por %p116, %p117
    %p119 = scmp.ne.s32.totalorder %s111, %s114
    %p120 = scmp.eq.s32.totalorder %s12, 0
    %p121 = por %p119, %p120
    %p122 = scmp.ne.s32.totalorder %s111, %s114
    %p123 = scmp.eq.s32.totalorder %s17, 1
    %p124 = por %p122, %p123
    %p125 = scmp.ne.s32.totalorder %s114, %s115
    %p126 = scmp.eq.s32.totalorder %s17, 0
    %p127 = por %p125, %p126
    %p128 = scmp.ne.s32.totalorder %s114, %s115
    %p129 = scmp.eq.s32.totalorder %s18, 1
    %p130 = por %p128, %p129
    %p132 = scmp.ne.s32.totalorder %s115, %s131
    %p133 = scmp.eq.s32.totalorder %s18, 0
    %p134 = por %p132, %p133
    %s135 = ssub.s32 %s19, %s31
    %p136 = scmp.eq.s32.totalorder %s135, 0
    %s138 = sadd.s32 %s137, 1
    %s139 = scalar_select %p136, %s137, %s138
    %p142 = pneg %p136
    %p143 = scmp.eq.s32.totalorder %s12, 1
    %p144 = por %p142, %p143
    %p145 = scmp.ne.s32.totalorder %s137, %s140
    %p146 = scmp.eq.s32.totalorder %s12, 0
    %p147 = por %p145, %p146
    %p148 = scmp.ne.s32.totalorder %s137, %s140
    %p149 = scmp.eq.s32.totalorder %s17, 1
    %p150 = por %p148, %p149
    %p151 = scmp.ne.s32.totalorder %s140, %s141
    %p152 = scmp.eq.s32.totalorder %s17, 0
    %p153 = por %p151, %p152
    %p154 = scmp.ne.s32.totalorder %s140, %s141
    %p155 = scmp.eq.s32.totalorder %s18, 1
    %p156 = por %p154, %p155
    %p158 = scmp.ne.s32.totalorder %s141, %s157
    %p159 = scmp.eq.s32.totalorder %s18, 0
    %p160 = por %p158, %p159
    %s161 = ssub.s32 %s19, %s31
    %p162 = scmp.eq.s32.totalorder %s161, 0
    %s164 = sadd.s32 %s163, 1
    %s165 = scalar_select %p162, %s163, %s164
    %p168 = pneg %p162
    %p169 = scmp.eq.s32.totalorder %s12, 1
    %p170 = por %p168, %p169
    %p171 = scmp.ne.s32.totalorder %s163, %s166
    %p172 = scmp.eq.s32.totalorder %s12, 0
    %p173 = por %p171, %p172
    %p174 = scmp.ne.s32.totalorder %s163, %s166
    %p175 = scmp.eq.s32.totalorder %s17, 1
    %p176 = por %p174, %p175
    %p177 = scmp.ne.s32.totalorder %s166, %s167
    %p178 = scmp.eq.s32.totalorder %s17, 0
    %p179 = por %p177, %p178
    %p180 = scmp.ne.s32.totalorder %s166, %s167
    %p181 = scmp.eq.s32.totalorder %s18, 1
    %p182 = por %p180, %p181
    %p184 = scmp.ne.s32.totalorder %s167, %s183
    %p185 = scmp.eq.s32.totalorder %s18, 0
    %p186 = por %p184, %p185
    %p187 = scmp.le.s32.totalorder 1, %s12
    %p188 = scmp.lt.s32.totalorder %s12, 3
    %p189 = pnand %p187, %p188
    %p190 = pneg %p189
    // Predicated region
    $region9: #{basic_block_forward.4} parent=5 // pred_check
      _
    $region10: #{basic_block_forward.4} parent=5 // pred_check_branch
      %192 = sbr.rel (%p189) target = $region12
    $region11: #{basic_block_forward.4} parent=5 // pred_region
      %s193 = ssub.s32 %s12, 1
      // Predicated region
      $region13: #{basic_block_forward.4} parent=11 // pred_check
        %p194 = pneg %p73
      $region14: #{basic_block_forward.4} parent=11 // pred_check_branch
        %196 = sbr.rel (%p194) target = $region16
      $region15: #{basic_block_forward.4} parent=11 // pred_region
        _
      $region16: #{basic_block_forward.4} parent=11 // pred_fallthru
        _
    $region12: #{basic_block_forward.4} parent=5 // pred_fallthru
      _
    %p197 = scmp.lt.s32.totalorder %s12, 2
    // Predicated region
    $region17: #{basic_block_forward.4} parent=5 // pred_check
      %p198 = pneg %p197
    $region18: #{basic_block_forward.4} parent=5 // pred_check_branch
      %200 = sbr.rel (%p198) target = $region20
    $region19: #{basic_block_forward.4} parent=5 // pred_region
      // Predicated region
      $region21: #{basic_block_forward.4} parent=19 // pred_check
        %p201 = pneg %p46
      $region22: #{basic_block_forward.4} parent=19 // pred_check_branch
        %203 = sbr.rel (%p201) target = $region24
      $region23: #{basic_block_forward.4} parent=19 // pred_region
        %s204 = sadd.s32 %s19, %s20
        %s205 = smul.u32 8, %s204
        %p206 = scmp.lt.s32.totalorder %s205, 15
        %s207 = scalar_select %p206, %s205, 15
        %s208 = smul.addr %s207, 4
        %s209 = scalar_lea.vmem %s0, %s208
        %s210 = sadd.s32 %s19, %s20
        %s211 = smul.u32 8, %s210
      $region24: #{basic_block_forward.4} parent=19 // pred_fallthru
        _
    $region20: #{basic_block_forward.4} parent=5 // pred_fallthru
      _
    %p212 = scmp.le.s32.totalorder 1, %s12
    %p213 = scmp.lt.s32.totalorder %s12, 3
    %p214 = pnand %p212, %p213
    %p215 = pneg %p214
    // Predicated region
    $region25: #{basic_block_forward.4} parent=5 // pred_check
      _
    $region26: #{basic_block_forward.4} parent=5 // pred_check_branch
      %217 = sbr.rel (%p214) target = $region28
    $region27: #{basic_block_forward.4} parent=5 // pred_region
      %s218 = ssub.s32 %s12, 1
      %s219 = sadd.s32 %s21, %s22
      %s220 = smul.u32 8, %s219
      %p221 = scmp.lt.s32.totalorder %s220, 15
      %s222 = scalar_select %p221, %s220, 15
      %s223 = smul.addr %s222, 4
      %s224 = scalar_lea.vmem %s0, %s223
      %p225 = pneg %p52
      %p226 = pneg %p49
      %p227 = pneg %p73
      %p228 = pneg %p70
      %p229 = pneg %p101
      %p230 = pneg %p98
      %s231 = sadd.s32 %s21, %s22
      %s232 = smul.u32 8, %s231
      %p233 = scmp.lt.s32.totalorder %s232, 15
      %s234 = scalar_select %p233, %s232, 15
      %s235 = smul.addr %s234, 4
      %s236 = scalar_lea.vmem %s2, %s235
      %p237 = pneg %p127
      %p238 = pneg %p124
      %p239 = scmp.lt.s32.totalorder %s21, 1
      %s240 = scalar_select %p239, %s21, 1
      %s241 = smul.addr %s240, 8
      %s242 = scalar_lea.vmem %s3, %s241
      %p243 = pneg %p153
      %p244 = pneg %p150
      %p245 = scmp.lt.s32.totalorder %s21, 1
      %s246 = scalar_select %p245, %s21, 1
      %s247 = smul.addr %s246, 8
      %s248 = scalar_lea.vmem %s4, %s247
      %p249 = pneg %p179
      %p250 = pneg %p176
      %p251 = scmp.lt.s32.totalorder %s21, 1
      %s252 = scalar_select %p251, %s21, 1
      %s253 = smul.addr %s252, 8
      %s254 = scalar_lea.vmem %s5, %s253
      %s255 = sadd.s32 %s21, %s22
      %s256 = smul.u32 8, %s255
      %p257 = scmp.lt.s32.totalorder %s256, 15
      %s258 = scalar_select %p257, %s256, 15
      %s259 = smul.addr %s258, 4
      %s260 = scalar_lea.vmem %s0, %s259
      %s261 = sadd.s32 %s21, %s22
      %s262 = smul.u32 8, %s261
      %s263 = sadd.s32 %s21, %s22
      %s264 = smul.u32 8, %s263
      %p265 = scmp.lt.s32.totalorder %s264, 15
      %s266 = scalar_select %p265, %s264, 15
      %s267 = smul.addr %s266, 4
      %s268 = scalar_lea.vmem %s2, %s267
      %s269 = sadd.s32 %s21, %s22
      %s270 = smul.u32 8, %s269
      %p271 = scmp.lt.s32.totalorder %s21, 1
      %s272 = scalar_select %p271, %s21, 1
      %s273 = smul.addr %s272, 8
      %s274 = scalar_lea.vmem %s3, %s273
      %p275 = scmp.lt.s32.totalorder %s21, 1
      %s276 = scalar_select %p275, %s21, 1
      %s277 = smul.addr %s276, 8
      %s278 = scalar_lea.vmem %s4, %s277
      %p279 = scmp.lt.s32.totalorder %s21, 1
      %s280 = scalar_select %p279, %s21, 1
      %s281 = smul.addr %s280, 8
      %s282 = scalar_lea.vmem %s5, %s281
      %p284 = scmp.eq.s32.totalorder %s22, 0
      // Predicated region
      $region29: #{basic_block_forward.4} parent=27 // pred_check
        %p285 = pneg %p284
      $region30: #{basic_block_forward.4} parent=27 // pred_check_branch
        %287 = sbr.rel (%p285) target = $region32
      $region31: #{basic_block_forward.4} parent=27 // pred_region
        %288 = vst [vmem:[%s274] sm:$0xff] 0.0
        %289 = vst [vmem:[%s278] sm:$0xff] 0.0
        %290 = vst [vmem:[%s282] sm:$0xff] 0.0
      $region32: #{basic_block_forward.4} parent=27 // pred_fallthru
        _
      %v291 = vld [vmem:[%s260] sm:$0xf]
      %v292 = vld [vmem:[%s260 + $0x4] sm:$0xf]
      %v293 = vld [vmem:[%s260 + $0x8] sm:$0xf]
      %v294 = vld [vmem:[%s260 + $0xc] sm:$0xf]
      %v295 = vld [vmem:[%s260 + $0x10] sm:$0xf]
      %v296 = vld [vmem:[%s260 + $0x14] sm:$0xf]
      %v297 = vld [vmem:[%s260 + $0x18] sm:$0xf]
      %v298 = vld [vmem:[%s260 + $0x1c] sm:$0xf]
      %v299 = vld [vmem:[%s1] sm:$0xf]
      %v300 = vld [vmem:[%s1 + $0x4] sm:$0xf]
      %v301 = vld [vmem:[%s1 + $0x8] sm:$0xf]
      %v302 = vld [vmem:[%s1 + $0xc] sm:$0xf]
      %v303 = vld [vmem:[%s1 + $0x10] sm:$0xf]
      %v304 = vld [vmem:[%s1 + $0x14] sm:$0xf]
      %v305 = vld [vmem:[%s1 + $0x18] sm:$0xf]
      %v306 = vld [vmem:[%s1 + $0x1c] sm:$0xf]
      %v307 = vld [vmem:[%s1 + $0x20] sm:$0xf]
      %v308 = vld [vmem:[%s1 + $0x24] sm:$0xf]
      %v309 = vld [vmem:[%s1 + $0x28] sm:$0xf]
      %v310 = vld [vmem:[%s1 + $0x2c] sm:$0xf]
      %v311 = vld [vmem:[%s1 + $0x30] sm:$0xf]
      %v312 = vld [vmem:[%s1 + $0x34] sm:$0xf]
      %v313 = vld [vmem:[%s1 + $0x38] sm:$0xf]
      %v314 = vld [vmem:[%s1 + $0x3c] sm:$0xf]
      %v323 = vunpack.c.l.b16 %v291
      %v324 = vunpack.c.l.b16 %v292
      %v325 = vunpack.c.l.b16 %v293
      %v326 = vunpack.c.l.b16 %v294
      %v327 = vunpack.c.l.b16 %v295
      %v328 = vunpack.c.l.b16 %v296
      %v329 = vunpack.c.l.b16 %v297
      %v330 = vunpack.c.l.b16 %v298
      %v331 = vpack.c.b16 %v324, %v323
      %v332 = vpack.c.b16 %v326, %v325
      %v333 = vpack.c.b16 %v328, %v327
      %v334 = vpack.c.b16 %v330, %v329
      %v355 = vunpack.c.l.b16 %v299
      %v356 = vunpack.c.l.b16 %v300
      %v357 = vunpack.c.l.b16 %v301
      %v358 = vunpack.c.l.b16 %v302
      %v359 = vunpack.c.l.b16 %v303
      %v360 = vunpack.c.l.b16 %v304
      %v361 = vunpack.c.l.b16 %v305
      %v362 = vunpack.c.l.b16 %v306
      %v363 = vunpack.c.l.b16 %v307
      %v364 = vunpack.c.l.b16 %v308
      %v365 = vunpack.c.l.b16 %v309
      %v366 = vunpack.c.l.b16 %v310
      %v367 = vunpack.c.l.b16 %v311
      %v368 = vunpack.c.l.b16 %v312
      %v369 = vunpack.c.l.b16 %v313
      %v370 = vunpack.c.l.b16 %v314
      %v371 = vpack.c.b16 %v356, %v355
      %v372 = vpack.c.b16 %v358, %v357
      %v373 = vpack.c.b16 %v360, %v359
      %v374 = vpack.c.b16 %v362, %v361
      %v375 = vpack.c.b16 %v364, %v363
      %v376 = vpack.c.b16 %v366, %v365
      %v377 = vpack.c.b16 %v368, %v367
      %v378 = vpack.c.b16 %v370, %v369
      %387 = vmatprep.subr.bf16.mxu0 0
      %388 = vmatpush1.bf16.msra.mxu0 %v378
      %389 = vmatprep.subr.bf16.mxu0 0
      %390 = vmatpush1.bf16.msra.mxu0 %v377
      %391 = vmatprep.subr.bf16.mxu0 0
      %392 = vmatpush1.bf16.msra.mxu0 %v376
      %393 = vmatprep.subr.bf16.mxu0 0
      %394 = vmatpush1.bf16.msra.mxu0 %v375
      %395 = vmatprep.subr.bf16.mxu0 0
      %396 = vmatpush1.bf16.msra.mxu0 %v374
      %397 = vmatprep.subr.bf16.mxu0 0
      %398 = vmatpush1.bf16.msra.mxu0 %v373
      %399 = vmatprep.subr.bf16.mxu0 0
      %400 = vmatpush1.bf16.msra.mxu0 %v372
      %401 = vmatprep.subr.bf16.mxu0 0
      %402 = vmatpush1.bf16.msra.mxu0 %v371
      %403 = vmatprep.subr.bf16.mxu0 0
      %404 = vmatpush2.bf16.msra.mxu0 0
      %405 = vmatprep.subr.bf16.mxu0 0
      %406 = vmatpush2.bf16.msra.mxu0 0
      %407 = vmatprep.subr.bf16.mxu0 0
      %408 = vmatpush2.bf16.msra.mxu0 0
      %409 = vmatprep.subr.bf16.mxu0 0
      %410 = vmatpush2.bf16.msra.mxu0 0
      %411 = vmatprep.subr.bf16.mxu0 0
      %412 = vmatpush2.bf16.msra.mxu0 0
      %413 = vmatprep.subr.bf16.mxu0 0
      %414 = vmatpush2.bf16.msra.mxu0 0
      %415 = vmatprep.subr.bf16.mxu0 0
      %416 = vmatpush2.bf16.msra.mxu0 0
      %417 = vmatprep.subr.bf16.mxu0 0
      %418 = vmatpush2.bf16.msra.mxu0 0
      %419 = vmatprep.mubr.bf16.mxu0 0
      %420 = vmatmul.mubr.bf16.gmra.mxu0 %v331
      %v421 = vpop.f32.mrf.mxu0
      %v422 = vadd.f32 0.0, %v421
      %v423 = vpop.f32.mrf.mxu0
      %v424 = vpop.f32.mrf.mxu0
      %v425 = vadd.f32 0.0, %v424
      %v426 = vpop.f32.mrf.mxu0
      %427 = vmatprep.mubr.bf16.mxu0 0
      %428 = vmatmul.mubr.bf16.gmra.mxu0 %v332
      %v429 = vpop.f32.mrf.mxu0
      %v430 = vadd.f32 0.0, %v429
      %v431 = vpop.f32.mrf.mxu0
      %v432 = vpop.f32.mrf.mxu0
      %v433 = vadd.f32 0.0, %v432
      %v434 = vpop.f32.mrf.mxu0
      %435 = vmatprep.mubr.bf16.mxu0 0
      %436 = vmatmul.mubr.bf16.gmra.mxu0 %v333
      %v437 = vpop.f32.mrf.mxu0
      %v438 = vadd.f32 0.0, %v437
      %v439 = vpop.f32.mrf.mxu0
      %v440 = vpop.f32.mrf.mxu0
      %v441 = vadd.f32 0.0, %v440
      %v442 = vpop.f32.mrf.mxu0
      %443 = vmatprep.mubr.bf16.mxu0 0
      %444 = vmatmul.mubr.bf16.gmra.mxu0 %v334
      %v445 = vpop.f32.mrf.mxu0
      %v446 = vadd.f32 0.0, %v445
      %v447 = vpop.f32.mrf.mxu0
      %v448 = vpop.f32.mrf.mxu0
      %v449 = vadd.f32 0.0, %v448
      %v450 = vpop.f32.mrf.mxu0
      %451 = vdwg.mxu0
      %v452 = vpack.c.bf16 %v425, %v422
      %v453 = vpack.c.bf16 %v433, %v430
      %v454 = vpack.c.bf16 %v441, %v438
      %v455 = vpack.c.bf16 %v449, %v446
      %v460 = vunpack.c.l.b16 %v452
      %v461 = vunpack.c.h.b16 %v452
      %v462 = vunpack.c.l.b16 %v453
      %v463 = vunpack.c.h.b16 %v453
      %v464 = vunpack.c.l.b16 %v454
      %v465 = vunpack.c.h.b16 %v454
      %v466 = vunpack.c.l.b16 %v455
      %v467 = vunpack.c.h.b16 %v455
      %v468 = vpack.c.b16 %v460, %v460
      %v469 = vpack.c.b16 %v461, %v461
      %v470 = vpack.c.b16 %v462, %v462
      %v471 = vpack.c.b16 %v463, %v463
      %v472 = vpack.c.b16 %v464, %v464
      %v473 = vpack.c.b16 %v465, %v465
      %v474 = vpack.c.b16 %v466, %v466
      %v475 = vpack.c.b16 %v467, %v467
      %484 = vst [vmem:[%s268] sm:$0xf] %v468
      %485 = vst [vmem:[%s268 + $0x4] sm:$0xf] %v469
      %486 = vst [vmem:[%s268 + $0x8] sm:$0xf] %v470
      %487 = vst [vmem:[%s268 + $0xc] sm:$0xf] %v471
      %488 = vst [vmem:[%s268 + $0x10] sm:$0xf] %v472
      %489 = vst [vmem:[%s268 + $0x14] sm:$0xf] %v473
      %490 = vst [vmem:[%s268 + $0x18] sm:$0xf] %v474
      %491 = vst [vmem:[%s268 + $0x1c] sm:$0xf] %v475
      %v492 = vld [vmem:[%s274] sm:$0xff]
      %v493 = vadd.f32 %v492, 64.0
      %v494 = vmax.f32 %v493, 1.0
      %v495 = vrcp.pop %v494
      %v496 = vmul.f32 1.0, %v495
      %v497 = vadd.f32 %v422, %v425
      %v498 = vadd.f32 %v497, %v430
      %v499 = vadd.f32 %v498, %v433
      %v500 = vadd.f32 %v499, %v438
      %v501 = vadd.f32 %v500, %v441
      %v502 = vadd.f32 %v501, %v446
      %v503 = vadd.f32 %v502, %v449
      %v504 = vrot.slane %v503, 4
      %v505 = vadd.f32 %v503, %v504
      %v506 = vrot.slane %v505, 2
      %v507 = vadd.f32 %v505, %v506
      %v508 = vrot.slane %v507, 1
      %v509 = vadd.f32 %v507, %v508
      %v510 = vrcp.pop 64.0
      %v511 = vmul.f32 %v509, %v510
      %v512 = vsub.f32 %v422, %v511
      %v513 = vsub.f32 %v425, %v511
      %v514 = vsub.f32 %v430, %v511
      %v515 = vsub.f32 %v433, %v511
      %v516 = vsub.f32 %v438, %v511
      %v517 = vsub.f32 %v441, %v511
      %v518 = vsub.f32 %v446, %v511
      %v519 = vsub.f32 %v449, %v511
      %v520 = vmul.f32 %v512, %v512
      %v521 = vmul.f32 %v513, %v513
      %v522 = vmul.f32 %v514, %v514
      %v523 = vmul.f32 %v515, %v515
      %v524 = vmul.f32 %v516, %v516
      %v525 = vmul.f32 %v517, %v517
      %v526 = vmul.f32 %v518, %v518
      %v527 = vmul.f32 %v519, %v519
      %v528 = vadd.f32 %v520, %v521
      %v529 = vadd.f32 %v528, %v522
      %v530 = vadd.f32 %v529, %v523
      %v531 = vadd.f32 %v530, %v524
      %v532 = vadd.f32 %v531, %v525
      %v533 = vadd.f32 %v532, %v526
      %v534 = vadd.f32 %v533, %v527
      %v535 = vrot.slane %v534, 4
      %v536 = vadd.f32 %v534, %v535
      %v537 = vrot.slane %v536, 2
      %v538 = vadd.f32 %v536, %v537
      %v539 = vrot.slane %v538, 1
      %v540 = vadd.f32 %v538, %v539
      %v541 = vld [vmem:[%s278] sm:$0xff]
      %v542 = vsub.f32 %v511, %v541
      %v543 = vmul.f32 %v496, 64.0
      %v544 = vmul.f32 %v542, %v543
      %v545 = vadd.f32 %v541, %v544
      %546 = vst [vmem:[%s278] sm:$0xff] %v545
      %v547 = vld [vmem:[%s282] sm:$0xff]
      %v548 = vadd.f32 %v547, %v540
      %v549 = vmul.f32 %v542, %v542
      %v550 = vmul.f32 %v492, 64.0
      %v551 = vmul.f32 %v550, %v496
      %v552 = vmul.f32 %v549, %v551
      %v553 = vadd.f32 %v548, %v552
      %554 = vst [vmem:[%s282] sm:$0xff] %v553
      %555 = vst [vmem:[%s274] sm:$0xff] %v493
      %s556 = sadd.s32 %s21, %s22
      %s557 = smul.u32 8, %s556
      %p558 = scmp.lt.s32.totalorder %s557, 15
      %s559 = scalar_select %p558, %s557, 15
      %s560 = smul.addr %s559, 4
      %s561 = scalar_lea.vmem %s2, %s560
      %p562 = scmp.lt.s32.totalorder %s21, 1
      %s563 = scalar_select %p562, %s21, 1
      %s564 = smul.addr %s563, 8
      %s565 = scalar_lea.vmem %s3, %s564
      %p566 = scmp.lt.s32.totalorder %s21, 1
      %s567 = scalar_select %p566, %s21, 1
      %s568 = smul.addr %s567, 8
      %s569 = scalar_lea.vmem %s4, %s568
      %p570 = scmp.lt.s32.totalorder %s21, 1
      %s571 = scalar_select %p570, %s21, 1
      %s572 = smul.addr %s571, 8
      %s573 = scalar_lea.vmem %s5, %s572
      // Predicated region
      $region33: #{basic_block_forward.4} parent=27 // pred_check
        %p574 = pneg %p98
      $region34: #{basic_block_forward.4} parent=27 // pred_check_branch
        %576 = sbr.rel (%p574) target = $region36
      $region35: #{basic_block_forward.4} parent=27 // pred_region
        %s577 = sadd.s32 %s21, %s22
        %s578 = smul.u32 8, %s577
      $region36: #{basic_block_forward.4} parent=27 // pred_fallthru
        _
      // Predicated region
      $region37: #{basic_block_forward.4} parent=27 // pred_check
        %p579 = pneg %p124
      $region38: #{basic_block_forward.4} parent=27 // pred_check_branch
        %581 = sbr.rel (%p579) target = $region40
      $region39: #{basic_block_forward.4} parent=27 // pred_region
        _
      $region40: #{basic_block_forward.4} parent=27 // pred_fallthru
        _
      // Predicated region
      $region41: #{basic_block_forward.4} parent=27 // pred_check
        %p582 = pneg %p150
      $region42: #{basic_block_forward.4} parent=27 // pred_check_branch
        %584 = sbr.rel (%p582) target = $region44
      $region43: #{basic_block_forward.4} parent=27 // pred_region
        _
      $region44: #{basic_block_forward.4} parent=27 // pred_fallthru
        _
      // Predicated region
      $region45: #{basic_block_forward.4} parent=27 // pred_check
        %p585 = pneg %p176
      $region46: #{basic_block_forward.4} parent=27 // pred_check_branch
        %587 = sbr.rel (%p585) target = $region48
      $region47: #{basic_block_forward.4} parent=27 // pred_region
        _
      $region48: #{basic_block_forward.4} parent=27 // pred_fallthru
        _
    $region28: #{basic_block_forward.4} parent=5 // pred_fallthru
      _
    %p588 = scmp.le.s32.totalorder 2, %s12
    // Predicated region
    $region49: #{basic_block_forward.4} parent=5 // pred_check
      %p589 = pneg %p588
    $region50: #{basic_block_forward.4} parent=5 // pred_check_branch
      %591 = sbr.rel (%p589) target = $region52
    $region51: #{basic_block_forward.4} parent=5 // pred_region
      %s592 = ssub.s32 %s12, 2
      // Predicated region
      $region53: #{basic_block_forward.4} parent=51 // pred_check
        %p593 = pneg %p104
      $region54: #{basic_block_forward.4} parent=51 // pred_check_branch
        %595 = sbr.rel (%p593) target = $region56
      $region55: #{basic_block_forward.4} parent=51 // pred_region
        %s596 = sadd.s32 %s23, %s24
        %s597 = smul.u32 8, %s596
        %p598 = scmp.lt.s32.totalorder %s597, 15
        %s599 = scalar_select %p598, %s597, 15
        %s600 = smul.addr %s599, 4
        %s601 = scalar_lea.vmem %s2, %s600
      $region56: #{basic_block_forward.4} parent=51 // pred_fallthru
        _
      // Predicated region
      $region57: #{basic_block_forward.4} parent=51 // pred_check
        %p602 = pneg %p130
      $region58: #{basic_block_forward.4} parent=51 // pred_check_branch
        %604 = sbr.rel (%p602) target = $region60
      $region59: #{basic_block_forward.4} parent=51 // pred_region
        %p605 = scmp.lt.s32.totalorder %s23, 1
        %s606 = scalar_select %p605, %s23, 1
        %s607 = smul.addr %s606, 8
        %s608 = scalar_lea.vmem %s3, %s607
      $region60: #{basic_block_forward.4} parent=51 // pred_fallthru
        _
      // Predicated region
      $region61: #{basic_block_forward.4} parent=51 // pred_check
        %p609 = pneg %p156
      $region62: #{basic_block_forward.4} parent=51 // pred_check_branch
        %611 = sbr.rel (%p609) target = $region64
      $region63: #{basic_block_forward.4} parent=51 // pred_region
        %p612 = scmp.lt.s32.totalorder %s23, 1
        %s613 = scalar_select %p612, %s23, 1
        %s614 = smul.addr %s613, 8
        %s615 = scalar_lea.vmem %s4, %s614
      $region64: #{basic_block_forward.4} parent=51 // pred_fallthru
        _
      // Predicated region
      $region65: #{basic_block_forward.4} parent=51 // pred_check
        %p616 = pneg %p182
      $region66: #{basic_block_forward.4} parent=51 // pred_check_branch
        %618 = sbr.rel (%p616) target = $region68
      $region67: #{basic_block_forward.4} parent=51 // pred_region
        %p619 = scmp.lt.s32.totalorder %s23, 1
        %s620 = scalar_select %p619, %s23, 1
        %s621 = smul.addr %s620, 8
        %s622 = scalar_lea.vmem %s5, %s621
      $region68: #{basic_block_forward.4} parent=51 // pred_fallthru
        _
    $region52: #{basic_block_forward.4} parent=5 // pred_fallthru
      _
  $region6: #{basic_block_forward.4} parent=0 // loop_footer
    %s16 = sadd.s32 1, %s12
  $region7: #{basic_block_forward.4} parent=0 // loop_footer_branch
    %11 = sbr.rel target = $region3
  $region8: #{basic_block_forward.4} parent=0 // loop_exit
    _

// kernel: basic_block_forward.7
$region0: #{basic_block_forward.7}
  #allocation0 [shape = 'u32[]', space=smem, size = 0x4, offset = 0x4, fixed_abs, tag = 'smem constant byte address 0x4 - core index']
  #allocation1 [shape = 'u32[144,128]{1,0:T(1,128)}', space=vmem, size = 0x12000, scoped, tag = 'internal scratch']
  %s0 = inlined_call_operand.vmem [shape: bf16[128,128], index: 0, kind: input, shape index: {}]
  %s1 = inlined_call_operand.vmem [shape: f32[1,128], index: 1, kind: input, shape index: {}]
  %s2 = inlined_call_operand.vmem [shape: f32[1,128], index: 2, kind: input, shape index: {}]
  %s3 = inlined_call_operand.vmem [shape: bf16[128,128], index: 3, kind: input, shape index: {}]
  %s4 = inlined_call_operand.vmem [shape: f32[1,128], index: 4, kind: input, shape index: {}]
  %s5 = inlined_call_operand.vmem [shape: f32[1,128], index: 5, kind: input, shape index: {}]
  %s6 = inlined_call_operand.vmem [shape: f32[128,128], index: 6, kind: output, shape index: {}]
  %s7 = sld [smem:[#allocation0]]
  $region57: #{basic_block_forward.7} parent=0
    _
  %s9 = ssub.s32 1, %s7
  %s10 = scalar_select 0, %s9, %s7
  loop: start=0, step=1, limit=4
  $region2: #{basic_block_forward.7} parent=0 // loop_pre_header
    _
  $region3: #{basic_block_forward.7} parent=0 // loop_header
    %s12 = sphi 0, %s16
    %p13 = scmp.ge.s32.totalorder %s12, 4
    %s22 = sphi 0, %s24
    %s25 = sphi 0, %s22
    %s26 = sphi 0, %s25
    %s42 = sphi 0, %s26
    %s46 = sphi 0, %s46
    %s48 = sphi 0, %s46
    %s49 = sphi 0, %s48
    %s63 = sphi 0, %s49
    %s67 = sphi 0, %s67
    %s69 = sphi 0, %s67
    %s70 = sphi 0, %s69
    %s84 = sphi 0, %s70
    %s90 = sphi 0, %s92
    %s93 = sphi 0, %s90
    %s94 = sphi 0, %s93
    %s110 = sphi 0, %s94
    %s114 = sphi 0, %s114
    %s116 = sphi 0, %s114
    %s117 = sphi 0, %s116
    %s131 = sphi 0, %s117
    %s135 = sphi 0, %s135
    %s137 = sphi 0, %s135
    %s138 = sphi 0, %s137
    %s152 = sphi 0, %s138
    %s158 = sphi 0, %s160
    %s161 = sphi 0, %s158
    %s162 = sphi 0, %s161
    %s178 = sphi 0, %s162
  $region4: #{basic_block_forward.7} parent=0 // loop_header_branch
    %15 = sbr.rel (%p13) target = $region8
  $region5: #{basic_block_forward.7} parent=0 // loop_body
    %s17 = ssub.s32 %s12, 1
    %s18 = ssub.s32 %s12, 2
    %s19 = sadd.s32 %s12, 1
    %s20 = ssub.s32 %s12, %s19
    %p21 = scmp.eq.s32.totalorder %s20, 0
    %s23 = sadd.s32 %s22, 1
    %s24 = scalar_select %p21, %s22, %s23
    %p27 = pneg %p21
    %p28 = scmp.eq.s32.totalorder %s12, 1
    %p29 = por %p27, %p28
    %p30 = scmp.ne.s32.totalorder %s22, %s25
    %p31 = scmp.eq.s32.totalorder %s12, 0
    %p32 = por %p30, %p31
    %p33 = scmp.ne.s32.totalorder %s22, %s25
    %p34 = scmp.eq.s32.totalorder %s17, 1
    %p35 = por %p33, %p34
    %p36 = scmp.ne.s32.totalorder %s25, %s26
    %p37 = scmp.eq.s32.totalorder %s17, 0
    %p38 = por %p36, %p37
    %p39 = scmp.ne.s32.totalorder %s25, %s26
    %p40 = scmp.eq.s32.totalorder %s18, 1
    %p41 = por %p39, %p40
    %p43 = scmp.ne.s32.totalorder %s26, %s42
    %p44 = scmp.eq.s32.totalorder %s18, 0
    %p45 = por %p43, %p44
    %s47 = sadd.s32 %s46, 1
    %p50 = scmp.eq.s32.totalorder %s12, 1
    %p51 = scmp.ne.s32.totalorder %s46, %s48
    %p52 = scmp.eq.s32.totalorder %s12, 0
    %p53 = por %p51, %p52
    %p54 = scmp.ne.s32.totalorder %s46, %s48
    %p55 = scmp.eq.s32.totalorder %s17, 1
    %p56 = por %p54, %p55
    %p57 = scmp.ne.s32.totalorder %s48, %s49
    %p58 = scmp.eq.s32.totalorder %s17, 0
    %p59 = por %p57, %p58
    %p60 = scmp.ne.s32.totalorder %s48, %s49
    %p61 = scmp.eq.s32.totalorder %s18, 1
    %p62 = por %p60, %p61
    %p64 = scmp.ne.s32.totalorder %s49, %s63
    %p65 = scmp.eq.s32.totalorder %s18, 0
    %p66 = por %p64, %p65
    %s68 = sadd.s32 %s67, 1
    %p71 = scmp.eq.s32.totalorder %s12, 1
    %p72 = scmp.ne.s32.totalorder %s67, %s69
    %p73 = scmp.eq.s32.totalorder %s12, 0
    %p74 = por %p72, %p73
    %p75 = scmp.ne.s32.totalorder %s67, %s69
    %p76 = scmp.eq.s32.totalorder %s17, 1
    %p77 = por %p75, %p76
    %p78 = scmp.ne.s32.totalorder %s69, %s70
    %p79 = scmp.eq.s32.totalorder %s17, 0
    %p80 = por %p78, %p79
    %p81 = scmp.ne.s32.totalorder %s69, %s70
    %p82 = scmp.eq.s32.totalorder %s18, 1
    %p83 = por %p81, %p82
    %p85 = scmp.ne.s32.totalorder %s70, %s84
    %p86 = scmp.eq.s32.totalorder %s18, 0
    %p87 = por %p85, %p86
    %s88 = ssub.s32 %s12, %s19
    %p89 = scmp.eq.s32.totalorder %s88, 0
    %s91 = sadd.s32 %s90, 1
    %s92 = scalar_select %p89, %s90, %s91
    %p95 = pneg %p89
    %p96 = scmp.eq.s32.totalorder %s12, 1
    %p97 = por %p95, %p96
    %p98 = scmp.ne.s32.totalorder %s90, %s93
    %p99 = scmp.eq.s32.totalorder %s12, 0
    %p100 = por %p98, %p99
    %p101 = scmp.ne.s32.totalorder %s90, %s93
    %p102 = scmp.eq.s32.totalorder %s17, 1
    %p103 = por %p101, %p102
    %p104 = scmp.ne.s32.totalorder %s93, %s94
    %p105 = scmp.eq.s32.totalorder %s17, 0
    %p106 = por %p104, %p105
    %p107 = scmp.ne.s32.totalorder %s93, %s94
    %p108 = scmp.eq.s32.totalorder %s18, 1
    %p109 = por %p107, %p108
    %p111 = scmp.ne.s32.totalorder %s94, %s110
    %p112 = scmp.eq.s32.totalorder %s18, 0
    %p113 = por %p111, %p112
    %s115 = sadd.s32 %s114, 1
    %p118 = scmp.eq.s32.totalorder %s12, 1
    %p119 = scmp.ne.s32.totalorder %s114, %s116
    %p120 = scmp.eq.s32.totalorder %s12, 0
    %p121 = por %p119, %p120
    %p122 = scmp.ne.s32.totalorder %s114, %s116
    %p123 = scmp.eq.s32.totalorder %s17, 1
    %p124 = por %p122, %p123
    %p125 = scmp.ne.s32.totalorder %s116, %s117
    %p126 = scmp.eq.s32.totalorder %s17, 0
    %p127 = por %p125, %p126
    %p128 = scmp.ne.s32.totalorder %s116, %s117
    %p129 = scmp.eq.s32.totalorder %s18, 1
    %p130 = por %p128, %p129
    %p132 = scmp.ne.s32.totalorder %s117, %s131
    %p133 = scmp.eq.s32.totalorder %s18, 0
    %p134 = por %p132, %p133
    %s136 = sadd.s32 %s135, 1
    %p139 = scmp.eq.s32.totalorder %s12, 1
    %p140 = scmp.ne.s32.totalorder %s135, %s137
    %p141 = scmp.eq.s32.totalorder %s12, 0
    %p142 = por %p140, %p141
    %p143 = scmp.ne.s32.totalorder %s135, %s137
    %p144 = scmp.eq.s32.totalorder %s17, 1
    %p145 = por %p143, %p144
    %p146 = scmp.ne.s32.totalorder %s137, %s138
    %p147 = scmp.eq.s32.totalorder %s17, 0
    %p148 = por %p146, %p147
    %p149 = scmp.ne.s32.totalorder %s137, %s138
    %p150 = scmp.eq.s32.totalorder %s18, 1
    %p151 = por %p149, %p150
    %p153 = scmp.ne.s32.totalorder %s138, %s152
    %p154 = scmp.eq.s32.totalorder %s18, 0
    %p155 = por %p153, %p154
    %s156 = ssub.s32 %s12, %s19
    %p157 = scmp.eq.s32.totalorder %s156, 0
    %s159 = sadd.s32 %s158, 1
    %s160 = scalar_select %p157, %s158, %s159
    %p163 = pneg %p157
    %p164 = scmp.eq.s32.totalorder %s12, 1
    %p165 = por %p163, %p164
    %p166 = scmp.ne.s32.totalorder %s158, %s161
    %p167 = scmp.eq.s32.totalorder %s12, 0
    %p168 = por %p166, %p167
    %p169 = scmp.ne.s32.totalorder %s158, %s161
    %p170 = scmp.eq.s32.totalorder %s17, 1
    %p171 = por %p169, %p170
    %p172 = scmp.ne.s32.totalorder %s161, %s162
    %p173 = scmp.eq.s32.totalorder %s17, 0
    %p174 = por %p172, %p173
    %p175 = scmp.ne.s32.totalorder %s161, %s162
    %p176 = scmp.eq.s32.totalorder %s18, 1
    %p177 = por %p175, %p176
    %p179 = scmp.ne.s32.totalorder %s162, %s178
    %p180 = scmp.eq.s32.totalorder %s18, 0
    %p181 = por %p179, %p180
    %p182 = scmp.le.s32.totalorder 1, %s12
    %p183 = scmp.lt.s32.totalorder %s12, 3
    %p184 = pnand %p182, %p183
    %p185 = pneg %p184
    // Predicated region
    $region9: #{basic_block_forward.7} parent=5 // pred_check
      _
    $region10: #{basic_block_forward.7} parent=5 // pred_check_branch
      %187 = sbr.rel (%p184) target = $region12
    $region11: #{basic_block_forward.7} parent=5 // pred_region
      %s188 = ssub.s32 %s12, 1
      // Predicated region
      $region13: #{basic_block_forward.7} parent=11 // pred_check
        %p189 = pneg %p59
      $region14: #{basic_block_forward.7} parent=11 // pred_check_branch
        %191 = sbr.rel (%p189) target = $region16
      $region15: #{basic_block_forward.7} parent=11 // pred_region
        _
      $region16: #{basic_block_forward.7} parent=11 // pred_fallthru
        _
      // Predicated region
      $region17: #{basic_block_forward.7} parent=11 // pred_check
        %p192 = pneg %p80
      $region18: #{basic_block_forward.7} parent=11 // pred_check_branch
        %194 = sbr.rel (%p192) target = $region20
      $region19: #{basic_block_forward.7} parent=11 // pred_region
        _
      $region20: #{basic_block_forward.7} parent=11 // pred_fallthru
        _
      // Predicated region
      $region21: #{basic_block_forward.7} parent=11 // pred_check
        %p195 = pneg %p127
      $region22: #{basic_block_forward.7} parent=11 // pred_check_branch
        %197 = sbr.rel (%p195) target = $region24
      $region23: #{basic_block_forward.7} parent=11 // pred_region
        _
      $region24: #{basic_block_forward.7} parent=11 // pred_fallthru
        _
      // Predicated region
      $region25: #{basic_block_forward.7} parent=11 // pred_check
        %p198 = pneg %p148
      $region26: #{basic_block_forward.7} parent=11 // pred_check_branch
        %200 = sbr.rel (%p198) target = $region28
      $region27: #{basic_block_forward.7} parent=11 // pred_region
        _
      $region28: #{basic_block_forward.7} parent=11 // pred_fallthru
        _
    $region12: #{basic_block_forward.7} parent=5 // pred_fallthru
      _
    %p201 = scmp.lt.s32.totalorder %s12, 2
    // Predicated region
    $region29: #{basic_block_forward.7} parent=5 // pred_check
      %p202 = pneg %p201
    $region30: #{basic_block_forward.7} parent=5 // pred_check_branch
      %204 = sbr.rel (%p202) target = $region32
    $region31: #{basic_block_forward.7} parent=5 // pred_region
      // Predicated region
      $region33: #{basic_block_forward.7} parent=31 // pred_check
        %p205 = pneg %p32
      $region34: #{basic_block_forward.7} parent=31 // pred_check_branch
        %207 = sbr.rel (%p205) target = $region36
      $region35: #{basic_block_forward.7} parent=31 // pred_region
        %s208 = smul.u32 8, %s12
        %p209 = scmp.lt.s32.totalorder %s208, 15
        %s210 = scalar_select %p209, %s208, 15
        %s211 = smul.addr %s210, 4
        %s212 = scalar_lea.vmem %s0, %s211
        %s213 = smul.u32 8, %s12
      $region36: #{basic_block_forward.7} parent=31 // pred_fallthru
        _
      // Predicated region
      $region37: #{basic_block_forward.7} parent=31 // pred_check
        %p214 = pneg %p100
      $region38: #{basic_block_forward.7} parent=31 // pred_check_branch
        %216 = sbr.rel (%p214) target = $region40
      $region39: #{basic_block_forward.7} parent=31 // pred_region
        %s217 = smul.u32 8, %s12
        %p218 = scmp.lt.s32.totalorder %s217, 15
        %s219 = scalar_select %p218, %s217, 15
        %s220 = smul.addr %s219, 4
        %s221 = scalar_lea.vmem %s3, %s220
        %s222 = smul.u32 8, %s12
      $region40: #{basic_block_forward.7} parent=31 // pred_fallthru
        _
    $region32: #{basic_block_forward.7} parent=5 // pred_fallthru
      _
    %p223 = scmp.le.s32.totalorder 1, %s12
    %p224 = scmp.lt.s32.totalorder %s12, 3
    %p225 = pnand %p223, %p224
    %p226 = pneg %p225
    // Predicated region
    $region41: #{basic_block_forward.7} parent=5 // pred_check
      _
    $region42: #{basic_block_forward.7} parent=5 // pred_check_branch
      %228 = sbr.rel (%p225) target = $region44
    $region43: #{basic_block_forward.7} parent=5 // pred_region
      %s229 = ssub.s32 %s12, 1
      %s230 = smul.u32 8, %s17
      %p231 = scmp.lt.s32.totalorder %s230, 15
      %s232 = scalar_select %p231, %s230, 15
      %s233 = smul.addr %s232, 4
      %s234 = scalar_lea.vmem %s0, %s233
      %p235 = pneg %p38
      %p236 = pneg %p35
      %p237 = pneg %p59
      %p238 = pneg %p56
      %p239 = pneg %p80
      %p240 = pneg %p77
      %s241 = smul.u32 8, %s17
      %p242 = scmp.lt.s32.totalorder %s241, 15
      %s243 = scalar_select %p242, %s241, 15
      %s244 = smul.addr %s243, 4
      %s245 = scalar_lea.vmem %s3, %s244
      %p246 = pneg %p106
      %p247 = pneg %p103
      %p248 = pneg %p127
      %p249 = pneg %p124
      %p250 = pneg %p148
      %p251 = pneg %p145
      %p252 = pneg %p174
      %p253 = pneg %p171
      %s254 = smul.u32 8, %s17
      %p255 = scmp.lt.s32.totalorder %s254, 15
      %s256 = scalar_select %p255, %s254, 15
      %s257 = smul.addr %s256, 8
      %s258 = scalar_lea.vmem %s6, %s257
      %s259 = smul.u32 8, %s17
      %p260 = scmp.lt.s32.totalorder %s259, 15
      %s261 = scalar_select %p260, %s259, 15
      %s262 = smul.addr %s261, 4
      %s263 = scalar_lea.vmem %s0, %s262
      %s264 = smul.u32 8, %s17
      %s265 = smul.u32 8, %s17
      %p266 = scmp.lt.s32.totalorder %s265, 15
      %s267 = scalar_select %p266, %s265, 15
      %s268 = smul.addr %s267, 4
      %s269 = scalar_lea.vmem %s3, %s268
      %s270 = smul.u32 8, %s17
      %s271 = smul.u32 8, %s17
      %p272 = scmp.lt.s32.totalorder %s271, 15
      %s273 = scalar_select %p272, %s271, 15
      %s274 = smul.addr %s273, 8
      %s275 = scalar_lea.vmem %s6, %s274
      %s276 = smul.u32 8, %s17
      %v277 = vld [vmem:[%s263] sm:$0xf]
      %v278 = vld [vmem:[%s263 + $0x4] sm:$0xf]
      %v279 = vld [vmem:[%s263 + $0x8] sm:$0xf]
      %v280 = vld [vmem:[%s263 + $0xc] sm:$0xf]
      %v281 = vld [vmem:[%s263 + $0x10] sm:$0xf]
      %v282 = vld [vmem:[%s263 + $0x14] sm:$0xf]
      %v283 = vld [vmem:[%s263 + $0x18] sm:$0xf]
      %v284 = vld [vmem:[%s263 + $0x1c] sm:$0xf]
      %v285 = vunpack.c.l.bf16 %v277
      %v286 = vunpack.c.l.bf16 %v278
      %v287 = vunpack.c.l.bf16 %v279
      %v288 = vunpack.c.l.bf16 %v280
      %v289 = vunpack.c.l.bf16 %v281
      %v290 = vunpack.c.l.bf16 %v282
      %v291 = vunpack.c.l.bf16 %v283
      %v292 = vunpack.c.l.bf16 %v284
      %v293 = vld [vmem:[%s1] sm:$0x1]
      %v295 = vlaneseq
      %v296 = vshrl.u32 %v295, 7
      %v297 = vsub.s32 0, %v296
      %v298 = vrot.slane %v293, %v297
      %v300 = vmul.f32 %v285, %v298
      %v301 = vmul.f32 %v286, %v298
      %v302 = vmul.f32 %v287, %v298
      %v303 = vmul.f32 %v288, %v298
      %v304 = vmul.f32 %v289, %v298
      %v305 = vmul.f32 %v290, %v298
      %v306 = vmul.f32 %v291, %v298
      %v307 = vmul.f32 %v292, %v298
      %v308 = vld [vmem:[%s2] sm:$0x1]
      %v310 = vlaneseq
      %v311 = vshrl.u32 %v310, 7
      %v312 = vsub.s32 0, %v311
      %v313 = vrot.slane %v308, %v312
      %v315 = vadd.f32 %v300, %v313
      %v316 = vadd.f32 %v301, %v313
      %v317 = vadd.f32 %v302, %v313
      %v318 = vadd.f32 %v303, %v313
      %v319 = vadd.f32 %v304, %v313
      %v320 = vadd.f32 %v305, %v313
      %v321 = vadd.f32 %v306, %v313
      %v322 = vadd.f32 %v307, %v313
      %v323 = vld [vmem:[%s269] sm:$0xf]
      %v324 = vld [vmem:[%s269 + $0x4] sm:$0xf]
      %v325 = vld [vmem:[%s269 + $0x8] sm:$0xf]
      %v326 = vld [vmem:[%s269 + $0xc] sm:$0xf]
      %v327 = vld [vmem:[%s269 + $0x10] sm:$0xf]
      %v328 = vld [vmem:[%s269 + $0x14] sm:$0xf]
      %v329 = vld [vmem:[%s269 + $0x18] sm:$0xf]
      %v330 = vld [vmem:[%s269 + $0x1c] sm:$0xf]
      %v331 = vunpack.c.l.bf16 %v323
      %v332 = vunpack.c.l.bf16 %v324
      %v333 = vunpack.c.l.bf16 %v325
      %v334 = vunpack.c.l.bf16 %v326
      %v335 = vunpack.c.l.bf16 %v327
      %v336 = vunpack.c.l.bf16 %v328
      %v337 = vunpack.c.l.bf16 %v329
      %v338 = vunpack.c.l.bf16 %v330
      %v339 = vld [vmem:[%s4] sm:$0x1]
      %v341 = vlaneseq
      %v342 = vshrl.u32 %v341, 7
      %v343 = vsub.s32 0, %v342
      %v344 = vrot.slane %v339, %v343
      %v346 = vmul.f32 %v331, %v344
      %v347 = vmul.f32 %v332, %v344
      %v348 = vmul.f32 %v333, %v344
      %v349 = vmul.f32 %v334, %v344
      %v350 = vmul.f32 %v335, %v344
      %v351 = vmul.f32 %v336, %v344
      %v352 = vmul.f32 %v337, %v344
      %v353 = vmul.f32 %v338, %v344
      %v354 = vld [vmem:[%s5] sm:$0x1]
      %v356 = vlaneseq
      %v357 = vshrl.u32 %v356, 7
      %v358 = vsub.s32 0, %v357
      %v359 = vrot.slane %v354, %v358
      %v361 = vadd.f32 %v346, %v359
      %v362 = vadd.f32 %v347, %v359
      %v363 = vadd.f32 %v348, %v359
      %v364 = vadd.f32 %v349, %v359
      %v365 = vadd.f32 %v350, %v359
      %v366 = vadd.f32 %v351, %v359
      %v367 = vadd.f32 %v352, %v359
      %v368 = vadd.f32 %v353, %v359
      %v369 = vadd.f32 %v315, %v361
      %v370 = vadd.f32 %v316, %v362
      %v371 = vadd.f32 %v317, %v363
      %v372 = vadd.f32 %v318, %v364
      %v373 = vadd.f32 %v319, %v365
      %v374 = vadd.f32 %v320, %v366
      %v375 = vadd.f32 %v321, %v367
      %v376 = vadd.f32 %v322, %v368
      %v377 = vmax.f32 %v369, 0.0
      %v378 = vmax.f32 %v370, 0.0
      %v379 = vmax.f32 %v371, 0.0
      %v380 = vmax.f32 %v372, 0.0
      %v381 = vmax.f32 %v373, 0.0
      %v382 = vmax.f32 %v374, 0.0
      %v383 = vmax.f32 %v375, 0.0
      %v384 = vmax.f32 %v376, 0.0
      %385 = vst [vmem:[%s275] sm:$0xff] %v377
      %386 = vst [vmem:[%s275 + $0x8] sm:$0xff] %v378
      %387 = vst [vmem:[%s275 + $0x10] sm:$0xff] %v379
      %388 = vst [vmem:[%s275 + $0x18] sm:$0xff] %v380
      %389 = vst [vmem:[%s275 + $0x20] sm:$0xff] %v381
      %390 = vst [vmem:[%s275 + $0x28] sm:$0xff] %v382
      %391 = vst [vmem:[%s275 + $0x30] sm:$0xff] %v383
      %392 = vst [vmem:[%s275 + $0x38] sm:$0xff] %v384
      %s393 = smul.u32 8, %s17
      %p394 = scmp.lt.s32.totalorder %s393, 15
      %s395 = scalar_select %p394, %s393, 15
      %s396 = smul.addr %s395, 8
      %s397 = scalar_lea.vmem %s6, %s396
      // Predicated region
      $region45: #{basic_block_forward.7} parent=43 // pred_check
        %p398 = pneg %p171
      $region46: #{basic_block_forward.7} parent=43 // pred_check_branch
        %400 = sbr.rel (%p398) target = $region48
      $region47: #{basic_block_forward.7} parent=43 // pred_region
        %s401 = smul.u32 8, %s17
      $region48: #{basic_block_forward.7} parent=43 // pred_fallthru
        _
    $region44: #{basic_block_forward.7} parent=5 // pred_fallthru
      _
    %p402 = scmp.le.s32.totalorder 2, %s12
    // Predicated region
    $region49: #{basic_block_forward.7} parent=5 // pred_check
      %p403 = pneg %p402
    $region50: #{basic_block_forward.7} parent=5 // pred_check_branch
      %405 = sbr.rel (%p403) target = $region52
    $region51: #{basic_block_forward.7} parent=5 // pred_region
      %s406 = ssub.s32 %s12, 2
      // Predicated region
      $region53: #{basic_block_forward.7} parent=51 // pred_check
        %p407 = pneg %p177
      $region54: #{basic_block_forward.7} parent=51 // pred_check_branch
        %409 = sbr.rel (%p407) target = $region56
      $region55: #{basic_block_forward.7} parent=51 // pred_region
        %s410 = smul.u32 8, %s18
        %p411 = scmp.lt.s32.totalorder %s410, 15
        %s412 = scalar_select %p411, %s410, 15
        %s413 = smul.addr %s412, 8
        %s414 = scalar_lea.vmem %s6, %s413
      $region56: #{basic_block_forward.7} parent=51 // pred_fallthru
        _
    $region52: #{basic_block_forward.7} parent=5 // pred_fallthru
      _
  $region6: #{basic_block_forward.7} parent=0 // loop_footer
    %s16 = sadd.s32 1, %s12
  $region7: #{basic_block_forward.7} parent=0 // loop_footer_branch
    %11 = sbr.rel target = $region3
  $region8: #{basic_block_forward.7} parent=0 // loop_exit
    _

// kernel: basic_block_forward.6
$region0: #{basic_block_forward.6}
  #allocation0 [shape = 'u32[]', space=smem, size = 0x4, offset = 0x4, fixed_abs, tag = 'smem constant byte address 0x4 - core index']
  #allocation1 [shape = 'u32[144,128]{1,0:T(1,128)}', space=vmem, size = 0x12000, scoped, tag = 'internal scratch']
  %s0 = inlined_call_operand.vmem [shape: bf16[128,128], index: 0, kind: input, shape index: {}]
  %s1 = inlined_call_operand.vmem [shape: bf16[128,128], index: 1, kind: input, shape index: {}]
  %s2 = inlined_call_operand.vmem [shape: bf16[128,128], index: 2, kind: input, shape index: {}]
  %s3 = inlined_call_operand.vmem [shape: bf16[128,128], index: 3, kind: input, shape index: {}]
  %s4 = inlined_call_operand.vmem [shape: bf16[128,128], index: 4, kind: output, shape index: {0}]
  %s5 = inlined_call_operand.vmem [shape: bf16[128,128], index: 5, kind: output, shape index: {1}]
  %s6 = inlined_call_operand.vmem [shape: f32[16,128], index: 6, kind: output, shape index: {2}]
  %s7 = inlined_call_operand.vmem [shape: f32[16,128], index: 7, kind: output, shape index: {3}]
  %s8 = inlined_call_operand.vmem [shape: f32[16,128], index: 8, kind: output, shape index: {4}]
  %s9 = inlined_call_operand.vmem [shape: f32[16,128], index: 9, kind: output, shape index: {5}]
  %s10 = inlined_call_operand.vmem [shape: f32[16,128], index: 10, kind: output, shape index: {6}]
  %11 = xla_tuple %s4, %s5, %s6, %s7, %s8, %s9, %s10
  %s12 = sld [smem:[#allocation0]]
  $region101: #{basic_block_forward.6} parent=0
    _
  %s14 = ssub.s32 1, %s12
  %s15 = scalar_select 0, %s14, %s12
  loop: start=0, step=1, limit=4
  $region2: #{basic_block_forward.6} parent=0 // loop_pre_header
    _
  $region3: #{basic_block_forward.6} parent=0 // loop_header
    %s17 = sphi 0, %s21
    %p18 = scmp.ge.s32.totalorder %s17, 4
    %s24 = sphi 0, %s36
    %s25 = sphi 0, %s32
    %s26 = sphi 0, %s24
    %s27 = sphi 0, %s25
    %s28 = sphi 0, %s26
    %s29 = sphi 0, %s27
    %s41 = sphi 0, %s43
    %s44 = sphi 0, %s41
    %s45 = sphi 0, %s44
    %s61 = sphi 0, %s45
    %s65 = sphi 0, %s65
    %s67 = sphi 0, %s65
    %s68 = sphi 0, %s67
    %s82 = sphi 0, %s68
    %s90 = sphi 0, %s92
    %s93 = sphi 0, %s90
    %s94 = sphi 0, %s93
    %s110 = sphi 0, %s94
    %s114 = sphi 0, %s114
    %s116 = sphi 0, %s114
    %s117 = sphi 0, %s116
    %s131 = sphi 0, %s117
    %s139 = sphi 0, %s141
    %s142 = sphi 0, %s139
    %s143 = sphi 0, %s142
    %s159 = sphi 0, %s143
    %s167 = sphi 0, %s169
    %s170 = sphi 0, %s167
    %s171 = sphi 0, %s170
    %s187 = sphi 0, %s171
    %s193 = sphi 0, %s195
    %s196 = sphi 0, %s193
    %s197 = sphi 0, %s196
    %s213 = sphi 0, %s197
    %s219 = sphi 0, %s221
    %s222 = sphi 0, %s219
    %s223 = sphi 0, %s222
    %s239 = sphi 0, %s223
    %s245 = sphi 0, %s247
    %s248 = sphi 0, %s245
    %s249 = sphi 0, %s248
    %s265 = sphi 0, %s249
    %s271 = sphi 0, %s273
    %s274 = sphi 0, %s271
    %s275 = sphi 0, %s274
    %s291 = sphi 0, %s275
    %s297 = sphi 0, %s299
    %s300 = sphi 0, %s297
    %s301 = sphi 0, %s300
    %s317 = sphi 0, %s301
  $region4: #{basic_block_forward.6} parent=0 // loop_header_branch
    %20 = sbr.rel (%p18) target = $region8
  $region5: #{basic_block_forward.6} parent=0 // loop_body
    %s22 = ssub.s32 %s17, 1
    %s23 = ssub.s32 %s17, 2
    %s30 = sadd.s32 1, %s25
    %p31 = scmp.ge.s32.totalorder %s30, 1
    %s32 = scalar_select %p31, 0, %s30
    %s33 = sadd.s32 1, %s24
    %s34 = scalar_select %p31, %s33, %s24
    %p35 = scmp.ge.s32.totalorder %s34, 2
    %s36 = scalar_select %p35, 0, %s34
    %s37 = sadd.s32 %s24, %s25
    %s38 = sadd.s32 %s36, %s32
    %s39 = ssub.s32 %s37, %s38
    %p40 = scmp.eq.s32.totalorder %s39, 0
    %s42 = sadd.s32 %s41, 1
    %s43 = scalar_select %p40, %s41, %s42
    %p46 = pneg %p40
    %p47 = scmp.eq.s32.totalorder %s17, 1
    %p48 = por %p46, %p47
    %p49 = scmp.ne.s32.totalorder %s41, %s44
    %p50 = scmp.eq.s32.totalorder %s17, 0
    %p51 = por %p49, %p50
    %p52 = scmp.ne.s32.totalorder %s41, %s44
    %p53 = scmp.eq.s32.totalorder %s22, 1
    %p54 = por %p52, %p53
    %p55 = scmp.ne.s32.totalorder %s44, %s45
    %p56 = scmp.eq.s32.totalorder %s22, 0
    %p57 = por %p55, %p56
    %p58 = scmp.ne.s32.totalorder %s44, %s45
    %p59 = scmp.eq.s32.totalorder %s23, 1
    %p60 = por %p58, %p59
    %p62 = scmp.ne.s32.totalorder %s45, %s61
    %p63 = scmp.eq.s32.totalorder %s23, 0
    %p64 = por %p62, %p63
    %s66 = sadd.s32 %s65, 1
    %p69 = scmp.eq.s32.totalorder %s17, 1
    %p70 = scmp.ne.s32.totalorder %s65, %s67
    %p71 = scmp.eq.s32.totalorder %s17, 0
    %p72 = por %p70, %p71
    %p73 = scmp.ne.s32.totalorder %s65, %s67
    %p74 = scmp.eq.s32.totalorder %s22, 1
    %p75 = por %p73, %p74
    %p76 = scmp.ne.s32.totalorder %s67, %s68
    %p77 = scmp.eq.s32.totalorder %s22, 0
    %p78 = por %p76, %p77
    %p79 = scmp.ne.s32.totalorder %s67, %s68
    %p80 = scmp.eq.s32.totalorder %s23, 1
    %p81 = por %p79, %p80
    %p83 = scmp.ne.s32.totalorder %s68, %s82
    %p84 = scmp.eq.s32.totalorder %s23, 0
    %p85 = por %p83, %p84
    %s86 = sadd.s32 %s24, %s25
    %s87 = sadd.s32 %s36, %s32
    %s88 = ssub.s32 %s86, %s87
    %p89 = scmp.eq.s32.totalorder %s88, 0
    %s91 = sadd.s32 %s90, 1
    %s92 = scalar_select %p89, %s90, %s91
    %p95 = pneg %p89
    %p96 = scmp.eq.s32.totalorder %s17, 1
    %p97 = por %p95, %p96
    %p98 = scmp.ne.s32.totalorder %s90, %s93
    %p99 = scmp.eq.s32.totalorder %s17, 0
    %p100 = por %p98, %p99
    %p101 = scmp.ne.s32.totalorder %s90, %s93
    %p102 = scmp.eq.s32.totalorder %s22, 1
    %p103 = por %p101, %p102
    %p104 = scmp.ne.s32.totalorder %s93, %s94
    %p105 = scmp.eq.s32.totalorder %s22, 0
    %p106 = por %p104, %p105
    %p107 = scmp.ne.s32.totalorder %s93, %s94
    %p108 = scmp.eq.s32.totalorder %s23, 1
    %p109 = por %p107, %p108
    %p111 = scmp.ne.s32.totalorder %s94, %s110
    %p112 = scmp.eq.s32.totalorder %s23, 0
    %p113 = por %p111, %p112
    %s115 = sadd.s32 %s114, 1
    %p118 = scmp.eq.s32.totalorder %s17, 1
    %p119 = scmp.ne.s32.totalorder %s114, %s116
    %p120 = scmp.eq.s32.totalorder %s17, 0
    %p121 = por %p119, %p120
    %p122 = scmp.ne.s32.totalorder %s114, %s116
    %p123 = scmp.eq.s32.totalorder %s22, 1
    %p124 = por %p122, %p123
    %p125 = scmp.ne.s32.totalorder %s116, %s117
    %p126 = scmp.eq.s32.totalorder %s22, 0
    %p127 = por %p125, %p126
    %p128 = scmp.ne.s32.totalorder %s116, %s117
    %p129 = scmp.eq.s32.totalorder %s23, 1
    %p130 = por %p128, %p129
    %p132 = scmp.ne.s32.totalorder %s117, %s131
    %p133 = scmp.eq.s32.totalorder %s23, 0
    %p134 = por %p132, %p133
    %s135 = sadd.s32 %s24, %s25
    %s136 = sadd.s32 %s36, %s32
    %s137 = ssub.s32 %s135, %s136
    %p138 = scmp.eq.s32.totalorder %s137, 0
    %s140 = sadd.s32 %s139, 1
    %s141 = scalar_select %p138, %s139, %s140
    %p144 = pneg %p138
    %p145 = scmp.eq.s32.totalorder %s17, 1
    %p146 = por %p144, %p145
    %p147 = scmp.ne.s32.totalorder %s139, %s142
    %p148 = scmp.eq.s32.totalorder %s17, 0
    %p149 = por %p147, %p148
    %p150 = scmp.ne.s32.totalorder %s139, %s142
    %p151 = scmp.eq.s32.totalorder %s22, 1
    %p152 = por %p150, %p151
    %p153 = scmp.ne.s32.totalorder %s142, %s143
    %p154 = scmp.eq.s32.totalorder %s22, 0
    %p155 = por %p153, %p154
    %p156 = scmp.ne.s32.totalorder %s142, %s143
    %p157 = scmp.eq.s32.totalorder %s23, 1
    %p158 = por %p156, %p157
    %p160 = scmp.ne.s32.totalorder %s143, %s159
    %p161 = scmp.eq.s32.totalorder %s23, 0
    %p162 = por %p160, %p161
    %s163 = sadd.s32 %s24, %s25
    %s164 = sadd.s32 %s36, %s32
    %s165 = ssub.s32 %s163, %s164
    %p166 = scmp.eq.s32.totalorder %s165, 0
    %s168 = sadd.s32 %s167, 1
    %s169 = scalar_select %p166, %s167, %s168
    %p172 = pneg %p166
    %p173 = scmp.eq.s32.totalorder %s17, 1
    %p174 = por %p172, %p173
    %p175 = scmp.ne.s32.totalorder %s167, %s170
    %p176 = scmp.eq.s32.totalorder %s17, 0
    %p177 = por %p175, %p176
    %p178 = scmp.ne.s32.totalorder %s167, %s170
    %p179 = scmp.eq.s32.totalorder %s22, 1
    %p180 = por %p178, %p179
    %p181 = scmp.ne.s32.totalorder %s170, %s171
    %p182 = scmp.eq.s32.totalorder %s22, 0
    %p183 = por %p181, %p182
    %p184 = scmp.ne.s32.totalorder %s170, %s171
    %p185 = scmp.eq.s32.totalorder %s23, 1
    %p186 = por %p184, %p185
    %p188 = scmp.ne.s32.totalorder %s171, %s187
    %p189 = scmp.eq.s32.totalorder %s23, 0
    %p190 = por %p188, %p189
    %s191 = ssub.s32 %s24, %s36
    %p192 = scmp.eq.s32.totalorder %s191, 0
    %s194 = sadd.s32 %s193, 1
    %s195 = scalar_select %p192, %s193, %s194
    %p198 = pneg %p192
    %p199 = scmp.eq.s32.totalorder %s17, 1
    %p200 = por %p198, %p199
    %p201 = scmp.ne.s32.totalorder %s193, %s196
    %p202 = scmp.eq.s32.totalorder %s17, 0
    %p203 = por %p201, %p202
    %p204 = scmp.ne.s32.totalorder %s193, %s196
    %p205 = scmp.eq.s32.totalorder %s22, 1
    %p206 = por %p204, %p205
    %p207 = scmp.ne.s32.totalorder %s196, %s197
    %p208 = scmp.eq.s32.totalorder %s22, 0
    %p209 = por %p207, %p208
    %p210 = scmp.ne.s32.totalorder %s196, %s197
    %p211 = scmp.eq.s32.totalorder %s23, 1
    %p212 = por %p210, %p211
    %p214 = scmp.ne.s32.totalorder %s197, %s213
    %p215 = scmp.eq.s32.totalorder %s23, 0
    %p216 = por %p214, %p215
    %s217 = ssub.s32 %s24, %s36
    %p218 = scmp.eq.s32.totalorder %s217, 0
    %s220 = sadd.s32 %s219, 1
    %s221 = scalar_select %p218, %s219, %s220
    %p224 = pneg %p218
    %p225 = scmp.eq.s32.totalorder %s17, 1
    %p226 = por %p224, %p225
    %p227 = scmp.ne.s32.totalorder %s219, %s222
    %p228 = scmp.eq.s32.totalorder %s17, 0
    %p229 = por %p227, %p228
    %p230 = scmp.ne.s32.totalorder %s219, %s222
    %p231 = scmp.eq.s32.totalorder %s22, 1
    %p232 = por %p230, %p231
    %p233 = scmp.ne.s32.totalorder %s222, %s223
    %p234 = scmp.eq.s32.totalorder %s22, 0
    %p235 = por %p233, %p234
    %p236 = scmp.ne.s32.totalorder %s222, %s223
    %p237 = scmp.eq.s32.totalorder %s23, 1
    %p238 = por %p236, %p237
    %p240 = scmp.ne.s32.totalorder %s223, %s239
    %p241 = scmp.eq.s32.totalorder %s23, 0
    %p242 = por %p240, %p241
    %s243 = ssub.s32 %s24, %s36
    %p244 = scmp.eq.s32.totalorder %s243, 0
    %s246 = sadd.s32 %s245, 1
    %s247 = scalar_select %p244, %s245, %s246
    %p250 = pneg %p244
    %p251 = scmp.eq.s32.totalorder %s17, 1
    %p252 = por %p250, %p251
    %p253 = scmp.ne.s32.totalorder %s245, %s248
    %p254 = scmp.eq.s32.totalorder %s17, 0
    %p255 = por %p253, %p254
    %p256 = scmp.ne.s32.totalorder %s245, %s248
    %p257 = scmp.eq.s32.totalorder %s22, 1
    %p258 = por %p256, %p257
    %p259 = scmp.ne.s32.totalorder %s248, %s249
    %p260 = scmp.eq.s32.totalorder %s22, 0
    %p261 = por %p259, %p260
    %p262 = scmp.ne.s32.totalorder %s248, %s249
    %p263 = scmp.eq.s32.totalorder %s23, 1
    %p264 = por %p262, %p263
    %p266 = scmp.ne.s32.totalorder %s249, %s265
    %p267 = scmp.eq.s32.totalorder %s23, 0
    %p268 = por %p266, %p267
    %s269 = ssub.s32 %s24, %s36
    %p270 = scmp.eq.s32.totalorder %s269, 0
    %s272 = sadd.s32 %s271, 1
    %s273 = scalar_select %p270, %s271, %s272
    %p276 = pneg %p270
    %p277 = scmp.eq.s32.totalorder %s17, 1
    %p278 = por %p276, %p277
    %p279 = scmp.ne.s32.totalorder %s271, %s274
    %p280 = scmp.eq.s32.totalorder %s17, 0
    %p281 = por %p279, %p280
    %p282 = scmp.ne.s32.totalorder %s271, %s274
    %p283 = scmp.eq.s32.totalorder %s22, 1
    %p284 = por %p282, %p283
    %p285 = scmp.ne.s32.totalorder %s274, %s275
    %p286 = scmp.eq.s32.totalorder %s22, 0
    %p287 = por %p285, %p286
    %p288 = scmp.ne.s32.totalorder %s274, %s275
    %p289 = scmp.eq.s32.totalorder %s23, 1
    %p290 = por %p288, %p289
    %p292 = scmp.ne.s32.totalorder %s275, %s291
    %p293 = scmp.eq.s32.totalorder %s23, 0
    %p294 = por %p292, %p293
    %s295 = ssub.s32 %s24, %s36
    %p296 = scmp.eq.s32.totalorder %s295, 0
    %s298 = sadd.s32 %s297, 1
    %s299 = scalar_select %p296, %s297, %s298
    %p302 = pneg %p296
    %p303 = scmp.eq.s32.totalorder %s17, 1
    %p304 = por %p302, %p303
    %p305 = scmp.ne.s32.totalorder %s297, %s300
    %p306 = scmp.eq.s32.totalorder %s17, 0
    %p307 = por %p305, %p306
    %p308 = scmp.ne.s32.totalorder %s297, %s300
    %p309 = scmp.eq.s32.totalorder %s22, 1
    %p310 = por %p308, %p309
    %p311 = scmp.ne.s32.totalorder %s300, %s301
    %p312 = scmp.eq.s32.totalorder %s22, 0
    %p313 = por %p311, %p312
    %p314 = scmp.ne.s32.totalorder %s300, %s301
    %p315 = scmp.eq.s32.totalorder %s23, 1
    %p316 = por %p314, %p315
    %p318 = scmp.ne.s32.totalorder %s301, %s317
    %p319 = scmp.eq.s32.totalorder %s23, 0
    %p320 = por %p318, %p319
    %p321 = scmp.le.s32.totalorder 1, %s17
    %p322 = scmp.lt.s32.totalorder %s17, 3
    %p323 = pnand %p321, %p322
    %p324 = pneg %p323
    // Predicated region
    $region9: #{basic_block_forward.6} parent=5 // pred_check
      _
    $region10: #{basic_block_forward.6} parent=5 // pred_check_branch
      %326 = sbr.rel (%p323) target = $region12
    $region11: #{basic_block_forward.6} parent=5 // pred_region
      %s327 = ssub.s32 %s17, 1
      // Predicated region
      $region13: #{basic_block_forward.6} parent=11 // pred_check
        %p328 = pneg %p78
      $region14: #{basic_block_forward.6} parent=11 // pred_check_branch
        %330 = sbr.rel (%p328) target = $region16
      $region15: #{basic_block_forward.6} parent=11 // pred_region
        _
      $region16: #{basic_block_forward.6} parent=11 // pred_fallthru
        _
      // Predicated region
      $region17: #{basic_block_forward.6} parent=11 // pred_check
        %p331 = pneg %p127
      $region18: #{basic_block_forward.6} parent=11 // pred_check_branch
        %333 = sbr.rel (%p331) target = $region20
      $region19: #{basic_block_forward.6} parent=11 // pred_region
        _
      $region20: #{basic_block_forward.6} parent=11 // pred_fallthru
        _
    $region12: #{basic_block_forward.6} parent=5 // pred_fallthru
      _
    %p334 = scmp.lt.s32.totalorder %s17, 2
    // Predicated region
    $region21: #{basic_block_forward.6} parent=5 // pred_check
      %p335 = pneg %p334
    $region22: #{basic_block_forward.6} parent=5 // pred_check_branch
      %337 = sbr.rel (%p335) target = $region24
    $region23: #{basic_block_forward.6} parent=5 // pred_region
      // Predicated region
      $region25: #{basic_block_forward.6} parent=23 // pred_check
        %p338 = pneg %p51
      $region26: #{basic_block_forward.6} parent=23 // pred_check_branch
        %340 = sbr.rel (%p338) target = $region28
      $region27: #{basic_block_forward.6} parent=23 // pred_region
        %s341 = sadd.s32 %s24, %s25
        %s342 = smul.u32 8, %s341
        %p343 = scmp.lt.s32.totalorder %s342, 15
        %s344 = scalar_select %p343, %s342, 15
        %s345 = smul.addr %s344, 4
        %s346 = scalar_lea.vmem %s0, %s345
        %s347 = sadd.s32 %s24, %s25
        %s348 = smul.u32 8, %s347
      $region28: #{basic_block_forward.6} parent=23 // pred_fallthru
        _
      // Predicated region
      $region29: #{basic_block_forward.6} parent=23 // pred_check
        %p349 = pneg %p100
      $region30: #{basic_block_forward.6} parent=23 // pred_check_branch
        %351 = sbr.rel (%p349) target = $region32
      $region31: #{basic_block_forward.6} parent=23 // pred_region
        %s352 = sadd.s32 %s24, %s25
        %s353 = smul.u32 8, %s352
        %p354 = scmp.lt.s32.totalorder %s353, 15
        %s355 = scalar_select %p354, %s353, 15
        %s356 = smul.addr %s355, 4
        %s357 = scalar_lea.vmem %s2, %s356
        %s358 = sadd.s32 %s24, %s25
        %s359 = smul.u32 8, %s358
      $region32: #{basic_block_forward.6} parent=23 // pred_fallthru
        _
    $region24: #{basic_block_forward.6} parent=5 // pred_fallthru
      _
    %p360 = scmp.le.s32.totalorder 1, %s17
    %p361 = scmp.lt.s32.totalorder %s17, 3
    %p362 = pnand %p360, %p361
    %p363 = pneg %p362
    // Predicated region
    $region33: #{basic_block_forward.6} parent=5 // pred_check
      _
    $region34: #{basic_block_forward.6} parent=5 // pred_check_branch
      %365 = sbr.rel (%p362) target = $region36
    $region35: #{basic_block_forward.6} parent=5 // pred_region
      %s366 = ssub.s32 %s17, 1
      %s367 = sadd.s32 %s26, %s27
      %s368 = smul.u32 8, %s367
      %p369 = scmp.lt.s32.totalorder %s368, 15
      %s370 = scalar_select %p369, %s368, 15
      %s371 = smul.addr %s370, 4
      %s372 = scalar_lea.vmem %s0, %s371
      %p373 = pneg %p57
      %p374 = pneg %p54
      %p375 = pneg %p78
      %p376 = pneg %p75
      %s377 = sadd.s32 %s26, %s27
      %s378 = smul.u32 8, %s377
      %p379 = scmp.lt.s32.totalorder %s378, 15
      %s380 = scalar_select %p379, %s378, 15
      %s381 = smul.addr %s380, 4
      %s382 = scalar_lea.vmem %s2, %s381
      %p383 = pneg %p106
      %p384 = pneg %p103
      %p385 = pneg %p127
      %p386 = pneg %p124
      %p387 = pneg %p155
      %p388 = pneg %p152
      %s389 = sadd.s32 %s26, %s27
      %s390 = smul.u32 8, %s389
      %p391 = scmp.lt.s32.totalorder %s390, 15
      %s392 = scalar_select %p391, %s390, 15
      %s393 = smul.addr %s392, 4
      %s394 = scalar_lea.vmem %s4, %s393
      %p395 = pneg %p183
      %p396 = pneg %p180
      %s397 = sadd.s32 %s26, %s27
      %s398 = smul.u32 8, %s397
      %p399 = scmp.lt.s32.totalorder %s398, 15
      %s400 = scalar_select %p399, %s398, 15
      %s401 = smul.addr %s400, 4
      %s402 = scalar_lea.vmem %s5, %s401
      %p403 = pneg %p209
      %p404 = pneg %p206
      %p405 = scmp.lt.s32.totalorder %s26, 1
      %s406 = scalar_select %p405, %s26, 1
      %s407 = smul.addr %s406, 8
      %s408 = scalar_lea.vmem %s6, %s407
      %p409 = pneg %p235
      %p410 = pneg %p232
      %p411 = scmp.lt.s32.totalorder %s26, 1
      %s412 = scalar_select %p411, %s26, 1
      %s413 = smul.addr %s412, 8
      %s414 = scalar_lea.vmem %s7, %s413
      %p415 = pneg %p261
      %p416 = pneg %p258
      %p417 = scmp.lt.s32.totalorder %s26, 1
      %s418 = scalar_select %p417, %s26, 1
      %s419 = smul.addr %s418, 8
      %s420 = scalar_lea.vmem %s8, %s419
      %p421 = pneg %p287
      %p422 = pneg %p284
      %p423 = scmp.lt.s32.totalorder %s26, 1
      %s424 = scalar_select %p423, %s26, 1
      %s425 = smul.addr %s424, 8
      %s426 = scalar_lea.vmem %s9, %s425
      %p427 = pneg %p313
      %p428 = pneg %p310
      %p429 = scmp.lt.s32.totalorder %s26, 1
      %s430 = scalar_select %p429, %s26, 1
      %s431 = smul.addr %s430, 8
      %s432 = scalar_lea.vmem %s10, %s431
      %s433 = sadd.s32 %s26, %s27
      %s434 = smul.u32 8, %s433
      %p435 = scmp.lt.s32.totalorder %s434, 15
      %s436 = scalar_select %p435, %s434, 15
      %s437 = smul.addr %s436, 4
      %s438 = scalar_lea.vmem %s0, %s437
      %s439 = sadd.s32 %s26, %s27
      %s440 = smul.u32 8, %s439
      %s441 = sadd.s32 %s26, %s27
      %s442 = smul.u32 8, %s441
      %p443 = scmp.lt.s32.totalorder %s442, 15
      %s444 = scalar_select %p443, %s442, 15
      %s445 = smul.addr %s444, 4
      %s446 = scalar_lea.vmem %s2, %s445
      %s447 = sadd.s32 %s26, %s27
      %s448 = smul.u32 8, %s447
      %s449 = sadd.s32 %s26, %s27
      %s450 = smul.u32 8, %s449
      %p451 = scmp.lt.s32.totalorder %s450, 15
      %s452 = scalar_select %p451, %s450, 15
      %s453 = smul.addr %s452, 4
      %s454 = scalar_lea.vmem %s4, %s453
      %s455 = sadd.s32 %s26, %s27
      %s456 = smul.u32 8, %s455
      %s457 = sadd.s32 %s26, %s27
      %s458 = smul.u32 8, %s457
      %p459 = scmp.lt.s32.totalorder %s458, 15
      %s460 = scalar_select %p459, %s458, 15
      %s461 = smul.addr %s460, 4
      %s462 = scalar_lea.vmem %s5, %s461
      %s463 = sadd.s32 %s26, %s27
      %s464 = smul.u32 8, %s463
      %p465 = scmp.lt.s32.totalorder %s26, 1
      %s466 = scalar_select %p465, %s26, 1
      %s467 = smul.addr %s466, 8
      %s468 = scalar_lea.vmem %s6, %s467
      %p469 = scmp.lt.s32.totalorder %s26, 1
      %s470 = scalar_select %p469, %s26, 1
      %s471 = smul.addr %s470, 8
      %s472 = scalar_lea.vmem %s7, %s471
      %p473 = scmp.lt.s32.totalorder %s26, 1
      %s474 = scalar_select %p473, %s26, 1
      %s475 = smul.addr %s474, 8
      %s476 = scalar_lea.vmem %s8, %s475
      %p477 = scmp.lt.s32.totalorder %s26, 1
      %s478 = scalar_select %p477, %s26, 1
      %s479 = smul.addr %s478, 8
      %s480 = scalar_lea.vmem %s9, %s479
      %p481 = scmp.lt.s32.totalorder %s26, 1
      %s482 = scalar_select %p481, %s26, 1
      %s483 = smul.addr %s482, 8
      %s484 = scalar_lea.vmem %s10, %s483
      %p486 = scmp.eq.s32.totalorder %s27, 0
      // Predicated region
      $region37: #{basic_block_forward.6} parent=35 // pred_check
        %p487 = pneg %p486
      $region38: #{basic_block_forward.6} parent=35 // pred_check_branch
        %489 = sbr.rel (%p487) target = $region40
      $region39: #{basic_block_forward.6} parent=35 // pred_region
        %490 = vst [vmem:[%s468] sm:$0xff] 0.0
        %491 = vst [vmem:[%s472] sm:$0xff] 0.0
        %492 = vst [vmem:[%s476] sm:$0xff] 0.0
        %493 = vst [vmem:[%s480] sm:$0xff] 0.0
        %494 = vst [vmem:[%s484] sm:$0xff] 0.0
      $region40: #{basic_block_forward.6} parent=35 // pred_fallthru
        _
      %v495 = vld [vmem:[%s438] sm:$0xf]
      %v496 = vld [vmem:[%s438 + $0x4] sm:$0xf]
      %v497 = vld [vmem:[%s438 + $0x8] sm:$0xf]
      %v498 = vld [vmem:[%s438 + $0xc] sm:$0xf]
      %v499 = vld [vmem:[%s438 + $0x10] sm:$0xf]
      %v500 = vld [vmem:[%s438 + $0x14] sm:$0xf]
      %v501 = vld [vmem:[%s438 + $0x18] sm:$0xf]
      %v502 = vld [vmem:[%s438 + $0x1c] sm:$0xf]
      %v503 = vld [vmem:[%s1] sm:$0xf]
      %v504 = vld [vmem:[%s1 + $0x4] sm:$0xf]
      %v505 = vld [vmem:[%s1 + $0x8] sm:$0xf]
      %v506 = vld [vmem:[%s1 + $0xc] sm:$0xf]
      %v507 = vld [vmem:[%s1 + $0x10] sm:$0xf]
      %v508 = vld [vmem:[%s1 + $0x14] sm:$0xf]
      %v509 = vld [vmem:[%s1 + $0x18] sm:$0xf]
      %v510 = vld [vmem:[%s1 + $0x1c] sm:$0xf]
      %v511 = vld [vmem:[%s1 + $0x20] sm:$0xf]
      %v512 = vld [vmem:[%s1 + $0x24] sm:$0xf]
      %v513 = vld [vmem:[%s1 + $0x28] sm:$0xf]
      %v514 = vld [vmem:[%s1 + $0x2c] sm:$0xf]
      %v515 = vld [vmem:[%s1 + $0x30] sm:$0xf]
      %v516 = vld [vmem:[%s1 + $0x34] sm:$0xf]
      %v517 = vld [vmem:[%s1 + $0x38] sm:$0xf]
      %v518 = vld [vmem:[%s1 + $0x3c] sm:$0xf]
      %v527 = vunpack.c.l.b16 %v495
      %v528 = vunpack.c.l.b16 %v496
      %v529 = vunpack.c.l.b16 %v497
      %v530 = vunpack.c.l.b16 %v498
      %v531 = vunpack.c.l.b16 %v499
      %v532 = vunpack.c.l.b16 %v500
      %v533 = vunpack.c.l.b16 %v501
      %v534 = vunpack.c.l.b16 %v502
      %v535 = vpack.c.b16 %v528, %v527
      %v536 = vpack.c.b16 %v530, %v529
      %v537 = vpack.c.b16 %v532, %v531
      %v538 = vpack.c.b16 %v534, %v533
      %v559 = vunpack.c.l.b16 %v503
      %v560 = vunpack.c.l.b16 %v504
      %v561 = vunpack.c.l.b16 %v505
      %v562 = vunpack.c.l.b16 %v506
      %v563 = vunpack.c.l.b16 %v507
      %v564 = vunpack.c.l.b16 %v508
      %v565 = vunpack.c.l.b16 %v509
      %v566 = vunpack.c.l.b16 %v510
      %v567 = vunpack.c.l.b16 %v511
      %v568 = vunpack.c.l.b16 %v512
      %v569 = vunpack.c.l.b16 %v513
      %v570 = vunpack.c.l.b16 %v514
      %v571 = vunpack.c.l.b16 %v515
      %v572 = vunpack.c.l.b16 %v516
      %v573 = vunpack.c.l.b16 %v517
      %v574 = vunpack.c.l.b16 %v518
      %v575 = vpack.c.b16 %v560, %v559
      %v576 = vpack.c.b16 %v562, %v561
      %v577 = vpack.c.b16 %v564, %v563
      %v578 = vpack.c.b16 %v566, %v565
      %v579 = vpack.c.b16 %v568, %v567
      %v580 = vpack.c.b16 %v570, %v569
      %v581 = vpack.c.b16 %v572, %v571
      %v582 = vpack.c.b16 %v574, %v573
      %591 = vmatprep.subr.bf16.mxu0 0
      %592 = vmatpush1.bf16.msra.mxu0 %v582
      %593 = vmatprep.subr.bf16.mxu0 0
      %594 = vmatpush1.bf16.msra.mxu0 %v581
      %595 = vmatprep.subr.bf16.mxu0 0
      %596 = vmatpush1.bf16.msra.mxu0 %v580
      %597 = vmatprep.subr.bf16.mxu0 0
      %598 = vmatpush1.bf16.msra.mxu0 %v579
      %599 = vmatprep.subr.bf16.mxu0 0
      %600 = vmatpush1.bf16.msra.mxu0 %v578
      %601 = vmatprep.subr.bf16.mxu0 0
      %602 = vmatpush1.bf16.msra.mxu0 %v577
      %603 = vmatprep.subr.bf16.mxu0 0
      %604 = vmatpush1.bf16.msra.mxu0 %v576
      %605 = vmatprep.subr.bf16.mxu0 0
      %606 = vmatpush1.bf16.msra.mxu0 %v575
      %607 = vmatprep.subr.bf16.mxu0 0
      %608 = vmatpush2.bf16.msra.mxu0 0
      %609 = vmatprep.subr.bf16.mxu0 0
      %610 = vmatpush2.bf16.msra.mxu0 0
      %611 = vmatprep.subr.bf16.mxu0 0
      %612 = vmatpush2.bf16.msra.mxu0 0
      %613 = vmatprep.subr.bf16.mxu0 0
      %614 = vmatpush2.bf16.msra.mxu0 0
      %615 = vmatprep.subr.bf16.mxu0 0
      %616 = vmatpush2.bf16.msra.mxu0 0
      %617 = vmatprep.subr.bf16.mxu0 0
      %618 = vmatpush2.bf16.msra.mxu0 0
      %619 = vmatprep.subr.bf16.mxu0 0
      %620 = vmatpush2.bf16.msra.mxu0 0
      %621 = vmatprep.subr.bf16.mxu0 0
      %622 = vmatpush2.bf16.msra.mxu0 0
      %623 = vmatprep.mubr.bf16.mxu0 0
      %624 = vmatmul.mubr.bf16.gmra.mxu0 %v535
      %v625 = vpop.f32.mrf.mxu0
      %v626 = vadd.f32 0.0, %v625
      %v627 = vpop.f32.mrf.mxu0
      %v628 = vpop.f32.mrf.mxu0
      %v629 = vadd.f32 0.0, %v628
      %v630 = vpop.f32.mrf.mxu0
      %631 = vmatprep.mubr.bf16.mxu0 0
      %632 = vmatmul.mubr.bf16.gmra.mxu0 %v536
      %v633 = vpop.f32.mrf.mxu0
      %v634 = vadd.f32 0.0, %v633
      %v635 = vpop.f32.mrf.mxu0
      %v636 = vpop.f32.mrf.mxu0
      %v637 = vadd.f32 0.0, %v636
      %v638 = vpop.f32.mrf.mxu0
      %639 = vmatprep.mubr.bf16.mxu0 0
      %640 = vmatmul.mubr.bf16.gmra.mxu0 %v537
      %v641 = vpop.f32.mrf.mxu0
      %v642 = vadd.f32 0.0, %v641
      %v643 = vpop.f32.mrf.mxu0
      %v644 = vpop.f32.mrf.mxu0
      %v645 = vadd.f32 0.0, %v644
      %v646 = vpop.f32.mrf.mxu0
      %647 = vmatprep.mubr.bf16.mxu0 0
      %648 = vmatmul.mubr.bf16.gmra.mxu0 %v538
      %v649 = vpop.f32.mrf.mxu0
      %v650 = vadd.f32 0.0, %v649
      %v651 = vpop.f32.mrf.mxu0
      %v652 = vpop.f32.mrf.mxu0
      %v653 = vadd.f32 0.0, %v652
      %v654 = vpop.f32.mrf.mxu0
      %655 = vdwg.mxu0
      %v656 = vld [vmem:[%s446] sm:$0xf]
      %v657 = vld [vmem:[%s446 + $0x4] sm:$0xf]
      %v658 = vld [vmem:[%s446 + $0x8] sm:$0xf]
      %v659 = vld [vmem:[%s446 + $0xc] sm:$0xf]
      %v660 = vld [vmem:[%s446 + $0x10] sm:$0xf]
      %v661 = vld [vmem:[%s446 + $0x14] sm:$0xf]
      %v662 = vld [vmem:[%s446 + $0x18] sm:$0xf]
      %v663 = vld [vmem:[%s446 + $0x1c] sm:$0xf]
      %v664 = vld [vmem:[%s3] sm:$0xf]
      %v665 = vld [vmem:[%s3 + $0x4] sm:$0xf]
      %v666 = vld [vmem:[%s3 + $0x8] sm:$0xf]
      %v667 = vld [vmem:[%s3 + $0xc] sm:$0xf]
      %v668 = vld [vmem:[%s3 + $0x10] sm:$0xf]
      %v669 = vld [vmem:[%s3 + $0x14] sm:$0xf]
      %v670 = vld [vmem:[%s3 + $0x18] sm:$0xf]
      %v671 = vld [vmem:[%s3 + $0x1c] sm:$0xf]
      %v672 = vld [vmem:[%s3 + $0x20] sm:$0xf]
      %v673 = vld [vmem:[%s3 + $0x24] sm:$0xf]
      %v674 = vld [vmem:[%s3 + $0x28] sm:$0xf]
      %v675 = vld [vmem:[%s3 + $0x2c] sm:$0xf]
      %v676 = vld [vmem:[%s3 + $0x30] sm:$0xf]
      %v677 = vld [vmem:[%s3 + $0x34] sm:$0xf]
      %v678 = vld [vmem:[%s3 + $0x38] sm:$0xf]
      %v679 = vld [vmem:[%s3 + $0x3c] sm:$0xf]
      %v688 = vunpack.c.l.b16 %v656
      %v689 = vunpack.c.l.b16 %v657
      %v690 = vunpack.c.l.b16 %v658
      %v691 = vunpack.c.l.b16 %v659
      %v692 = vunpack.c.l.b16 %v660
      %v693 = vunpack.c.l.b16 %v661
      %v694 = vunpack.c.l.b16 %v662
      %v695 = vunpack.c.l.b16 %v663
      %v696 = vpack.c.b16 %v689, %v688
      %v697 = vpack.c.b16 %v691, %v690
      %v698 = vpack.c.b16 %v693, %v692
      %v699 = vpack.c.b16 %v695, %v694
      %v720 = vunpack.c.l.b16 %v664
      %v721 = vunpack.c.l.b16 %v665
      %v722 = vunpack.c.l.b16 %v666
      %v723 = vunpack.c.l.b16 %v667
      %v724 = vunpack.c.l.b16 %v668
      %v725 = vunpack.c.l.b16 %v669
      %v726 = vunpack.c.l.b16 %v670
      %v727 = vunpack.c.l.b16 %v671
      %v728 = vunpack.c.l.b16 %v672
      %v729 = vunpack.c.l.b16 %v673
      %v730 = vunpack.c.l.b16 %v674
      %v731 = vunpack.c.l.b16 %v675
      %v732 = vunpack.c.l.b16 %v676
      %v733 = vunpack.c.l.b16 %v677
      %v734 = vunpack.c.l.b16 %v678
      %v735 = vunpack.c.l.b16 %v679
      %v736 = vpack.c.b16 %v721, %v720
      %v737 = vpack.c.b16 %v723, %v722
      %v738 = vpack.c.b16 %v725, %v724
      %v739 = vpack.c.b16 %v727, %v726
      %v740 = vpack.c.b16 %v729, %v728
      %v741 = vpack.c.b16 %v731, %v730
      %v742 = vpack.c.b16 %v733, %v732
      %v743 = vpack.c.b16 %v735, %v734
      %752 = vmatprep.subr.bf16.mxu0 0
      %753 = vmatpush1.bf16.msra.mxu0 %v743
      %754 = vmatprep.subr.bf16.mxu0 0
      %755 = vmatpush1.bf16.msra.mxu0 %v742
      %756 = vmatprep.subr.bf16.mxu0 0
      %757 = vmatpush1.bf16.msra.mxu0 %v741
      %758 = vmatprep.subr.bf16.mxu0 0
      %759 = vmatpush1.bf16.msra.mxu0 %v740
      %760 = vmatprep.subr.bf16.mxu0 0
      %761 = vmatpush1.bf16.msra.mxu0 %v739
      %762 = vmatprep.subr.bf16.mxu0 0
      %763 = vmatpush1.bf16.msra.mxu0 %v738
      %764 = vmatprep.subr.bf16.mxu0 0
      %765 = vmatpush1.bf16.msra.mxu0 %v737
      %766 = vmatprep.subr.bf16.mxu0 0
      %767 = vmatpush1.bf16.msra.mxu0 %v736
      %768 = vmatprep.subr.bf16.mxu0 0
      %769 = vmatpush2.bf16.msra.mxu0 0
      %770 = vmatprep.subr.bf16.mxu0 0
      %771 = vmatpush2.bf16.msra.mxu0 0
      %772 = vmatprep.subr.bf16.mxu0 0
      %773 = vmatpush2.bf16.msra.mxu0 0
      %774 = vmatprep.subr.bf16.mxu0 0
      %775 = vmatpush2.bf16.msra.mxu0 0
      %776 = vmatprep.subr.bf16.mxu0 0
      %777 = vmatpush2.bf16.msra.mxu0 0
      %778 = vmatprep.subr.bf16.mxu0 0
      %779 = vmatpush2.bf16.msra.mxu0 0
      %780 = vmatprep.subr.bf16.mxu0 0
      %781 = vmatpush2.bf16.msra.mxu0 0
      %782 = vmatprep.subr.bf16.mxu0 0
      %783 = vmatpush2.bf16.msra.mxu0 0
      %784 = vmatprep.mubr.bf16.mxu0 0
      %785 = vmatmul.mubr.bf16.gmra.mxu0 %v696
      %v786 = vpop.f32.mrf.mxu0
      %v787 = vadd.f32 0.0, %v786
      %v788 = vpop.f32.mrf.mxu0
      %v789 = vpop.f32.mrf.mxu0
      %v790 = vadd.f32 0.0, %v789
      %v791 = vpop.f32.mrf.mxu0
      %792 = vmatprep.mubr.bf16.mxu0 0
      %793 = vmatmul.mubr.bf16.gmra.mxu0 %v697
      %v794 = vpop.f32.mrf.mxu0
      %v795 = vadd.f32 0.0, %v794
      %v796 = vpop.f32.mrf.mxu0
      %v797 = vpop.f32.mrf.mxu0
      %v798 = vadd.f32 0.0, %v797
      %v799 = vpop.f32.mrf.mxu0
      %800 = vmatprep.mubr.bf16.mxu0 0
      %801 = vmatmul.mubr.bf16.gmra.mxu0 %v698
      %v802 = vpop.f32.mrf.mxu0
      %v803 = vadd.f32 0.0, %v802
      %v804 = vpop.f32.mrf.mxu0
      %v805 = vpop.f32.mrf.mxu0
      %v806 = vadd.f32 0.0, %v805
      %v807 = vpop.f32.mrf.mxu0
      %808 = vmatprep.mubr.bf16.mxu0 0
      %809 = vmatmul.mubr.bf16.gmra.mxu0 %v699
      %v810 = vpop.f32.mrf.mxu0
      %v811 = vadd.f32 0.0, %v810
      %v812 = vpop.f32.mrf.mxu0
      %v813 = vpop.f32.mrf.mxu0
      %v814 = vadd.f32 0.0, %v813
      %v815 = vpop.f32.mrf.mxu0
      %816 = vdwg.mxu0
      %v817 = vpack.c.bf16 %v629, %v626
      %v818 = vpack.c.bf16 %v637, %v634
      %v819 = vpack.c.bf16 %v645, %v642
      %v820 = vpack.c.bf16 %v653, %v650
      %v825 = vunpack.c.l.b16 %v817
      %v826 = vunpack.c.h.b16 %v817
      %v827 = vunpack.c.l.b16 %v818
      %v828 = vunpack.c.h.b16 %v818
      %v829 = vunpack.c.l.b16 %v819
      %v830 = vunpack.c.h.b16 %v819
      %v831 = vunpack.c.l.b16 %v820
      %v832 = vunpack.c.h.b16 %v820
      %v833 = vpack.c.b16 %v825, %v825
      %v834 = vpack.c.b16 %v826, %v826
      %v835 = vpack.c.b16 %v827, %v827
      %v836 = vpack.c.b16 %v828, %v828
      %v837 = vpack.c.b16 %v829, %v829
      %v838 = vpack.c.b16 %v830, %v830
      %v839 = vpack.c.b16 %v831, %v831
      %v840 = vpack.c.b16 %v832, %v832
      %849 = vst [vmem:[%s454] sm:$0xf] %v833
      %850 = vst [vmem:[%s454 + $0x4] sm:$0xf] %v834
      %851 = vst [vmem:[%s454 + $0x8] sm:$0xf] %v835
      %852 = vst [vmem:[%s454 + $0xc] sm:$0xf] %v836
      %853 = vst [vmem:[%s454 + $0x10] sm:$0xf] %v837
      %854 = vst [vmem:[%s454 + $0x14] sm:$0xf] %v838
      %855 = vst [vmem:[%s454 + $0x18] sm:$0xf] %v839
      %856 = vst [vmem:[%s454 + $0x1c] sm:$0xf] %v840
      %v857 = vpack.c.bf16 %v790, %v787
      %v858 = vpack.c.bf16 %v798, %v795
      %v859 = vpack.c.bf16 %v806, %v803
      %v860 = vpack.c.bf16 %v814, %v811
      %v865 = vunpack.c.l.b16 %v857
      %v866 = vunpack.c.h.b16 %v857
      %v867 = vunpack.c.l.b16 %v858
      %v868 = vunpack.c.h.b16 %v858
      %v869 = vunpack.c.l.b16 %v859
      %v870 = vunpack.c.h.b16 %v859
      %v871 = vunpack.c.l.b16 %v860
      %v872 = vunpack.c.h.b16 %v860
      %v873 = vpack.c.b16 %v865, %v865
      %v874 = vpack.c.b16 %v866, %v866
      %v875 = vpack.c.b16 %v867, %v867
      %v876 = vpack.c.b16 %v868, %v868
      %v877 = vpack.c.b16 %v869, %v869
      %v878 = vpack.c.b16 %v870, %v870
      %v879 = vpack.c.b16 %v871, %v871
      %v880 = vpack.c.b16 %v872, %v872
      %889 = vst [vmem:[%s462] sm:$0xf] %v873
      %890 = vst [vmem:[%s462 + $0x4] sm:$0xf] %v874
      %891 = vst [vmem:[%s462 + $0x8] sm:$0xf] %v875
      %892 = vst [vmem:[%s462 + $0xc] sm:$0xf] %v876
      %893 = vst [vmem:[%s462 + $0x10] sm:$0xf] %v877
      %894 = vst [vmem:[%s462 + $0x14] sm:$0xf] %v878
      %895 = vst [vmem:[%s462 + $0x18] sm:$0xf] %v879
      %896 = vst [vmem:[%s462 + $0x1c] sm:$0xf] %v880
      %v897 = vld [vmem:[%s468] sm:$0xff]
      %v898 = vadd.f32 %v897, 64.0
      %v899 = vmax.f32 %v898, 1.0
      %v900 = vrcp.pop %v899
      %v901 = vmul.f32 1.0, %v900
      %v902 = vadd.f32 %v626, %v629
      %v903 = vadd.f32 %v902, %v634
      %v904 = vadd.f32 %v903, %v637
      %v905 = vadd.f32 %v904, %v642
      %v906 = vadd.f32 %v905, %v645
      %v907 = vadd.f32 %v906, %v650
      %v908 = vadd.f32 %v907, %v653
      %v909 = vrot.slane %v908, 4
      %v910 = vadd.f32 %v908, %v909
      %v911 = vrot.slane %v910, 2
      %v912 = vadd.f32 %v910, %v911
      %v913 = vrot.slane %v912, 1
      %v914 = vadd.f32 %v912, %v913
      %v915 = vrcp.pop 64.0
      %v916 = vmul.f32 %v914, %v915
      %v917 = vsub.f32 %v626, %v916
      %v918 = vsub.f32 %v629, %v916
      %v919 = vsub.f32 %v634, %v916
      %v920 = vsub.f32 %v637, %v916
      %v921 = vsub.f32 %v642, %v916
      %v922 = vsub.f32 %v645, %v916
      %v923 = vsub.f32 %v650, %v916
      %v924 = vsub.f32 %v653, %v916
      %v925 = vmul.f32 %v917, %v917
      %v926 = vmul.f32 %v918, %v918
      %v927 = vmul.f32 %v919, %v919
      %v928 = vmul.f32 %v920, %v920
      %v929 = vmul.f32 %v921, %v921
      %v930 = vmul.f32 %v922, %v922
      %v931 = vmul.f32 %v923, %v923
      %v932 = vmul.f32 %v924, %v924
      %v933 = vadd.f32 %v925, %v926
      %v934 = vadd.f32 %v933, %v927
      %v935 = vadd.f32 %v934, %v928
      %v936 = vadd.f32 %v935, %v929
      %v937 = vadd.f32 %v936, %v930
      %v938 = vadd.f32 %v937, %v931
      %v939 = vadd.f32 %v938, %v932
      %v940 = vrot.slane %v939, 4
      %v941 = vadd.f32 %v939, %v940
      %v942 = vrot.slane %v941, 2
      %v943 = vadd.f32 %v941, %v942
      %v944 = vrot.slane %v943, 1
      %v945 = vadd.f32 %v943, %v944
      %v946 = vld [vmem:[%s472] sm:$0xff]
      %v947 = vsub.f32 %v916, %v946
      %v948 = vmul.f32 %v901, 64.0
      %v949 = vmul.f32 %v947, %v948
      %v950 = vadd.f32 %v946, %v949
      %951 = vst [vmem:[%s472] sm:$0xff] %v950
      %v952 = vld [vmem:[%s476] sm:$0xff]
      %v953 = vadd.f32 %v952, %v945
      %v954 = vmul.f32 %v947, %v947
      %v955 = vmul.f32 %v897, 64.0
      %v956 = vmul.f32 %v955, %v901
      %v957 = vmul.f32 %v954, %v956
      %v958 = vadd.f32 %v953, %v957
      %959 = vst [vmem:[%s476] sm:$0xff] %v958
      %v960 = vadd.f32 %v787, %v790
      %v961 = vadd.f32 %v960, %v795
      %v962 = vadd.f32 %v961, %v798
      %v963 = vadd.f32 %v962, %v803
      %v964 = vadd.f32 %v963, %v806
      %v965 = vadd.f32 %v964, %v811
      %v966 = vadd.f32 %v965, %v814
      %v967 = vrot.slane %v966, 4
      %v968 = vadd.f32 %v966, %v967
      %v969 = vrot.slane %v968, 2
      %v970 = vadd.f32 %v968, %v969
      %v971 = vrot.slane %v970, 1
      %v972 = vadd.f32 %v970, %v971
      %v973 = vmul.f32 %v972, %v915
      %v974 = vsub.f32 %v787, %v973
      %v975 = vsub.f32 %v790, %v973
      %v976 = vsub.f32 %v795, %v973
      %v977 = vsub.f32 %v798, %v973
      %v978 = vsub.f32 %v803, %v973
      %v979 = vsub.f32 %v806, %v973
      %v980 = vsub.f32 %v811, %v973
      %v981 = vsub.f32 %v814, %v973
      %v982 = vmul.f32 %v974, %v974
      %v983 = vmul.f32 %v975, %v975
      %v984 = vmul.f32 %v976, %v976
      %v985 = vmul.f32 %v977, %v977
      %v986 = vmul.f32 %v978, %v978
      %v987 = vmul.f32 %v979, %v979
      %v988 = vmul.f32 %v980, %v980
      %v989 = vmul.f32 %v981, %v981
      %v990 = vadd.f32 %v982, %v983
      %v991 = vadd.f32 %v990, %v984
      %v992 = vadd.f32 %v991, %v985
      %v993 = vadd.f32 %v992, %v986
      %v994 = vadd.f32 %v993, %v987
      %v995 = vadd.f32 %v994, %v988
      %v996 = vadd.f32 %v995, %v989
      %v997 = vrot.slane %v996, 4
      %v998 = vadd.f32 %v996, %v997
      %v999 = vrot.slane %v998, 2
      %v1000 = vadd.f32 %v998, %v999
      %v1001 = vrot.slane %v1000, 1
      %v1002 = vadd.f32 %v1000, %v1001
      %v1003 = vld [vmem:[%s480] sm:$0xff]
      %v1004 = vsub.f32 %v973, %v1003
      %v1005 = vmul.f32 %v1004, %v948
      %v1006 = vadd.f32 %v1003, %v1005
      %1007 = vst [vmem:[%s480] sm:$0xff] %v1006
      %v1008 = vld [vmem:[%s484] sm:$0xff]
      %v1009 = vadd.f32 %v1008, %v1002
      %v1010 = vmul.f32 %v1004, %v1004
      %v1011 = vmul.f32 %v1010, %v956
      %v1012 = vadd.f32 %v1009, %v1011
      %1013 = vst [vmem:[%s484] sm:$0xff] %v1012
      %1014 = vst [vmem:[%s468] sm:$0xff] %v898
      %s1015 = sadd.s32 %s26, %s27
      %s1016 = smul.u32 8, %s1015
      %p1017 = scmp.lt.s32.totalorder %s1016, 15
      %s1018 = scalar_select %p1017, %s1016, 15
      %s1019 = smul.addr %s1018, 4
      %s1020 = scalar_lea.vmem %s4, %s1019
      %s1021 = sadd.s32 %s26, %s27
      %s1022 = smul.u32 8, %s1021
      %p1023 = scmp.lt.s32.totalorder %s1022, 15
      %s1024 = scalar_select %p1023, %s1022, 15
      %s1025 = smul.addr %s1024, 4
      %s1026 = scalar_lea.vmem %s5, %s1025
      %p1027 = scmp.lt.s32.totalorder %s26, 1
      %s1028 = scalar_select %p1027, %s26, 1
      %s1029 = smul.addr %s1028, 8
      %s1030 = scalar_lea.vmem %s6, %s1029
      %p1031 = scmp.lt.s32.totalorder %s26, 1
      %s1032 = scalar_select %p1031, %s26, 1
      %s1033 = smul.addr %s1032, 8
      %s1034 = scalar_lea.vmem %s7, %s1033
      %p1035 = scmp.lt.s32.totalorder %s26, 1
      %s1036 = scalar_select %p1035, %s26, 1
      %s1037 = smul.addr %s1036, 8
      %s1038 = scalar_lea.vmem %s8, %s1037
      %p1039 = scmp.lt.s32.totalorder %s26, 1
      %s1040 = scalar_select %p1039, %s26, 1
      %s1041 = smul.addr %s1040, 8
      %s1042 = scalar_lea.vmem %s9, %s1041
      %p1043 = scmp.lt.s32.totalorder %s26, 1
      %s1044 = scalar_select %p1043, %s26, 1
      %s1045 = smul.addr %s1044, 8
      %s1046 = scalar_lea.vmem %s10, %s1045
      // Predicated region
      $region41: #{basic_block_forward.6} parent=35 // pred_check
        %p1047 = pneg %p152
      $region42: #{basic_block_forward.6} parent=35 // pred_check_branch
        %1049 = sbr.rel (%p1047) target = $region44
      $region43: #{basic_block_forward.6} parent=35 // pred_region
        %s1050 = sadd.s32 %s26, %s27
        %s1051 = smul.u32 8, %s1050
      $region44: #{basic_block_forward.6} parent=35 // pred_fallthru
        _
      // Predicated region
      $region45: #{basic_block_forward.6} parent=35 // pred_check
        %p1052 = pneg %p180
      $region46: #{basic_block_forward.6} parent=35 // pred_check_branch
        %1054 = sbr.rel (%p1052) target = $region48
      $region47: #{basic_block_forward.6} parent=35 // pred_region
        %s1055 = sadd.s32 %s26, %s27
        %s1056 = smul.u32 8, %s1055
      $region48: #{basic_block_forward.6} parent=35 // pred_fallthru
        _
      // Predicated region
      $region49: #{basic_block_forward.6} parent=35 // pred_check
        %p1057 = pneg %p206
      $region50: #{basic_block_forward.6} parent=35 // pred_check_branch
        %1059 = sbr.rel (%p1057) target = $region52
      $region51: #{basic_block_forward.6} parent=35 // pred_region
        _
      $region52: #{basic_block_forward.6} parent=35 // pred_fallthru
        _
      // Predicated region
      $region53: #{basic_block_forward.6} parent=35 // pred_check
        %p1060 = pneg %p232
      $region54: #{basic_block_forward.6} parent=35 // pred_check_branch
        %1062 = sbr.rel (%p1060) target = $region56
      $region55: #{basic_block_forward.6} parent=35 // pred_region
        _
      $region56: #{basic_block_forward.6} parent=35 // pred_fallthru
        _
      // Predicated region
      $region57: #{basic_block_forward.6} parent=35 // pred_check
        %p1063 = pneg %p258
      $region58: #{basic_block_forward.6} parent=35 // pred_check_branch
        %1065 = sbr.rel (%p1063) target = $region60
      $region59: #{basic_block_forward.6} parent=35 // pred_region
        _
      $region60: #{basic_block_forward.6} parent=35 // pred_fallthru
        _
      // Predicated region
      $region61: #{basic_block_forward.6} parent=35 // pred_check
        %p1066 = pneg %p284
      $region62: #{basic_block_forward.6} parent=35 // pred_check_branch
        %1068 = sbr.rel (%p1066) target = $region64
      $region63: #{basic_block_forward.6} parent=35 // pred_region
        _
      $region64: #{basic_block_forward.6} parent=35 // pred_fallthru
        _
      // Predicated region
      $region65: #{basic_block_forward.6} parent=35 // pred_check
        %p1069 = pneg %p310
      $region66: #{basic_block_forward.6} parent=35 // pred_check_branch
        %1071 = sbr.rel (%p1069) target = $region68
      $region67: #{basic_block_forward.6} parent=35 // pred_region
        _
      $region68: #{basic_block_forward.6} parent=35 // pred_fallthru
        _
    $region36: #{basic_block_forward.6} parent=5 // pred_fallthru
      _
    %p1072 = scmp.le.s32.totalorder 2, %s17
    // Predicated region
    $region69: #{basic_block_forward.6} parent=5 // pred_check
      %p1073 = pneg %p1072
    $region70: #{basic_block_forward.6} parent=5 // pred_check_branch
      %1075 = sbr.rel (%p1073) target = $region72
    $region71: #{basic_block_forward.6} parent=5 // pred_region
      %s1076 = ssub.s32 %s17, 2
      // Predicated region
      $region73: #{basic_block_forward.6} parent=71 // pred_check
        %p1077 = pneg %p158
      $region74: #{basic_block_forward.6} parent=71 // pred_check_branch
        %1079 = sbr.rel (%p1077) target = $region76
      $region75: #{basic_block_forward.6} parent=71 // pred_region
        %s1080 = sadd.s32 %s28, %s29
        %s1081 = smul.u32 8, %s1080
        %p1082 = scmp.lt.s32.totalorder %s1081, 15
        %s1083 = scalar_select %p1082, %s1081, 15
        %s1084 = smul.addr %s1083, 4
        %s1085 = scalar_lea.vmem %s4, %s1084
      $region76: #{basic_block_forward.6} parent=71 // pred_fallthru
        _
      // Predicated region
      $region77: #{basic_block_forward.6} parent=71 // pred_check
        %p1086 = pneg %p186
      $region78: #{basic_block_forward.6} parent=71 // pred_check_branch
        %1088 = sbr.rel (%p1086) target = $region80
      $region79: #{basic_block_forward.6} parent=71 // pred_region
        %s1089 = sadd.s32 %s28, %s29
        %s1090 = smul.u32 8, %s1089
        %p1091 = scmp.lt.s32.totalorder %s1090, 15
        %s1092 = scalar_select %p1091, %s1090, 15
        %s1093 = smul.addr %s1092, 4
        %s1094 = scalar_lea.vmem %s5, %s1093
      $region80: #{basic_block_forward.6} parent=71 // pred_fallthru
        _
      // Predicated region
      $region81: #{basic_block_forward.6} parent=71 // pred_check
        %p1095 = pneg %p212
      $region82: #{basic_block_forward.6} parent=71 // pred_check_branch
        %1097 = sbr.rel (%p1095) target = $region84
      $region83: #{basic_block_forward.6} parent=71 // pred_region
        %p1098 = scmp.lt.s32.totalorder %s28, 1
        %s1099 = scalar_select %p1098, %s28, 1
        %s1100 = smul.addr %s1099, 8
        %s1101 = scalar_lea.vmem %s6, %s1100
      $region84: #{basic_block_forward.6} parent=71 // pred_fallthru
        _
      // Predicated region
      $region85: #{basic_block_forward.6} parent=71 // pred_check
        %p1102 = pneg %p238
      $region86: #{basic_block_forward.6} parent=71 // pred_check_branch
        %1104 = sbr.rel (%p1102) target = $region88
      $region87: #{basic_block_forward.6} parent=71 // pred_region
        %p1105 = scmp.lt.s32.totalorder %s28, 1
        %s1106 = scalar_select %p1105, %s28, 1
        %s1107 = smul.addr %s1106, 8
        %s1108 = scalar_lea.vmem %s7, %s1107
      $region88: #{basic_block_forward.6} parent=71 // pred_fallthru
        _
      // Predicated region
      $region89: #{basic_block_forward.6} parent=71 // pred_check
        %p1109 = pneg %p264
      $region90: #{basic_block_forward.6} parent=71 // pred_check_branch
        %1111 = sbr.rel (%p1109) target = $region92
      $region91: #{basic_block_forward.6} parent=71 // pred_region
        %p1112 = scmp.lt.s32.totalorder %s28, 1
        %s1113 = scalar_select %p1112, %s28, 1
        %s1114 = smul.addr %s1113, 8
        %s1115 = scalar_lea.vmem %s8, %s1114
      $region92: #{basic_block_forward.6} parent=71 // pred_fallthru
        _
      // Predicated region
      $region93: #{basic_block_forward.6} parent=71 // pred_check
        %p1116 = pneg %p290
      $region94: #{basic_block_forward.6} parent=71 // pred_check_branch
        %1118 = sbr.rel (%p1116) target = $region96
      $region95: #{basic_block_forward.6} parent=71 // pred_region
        %p1119 = scmp.lt.s32.totalorder %s28, 1
        %s1120 = scalar_select %p1119, %s28, 1
        %s1121 = smul.addr %s1120, 8
        %s1122 = scalar_lea.vmem %s9, %s1121
      $region96: #{basic_block_forward.6} parent=71 // pred_fallthru
        _
      // Predicated region
      $region97: #{basic_block_forward.6} parent=71 // pred_check
        %p1123 = pneg %p316
      $region98: #{basic_block_forward.6} parent=71 // pred_check_branch
        %1125 = sbr.rel (%p1123) target = $region100
      $region99: #{basic_block_forward.6} parent=71 // pred_region
        %p1126 = scmp.lt.s32.totalorder %s28, 1
        %s1127 = scalar_select %p1126, %s28, 1
        %s1128 = smul.addr %s1127, 8
        %s1129 = scalar_lea.vmem %s10, %s1128
      $region100: #{basic_block_forward.6} parent=71 // pred_fallthru
        _
    $region72: #{basic_block_forward.6} parent=5 // pred_fallthru
      _
  $region6: #{basic_block_forward.6} parent=0 // loop_footer
    %s21 = sadd.s32 1, %s17
  $region7: #{basic_block_forward.6} parent=0 // loop_footer_branch
    %16 = sbr.rel target = $region3
  $region8: #{basic_block_forward.6} parent=0 // loop_exit
    _

</llo_original>
